<compile_context>
chip_gen: v7x
topology: tpu7x:2x2x1
jax: 0.10.0
libtpu: 0.0.40
codegen_flags: <defaults>
</compile_context>

<pallas_src>
import math

import jax
import jax.numpy as jnp
from jax.experimental import pallas as pl
from jax.experimental.pallas import tpu as pltpu


def get_num_heads(in_channels: int) -> int:
    num_heads = min(in_channels, 8)
    while in_channels % num_heads != 0 and num_heads > 1:
        num_heads -= 1
    if in_channels % num_heads != 0:
        num_heads = 1
    return num_heads


def _pick_tile(total: int, candidates=(512, 256, 128)) -> int:
    """Largest lane-friendly tile dividing `total`; fall back to the full extent."""
    for c in candidates:
        if total >= c and total % c == 0:
            return c
    return total  # full-dim block is always legal


# ----------------------------------------------------------------------------
# Pallas kernels
# ----------------------------------------------------------------------------

def _qkv_proj_kernel(x_ref, w_ref, b_ref, o_ref):
    # x_ref: (C, TM) f32 | w_ref: (3C, C) bf16 | b_ref: (3C, 1) f32 | o_ref: (3C, TM) f32
    x = x_ref[...].astype(jnp.bfloat16)
    y = jnp.dot(w_ref[...], x, preferred_element_type=jnp.float32)
    o_ref[...] = y + b_ref[...]


def _attn_kernel(q_ref, k_ref, v_ref, o_ref):
    # Blocks: (Dh, L, BL) f32.  Each lane is one independent (head, spatial
    # position) attention problem; L = B*T sits on sublanes, Dh on the leading
    # axis.  All math is VPU/XLU/EUP work over BL dense lanes.
    dh = q_ref.shape[0]
    q = q_ref[...]
    k = k_ref[...]
    v = v_ref[...]
    # scores s[i, j, lane] = sum_d q[d, i, lane] * k[d, j, lane]
    s = q[0][:, None, :] * k[0][None, :, :]
    for d in range(1, dh):
        s = s + q[d][:, None, :] * k[d][None, :, :]           # (L, L, BL)
    m = jnp.max(s, axis=1, keepdims=True)                     # (L, 1, BL)
    p = jnp.exp(s - m)                                        # (L, L, BL)
    inv = pl.reciprocal(jnp.sum(p, axis=1), approx=True)      # (L, BL)  (EUP)
    for d in range(dh):
        od = jnp.sum(p * v[d][None, :, :], axis=1)            # (L, BL)
        o_ref[d] = od * inv


def _out_proj_residual_kernel(o_ref, w_ref, b_ref, x_ref, y_ref):
    # o_ref: (C, TM) f32 | w_ref: (C, C) bf16 | b_ref: (C, 1) f32 | x_ref: (C, TM) f32
    o = o_ref[...].astype(jnp.bfloat16)
    y = jnp.dot(w_ref[...], o, preferred_element_type=jnp.float32)
    y_ref[...] = y + b_ref[...] + x_ref[...]                  # fused residual add


# ----------------------------------------------------------------------------
# SpatialSelfAttention forward
# ----------------------------------------------------------------------------

def spatial_self_attention(x, params):
    """x: (B, C, T, H, W) -> (B, C, T, H, W).

    Matches nn.MultiheadAttention with batch_first=False (default): attention is
    over the B*T axis per (h, w) position — intentional, per the PyTorch module.
    """
    B, C, T, H, W = x.shape
    heads = get_num_heads(C)
    dh = C // heads
    L = B * T                    # attention sequence length
    NB = H * W                   # MHA batch
    M = L * NB
    lanes = heads * NB

    # Fold the 1/sqrt(dh) query scale into the q-projection weights/bias (free).
    scale = 1.0 / math.sqrt(dh)
    w_in = params["in_w"].astype(jnp.float32).at[:C].multiply(scale)
    b_in = params["in_b"].astype(jnp.float32).at[:C].multiply(scale)
    w_out = params["out_w"].astype(jnp.float32)
    b_out = params["out_b"].astype(jnp.float32)

    # Channels-first slab: xT[c, l*NB + n] with l = b*T + t, n = h*W + w.
    xT = x.astype(jnp.float32).transpose(1, 0, 2, 3, 4).reshape(C, M)

    tm = _pick_tile(M)
    par1 = pltpu.CompilerParams(dimension_semantics=("parallel",))

    # --- QKV projection (transposed => lane-dense (3C, TM) output blocks) ---
    qkvT = pl.pallas_call(
        _qkv_proj_kernel,
        out_shape=jax.ShapeDtypeStruct((3 * C, M), jnp.float32),
        grid=(pl.cdiv(M, tm),),
        in_specs=[
            pl.BlockSpec((C, tm), lambda j: (0, j)),
            pl.BlockSpec((3 * C, C), lambda j: (0, 0)),
            pl.BlockSpec((3 * C, 1), lambda j: (0, 0)),
        ],
        out_specs=pl.BlockSpec((3 * C, tm), lambda j: (0, j)),
        compiler_params=par1,
    )(xT, w_in.astype(jnp.bfloat16), b_in.reshape(3 * C, 1))

    # --- rearrange to the attention layout (Dh, L, heads*NB); lane = h*NB + n ---
    qkv = qkvT.reshape(3, heads, dh, L, NB).transpose(0, 2, 3, 1, 4)
    qkv = qkv.reshape(3, dh, L, lanes)

    bl = _pick_tile(lanes)
    attn_spec = pl.BlockSpec((dh, L, bl), lambda i: (0, 0, i))
    o = pl.pallas_call(
        _attn_kernel,
        out_shape=jax.ShapeDtypeStruct((dh, L, lanes), jnp.float32),
        grid=(pl.cdiv(lanes, bl),),
        in_specs=[attn_spec, attn_spec, attn_spec],
        out_specs=attn_spec,
        compiler_params=pltpu.CompilerParams(dimension_semantics=("parallel",)),
    )(qkv[0], qkv[1], qkv[2])

    # --- merge heads back to channels-first rows: oT[h*dh + d, l*NB + n] ---
    oT = o.reshape(dh, L, heads, NB).transpose(2, 0, 1, 3).reshape(C, M)

    # --- output projection with fused residual add ---
    yT = pl.pallas_call(
        _out_proj_residual_kernel,
        out_shape=jax.ShapeDtypeStruct((C, M), jnp.float32),
        grid=(pl.cdiv(M, tm),),
        in_specs=[
            pl.BlockSpec((C, tm), lambda j: (0, j)),
            pl.BlockSpec((C, C), lambda j: (0, 0)),
            pl.BlockSpec((C, 1), lambda j: (0, 0)),
            pl.BlockSpec((C, tm), lambda j: (0, j)),
        ],
        out_specs=pl.BlockSpec((C, tm), lambda j: (0, j)),
        compiler_params=par1,
    )(oT, w_out.astype(jnp.bfloat16), b_out.reshape(C, 1), xT)

    return yT.reshape(C, B, T, H, W).transpose(1, 0, 2, 3, 4)


# ----------------------------------------------------------------------------
# Plain-JAX reference (same precision policy: bf16 matmul inputs, f32 accumulate)
# ----------------------------------------------------------------------------

def _bf16_dot(a, b):
    return jnp.dot(a.astype(jnp.bfloat16), b.astype(jnp.bfloat16),
                   preferred_element_type=jnp.float32)


def reference_forward(x, params):
    B, C, T, H, W = x.shape
    heads = get_num_heads(C)
    dh = C // heads
    L, N = B * T, H * W
    scale = 1.0 / math.sqrt(dh)

    w_in = params["in_w"].astype(jnp.float32).at[:C].multiply(scale)
    b_in = params["in_b"].astype(jnp.float32).at[:C].multiply(scale)

    xr = x.astype(jnp.float32).transpose(0, 2, 3, 4, 1).reshape(L * N, C)
    qkv = _bf16_dot(xr, w_in.T) + b_in
    q, k, v = jnp.split(qkv.reshape(L, N, 3 * C), 3, axis=-1)

    def split_heads(t):
        return t.reshape(L, N, heads, dh).transpose(1, 2, 0, 3)  # (N, heads, L, dh)

    q, k, v = split_heads(q), split_heads(k), split_heads(v)
    s = jnp.einsum("nhid,nhjd->nhij", q, k)
    p = jax.nn.softmax(s, axis=-1)
    o = jnp.einsum("nhij,nhjd->nhid", p, v)
    o = o.transpose(2, 0, 1, 3).reshape(L * N, C)
    attn = _bf16_dot(o, params["out_w"].astype(jnp.float32).T) + params["out_b"]
    attn = attn.reshape(B, T, H, W, C).transpose(0, 4, 1, 2, 3)
    return x + attn


# ----------------------------------------------------------------------------
# Main
# ----------------------------------------------------------------------------

if __name__ == "__main__":
    key = jax.random.PRNGKey(0)
    kx, k0, k1, k2, k3 = jax.random.split(key, 5)

    B, C, T, H, W = 2, 16, 4, 16, 16
    x = jax.random.normal(kx, (B, C, T, H, W), jnp.float32)
    params = {
        "in_w": jax.random.normal(k0, (3 * C, C), jnp.float32) / math.sqrt(C),
        "in_b": 0.02 * jax.random.normal(k1, (3 * C,), jnp.float32),
        "out_w": jax.random.normal(k2, (C, C), jnp.float32) / math.sqrt(C),
        "out_b": 0.02 * jax.random.normal(k3, (C,), jnp.float32),
    }

    fwd = jax.jit(spatial_self_attention)
    out = jax.block_until_ready(fwd(x, params))

    assert out.shape == x.shape, out.shape
    assert bool(jnp.all(jnp.isfinite(out)))

    ref = jax.jit(reference_forward)(x, params)
    max_err = float(jnp.max(jnp.abs(out - ref)))
    assert max_err < 5e-2, f"max abs error vs reference: {max_err}"

    print("KERNEL_OK")
</pallas_src>

<mosaic_0001>
module attributes {stable_mosaic.version = 11 : i64} {
  func.func @_qkv_proj_kernel(%arg0: i32, %arg1: memref<16x512xf32, #tpu.memory_space<vmem>>, %arg2: memref<48x16xbf16, #tpu.memory_space<vmem>>, %arg3: memref<48x1xf32, #tpu.memory_space<vmem>>, %arg4: memref<48x512xf32, #tpu.memory_space<vmem>>) attributes {dimension_semantics = [#tpu.dimension_semantics<parallel>], iteration_bounds = array<i64: 4>, scalar_prefetch = 0 : i64, scratch_operands = 0 : i64, tpu.core_type = #tpu.core_type<tc>, window_params = [{transform_indices = @transform_0, window_bounds = array<i64: 16, 512>}, {pipeline_mode = #tpu.pipeline_mode<synchronous>, transform_indices = @transform_1, window_bounds = array<i64: 48, 16>}, {pipeline_mode = #tpu.pipeline_mode<synchronous>, transform_indices = @transform_2, window_bounds = array<i64: 48, 1>}, {transform_indices = @transform_3, window_bounds = array<i64: 48, 512>}]} {
    %c0 = arith.constant 0 : index
    %c0_0 = arith.constant 0 : index
    %0 = vector.load %arg1[%c0, %c0_0] : memref<16x512xf32, #tpu.memory_space<vmem>>, vector<16x512xf32>
    %1 = arith.truncf %0 : vector<16x512xf32> to vector<16x512xbf16>
    %c0_1 = arith.constant 0 : index
    %c0_2 = arith.constant 0 : index
    %2 = vector.load %arg2[%c0_1, %c0_2] : memref<48x16xbf16, #tpu.memory_space<vmem>>, vector<48x16xbf16>
    %cst = arith.constant dense<0.000000e+00> : vector<48x512xf32>
    %3 = tpu.matmul %2, %1, %cst {dimension_numbers = #tpu.dot_dimension_numbers<[1], [0], [0], [1], [0, 0, 1, 1], [], []>} : vector<48x16xbf16>, vector<16x512xbf16>, vector<48x512xf32> -> vector<48x512xf32>
    %c0_3 = arith.constant 0 : index
    %c0_4 = arith.constant 0 : index
    %4 = vector.load %arg3[%c0_3, %c0_4] : memref<48x1xf32, #tpu.memory_space<vmem>>, vector<48x1xf32>
    %5 = vector.broadcast %4 : vector<48x1xf32> to vector<48x512xf32>
    %6 = arith.addf %3, %5 : vector<48x512xf32>
    %c0_5 = arith.constant 0 : index
    %c0_6 = arith.constant 0 : index
    %7 = vector.load %arg4[%c0_5, %c0_6] : memref<48x512xf32, #tpu.memory_space<vmem>>, vector<48x512xf32>
    tpu.vector_store %arg4[%c0_5, %c0_6], %6 {strides = array<i32>} : memref<48x512xf32, #tpu.memory_space<vmem>>, vector<48x512xf32>,
    return
  }
  func.func @transform_0(%arg0: i32) -> (i32, i32) {
    %c0_i32 = arith.constant 0 : i32
    %c0_i32_0 = arith.constant 0 : i32
    return %c0_i32, %arg0 : i32, i32
  }
  func.func @transform_1(%arg0: i32) -> (i32, i32) {
    %c0_i32 = arith.constant 0 : i32
    %c0_i32_0 = arith.constant 0 : i32
    %c0_i32_1 = arith.constant 0 : i32
    return %c0_i32, %c0_i32_0 : i32, i32
  }
  func.func @transform_2(%arg0: i32) -> (i32, i32) {
    %c0_i32 = arith.constant 0 : i32
    %c0_i32_0 = arith.constant 0 : i32
    %c0_i32_1 = arith.constant 0 : i32
    return %c0_i32, %c0_i32_0 : i32, i32
  }
  func.func @transform_3(%arg0: i32) -> (i32, i32) {
    %c0_i32 = arith.constant 0 : i32
    %c0_i32_0 = arith.constant 0 : i32
    return %c0_i32, %arg0 : i32, i32
  }
}

module attributes {stable_mosaic.version = 11 : i64} {
  func.func @_attn_kernel(%arg0: i32, %arg1: memref<2x8x512xf32, #tpu.memory_space<vmem>>, %arg2: memref<2x8x512xf32, #tpu.memory_space<vmem>>, %arg3: memref<2x8x512xf32, #tpu.memory_space<vmem>>, %arg4: memref<2x8x512xf32, #tpu.memory_space<vmem>>) attributes {dimension_semantics = [#tpu.dimension_semantics<parallel>], iteration_bounds = array<i64: 4>, scalar_prefetch = 0 : i64, scratch_operands = 0 : i64, tpu.core_type = #tpu.core_type<tc>, window_params = [{transform_indices = @transform_0, window_bounds = array<i64: 2, 8, 512>}, {transform_indices = @transform_1, window_bounds = array<i64: 2, 8, 512>}, {transform_indices = @transform_2, window_bounds = array<i64: 2, 8, 512>}, {transform_indices = @transform_3, window_bounds = array<i64: 2, 8, 512>}]} {
    %c0 = arith.constant 0 : index
    %c0_0 = arith.constant 0 : index
    %c0_1 = arith.constant 0 : index
    %0 = vector.load %arg1[%c0, %c0_0, %c0_1] : memref<2x8x512xf32, #tpu.memory_space<vmem>>, vector<2x8x512xf32>
    %c0_2 = arith.constant 0 : index
    %c0_3 = arith.constant 0 : index
    %c0_4 = arith.constant 0 : index
    %1 = vector.load %arg2[%c0_2, %c0_3, %c0_4] : memref<2x8x512xf32, #tpu.memory_space<vmem>>, vector<2x8x512xf32>
    %c0_5 = arith.constant 0 : index
    %c0_6 = arith.constant 0 : index
    %c0_7 = arith.constant 0 : index
    %2 = vector.load %arg3[%c0_5, %c0_6, %c0_7] : memref<2x8x512xf32, #tpu.memory_space<vmem>>, vector<2x8x512xf32>
    %3 = vector.extract_strided_slice %0 {offsets = [0, 0, 0], sizes = [1, 8, 512], strides = [1, 1, 1]} : vector<2x8x512xf32> to vector<1x8x512xf32>
    %4 = vector.shape_cast %3 : vector<1x8x512xf32> to vector<8x512xf32>
    %5 = vector.shape_cast %4 : vector<8x512xf32> to vector<8x1x512xf32>
    %6 = vector.extract_strided_slice %1 {offsets = [0, 0, 0], sizes = [1, 8, 512], strides = [1, 1, 1]} : vector<2x8x512xf32> to vector<1x8x512xf32>
    %7 = vector.shape_cast %6 : vector<1x8x512xf32> to vector<8x512xf32>
    %8 = vector.shape_cast %7 : vector<8x512xf32> to vector<1x8x512xf32>
    %9 = vector.broadcast %5 : vector<8x1x512xf32> to vector<8x8x512xf32>
    %10 = vector.broadcast %8 : vector<1x8x512xf32> to vector<8x8x512xf32>
    %11 = arith.mulf %9, %10 : vector<8x8x512xf32>
    %12 = vector.extract_strided_slice %0 {offsets = [1, 0, 0], sizes = [1, 8, 512], strides = [1, 1, 1]} : vector<2x8x512xf32> to vector<1x8x512xf32>
    %13 = vector.shape_cast %12 : vector<1x8x512xf32> to vector<8x512xf32>
    %14 = vector.shape_cast %13 : vector<8x512xf32> to vector<8x1x512xf32>
    %15 = vector.extract_strided_slice %1 {offsets = [1, 0, 0], sizes = [1, 8, 512], strides = [1, 1, 1]} : vector<2x8x512xf32> to vector<1x8x512xf32>
    %16 = vector.shape_cast %15 : vector<1x8x512xf32> to vector<8x512xf32>
    %17 = vector.shape_cast %16 : vector<8x512xf32> to vector<1x8x512xf32>
    %18 = vector.broadcast %14 : vector<8x1x512xf32> to vector<8x8x512xf32>
    %19 = vector.broadcast %17 : vector<1x8x512xf32> to vector<8x8x512xf32>
    %20 = arith.mulf %18, %19 : vector<8x8x512xf32>
    %21 = arith.addf %11, %20 : vector<8x8x512xf32>
    %cst = arith.constant dense<0xFF800000> : vector<8x512xf32>
    %22 = vector.multi_reduction <maximumf>, %21, %cst [1] : vector<8x8x512xf32> to vector<8x512xf32>
    %23 = vector.shape_cast %22 : vector<8x512xf32> to vector<8x1x512xf32>
    %24 = vector.broadcast %23 : vector<8x1x512xf32> to vector<8x8x512xf32>
    %25 = arith.subf %21, %24 : vector<8x8x512xf32>
    %26 = math.exp %25 : vector<8x8x512xf32>
    %cst_8 = arith.constant dense<0.000000e+00> : vector<8x512xf32>
    %27 = vector.multi_reduction <add>, %26, %cst_8 [1] : vector<8x8x512xf32> to vector<8x512xf32>
    %28 = tpu.reciprocal %27 {approx = true} : vector<8x512xf32> -> vector<8x512xf32>
    %29 = vector.extract_strided_slice %2 {offsets = [0, 0, 0], sizes = [1, 8, 512], strides = [1, 1, 1]} : vector<2x8x512xf32> to vector<1x8x512xf32>
    %30 = vector.shape_cast %29 : vector<1x8x512xf32> to vector<8x512xf32>
    %31 = vector.shape_cast %30 : vector<8x512xf32> to vector<1x8x512xf32>
    %32 = vector.broadcast %31 : vector<1x8x512xf32> to vector<8x8x512xf32>
    %33 = arith.mulf %26, %32 : vector<8x8x512xf32>
    %cst_9 = arith.constant dense<0.000000e+00> : vector<8x512xf32>
    %34 = vector.multi_reduction <add>, %33, %cst_9 [1] : vector<8x8x512xf32> to vector<8x512xf32>
    %35 = arith.mulf %34, %28 : vector<8x512xf32>
    %c0_10 = arith.constant 0 : index
    %c0_11 = arith.constant 0 : index
    %c0_12 = arith.constant 0 : index
    %36 = vector.load %arg4[%c0_10, %c0_11, %c0_12] : memref<2x8x512xf32, #tpu.memory_space<vmem>>, vector<1x8x512xf32>
    %37 = vector.shape_cast %36 : vector<1x8x512xf32> to vector<8x512xf32>
    %38 = vector.shape_cast %35 : vector<8x512xf32> to vector<1x8x512xf32>
    tpu.vector_store %arg4[%c0_10, %c0_11, %c0_12], %38 {strides = array<i32>} : memref<2x8x512xf32, #tpu.memory_space<vmem>>, vector<1x8x512xf32>,
    %39 = vector.extract_strided_slice %2 {offsets = [1, 0, 0], sizes = [1, 8, 512], strides = [1, 1, 1]} : vector<2x8x512xf32> to vector<1x8x512xf32>
    %40 = vector.shape_cast %39 : vector<1x8x512xf32> to vector<8x512xf32>
    %41 = vector.shape_cast %40 : vector<8x512xf32> to vector<1x8x512xf32>
    %42 = vector.broadcast %41 : vector<1x8x512xf32> to vector<8x8x512xf32>
    %43 = arith.mulf %26, %42 : vector<8x8x512xf32>
    %cst_13 = arith.constant dense<0.000000e+00> : vector<8x512xf32>
    %44 = vector.multi_reduction <add>, %43, %cst_13 [1] : vector<8x8x512xf32> to vector<8x512xf32>
    %45 = arith.mulf %44, %28 : vector<8x512xf32>
    %c1 = arith.constant 1 : index
    %c0_14 = arith.constant 0 : index
    %c0_15 = arith.constant 0 : index
    %46 = vector.load %arg4[%c1, %c0_14, %c0_15] : memref<2x8x512xf32, #tpu.memory_space<vmem>>, vector<1x8x512xf32>
    %47 = vector.shape_cast %46 : vector<1x8x512xf32> to vector<8x512xf32>
    %48 = vector.shape_cast %45 : vector<8x512xf32> to vector<1x8x512xf32>
    tpu.vector_store %arg4[%c1, %c0_14, %c0_15], %48 {strides = array<i32>} : memref<2x8x512xf32, #tpu.memory_space<vmem>>, vector<1x8x512xf32>,
    return
  }
  func.func @transform_0(%arg0: i32) -> (i32, i32, i32) {
    %c0_i32 = arith.constant 0 : i32
    %c0_i32_0 = arith.constant 0 : i32
    %c0_i32_1 = arith.constant 0 : i32
    return %c0_i32, %c0_i32_0, %arg0 : i32, i32, i32
  }
  func.func @transform_1(%arg0: i32) -> (i32, i32, i32) {
    %c0_i32 = arith.constant 0 : i32
    %c0_i32_0 = arith.constant 0 : i32
    %c0_i32_1 = arith.constant 0 : i32
    return %c0_i32, %c0_i32_0, %arg0 : i32, i32, i32
  }
  func.func @transform_2(%arg0: i32) -> (i32, i32, i32) {
    %c0_i32 = arith.constant 0 : i32
    %c0_i32_0 = arith.constant 0 : i32
    %c0_i32_1 = arith.constant 0 : i32
    return %c0_i32, %c0_i32_0, %arg0 : i32, i32, i32
  }
  func.func @transform_3(%arg0: i32) -> (i32, i32, i32) {
    %c0_i32 = arith.constant 0 : i32
    %c0_i32_0 = arith.constant 0 : i32
    %c0_i32_1 = arith.constant 0 : i32
    return %c0_i32, %c0_i32_0, %arg0 : i32, i32, i32
  }
}

module attributes {stable_mosaic.version = 11 : i64} {
  func.func @_out_proj_residual_kernel(%arg0: i32, %arg1: memref<16x512xf32, #tpu.memory_space<vmem>>, %arg2: memref<16x16xbf16, #tpu.memory_space<vmem>>, %arg3: memref<16x1xf32, #tpu.memory_space<vmem>>, %arg4: memref<16x512xf32, #tpu.memory_space<vmem>>, %arg5: memref<16x512xf32, #tpu.memory_space<vmem>>) attributes {dimension_semantics = [#tpu.dimension_semantics<parallel>], iteration_bounds = array<i64: 4>, scalar_prefetch = 0 : i64, scratch_operands = 0 : i64, tpu.core_type = #tpu.core_type<tc>, window_params = [{transform_indices = @transform_0, window_bounds = array<i64: 16, 512>}, {pipeline_mode = #tpu.pipeline_mode<synchronous>, transform_indices = @transform_1, window_bounds = array<i64: 16, 16>}, {pipeline_mode = #tpu.pipeline_mode<synchronous>, transform_indices = @transform_2, window_bounds = array<i64: 16, 1>}, {transform_indices = @transform_3, window_bounds = array<i64: 16, 512>}, {transform_indices = @transform_4, window_bounds = array<i64: 16, 512>}]} {
    %c0 = arith.constant 0 : index
    %c0_0 = arith.constant 0 : index
    %0 = vector.load %arg1[%c0, %c0_0] : memref<16x512xf32, #tpu.memory_space<vmem>>, vector<16x512xf32>
    %1 = arith.truncf %0 : vector<16x512xf32> to vector<16x512xbf16>
    %c0_1 = arith.constant 0 : index
    %c0_2 = arith.constant 0 : index
    %2 = vector.load %arg2[%c0_1, %c0_2] : memref<16x16xbf16, #tpu.memory_space<vmem>>, vector<16x16xbf16>
    %cst = arith.constant dense<0.000000e+00> : vector<16x512xf32>
    %3 = tpu.matmul %2, %1, %cst {dimension_numbers = #tpu.dot_dimension_numbers<[1], [0], [0], [1], [0, 0, 1, 1], [], []>} : vector<16x16xbf16>, vector<16x512xbf16>, vector<16x512xf32> -> vector<16x512xf32>
    %c0_3 = arith.constant 0 : index
    %c0_4 = arith.constant 0 : index
    %4 = vector.load %arg3[%c0_3, %c0_4] : memref<16x1xf32, #tpu.memory_space<vmem>>, vector<16x1xf32>
    %5 = vector.broadcast %4 : vector<16x1xf32> to vector<16x512xf32>
    %6 = arith.addf %3, %5 : vector<16x512xf32>
    %c0_5 = arith.constant 0 : index
    %c0_6 = arith.constant 0 : index
    %7 = vector.load %arg4[%c0_5, %c0_6] : memref<16x512xf32, #tpu.memory_space<vmem>>, vector<16x512xf32>
    %8 = arith.addf %6, %7 : vector<16x512xf32>
    %c0_7 = arith.constant 0 : index
    %c0_8 = arith.constant 0 : index
    %9 = vector.load %arg5[%c0_7, %c0_8] : memref<16x512xf32, #tpu.memory_space<vmem>>, vector<16x512xf32>
    tpu.vector_store %arg5[%c0_7, %c0_8], %8 {strides = array<i32>} : memref<16x512xf32, #tpu.memory_space<vmem>>, vector<16x512xf32>,
    return
  }
  func.func @transform_0(%arg0: i32) -> (i32, i32) {
    %c0_i32 = arith.constant 0 : i32
    %c0_i32_0 = arith.constant 0 : i32
    return %c0_i32, %arg0 : i32, i32
  }
  func.func @transform_1(%arg0: i32) -> (i32, i32) {
    %c0_i32 = arith.constant 0 : i32
    %c0_i32_0 = arith.constant 0 : i32
    %c0_i32_1 = arith.constant 0 : i32
    return %c0_i32, %c0_i32_0 : i32, i32
  }
  func.func @transform_2(%arg0: i32) -> (i32, i32) {
    %c0_i32 = arith.constant 0 : i32
    %c0_i32_0 = arith.constant 0 : i32
    %c0_i32_1 = arith.constant 0 : i32
    return %c0_i32, %c0_i32_0 : i32, i32
  }
  func.func @transform_3(%arg0: i32) -> (i32, i32) {
    %c0_i32 = arith.constant 0 : i32
    %c0_i32_0 = arith.constant 0 : i32
    return %c0_i32, %arg0 : i32, i32
  }
  func.func @transform_4(%arg0: i32) -> (i32, i32) {
    %c0_i32 = arith.constant 0 : i32
    %c0_i32_0 = arith.constant 0 : i32
    return %c0_i32, %arg0 : i32, i32
  }
}

</mosaic_0001>

<llo_original>
// kernel: spatial_self_attention.3
$region0: #{spatial_self_attention.3}
  #allocation0 [shape = 'u32[]', space=smem, size = 0x4, offset = 0x4, fixed_abs, tag = 'smem constant byte address 0x4 - core index']
  #allocation1 [shape = 'u32[144,128]{1,0:T(1,128)}', space=vmem, size = 0x12000, scoped, tag = 'internal scratch']
  %s0 = inlined_call_operand.vmem [shape: f32[16,2048], index: 0, kind: input, shape index: {}]
  %s1 = inlined_call_operand.vmem [shape: bf16[48,16], index: 1, kind: input, shape index: {}]
  %s2 = inlined_call_operand.vmem [shape: f32[48,1], index: 2, kind: input, shape index: {}]
  %s3 = inlined_call_operand.vmem [shape: f32[48,2048], index: 3, kind: output, shape index: {}]
  %s4 = sld [smem:[#allocation0]]
  $region87: #{spatial_self_attention.3} parent=0
    _
  %s6 = ssub.s32 1, %s4
  %s7 = scalar_select 0, %s6, %s4
  $region1: #{spatial_self_attention.3} parent=0
    #allocation2 [shape = 'u8[65536]{0}', space=vmem, size = 0x10000, scoped, tag = 'input window, operand 0']
    #allocation3 [shape = 'u8[196608]{0}', space=vmem, size = 0x30000, scoped, tag = 'output window, operand 0']
    loop: start=0, step=1, limit=6
    $region2: #{spatial_self_attention.3} parent=1 // loop_pre_header
      _
    $region3: #{spatial_self_attention.3} parent=1 // loop_header
      %s9 = sphi 0, %s13
      %p10 = scmp.ge.s32.totalorder %s9, 6
      %s19 = sphi 0, %s21
      %s22 = sphi 0, %s19
      %s23 = sphi 0, %s22
      %s39 = sphi 0, %s23
      %s43 = sphi 0, %s43
      %s45 = sphi 0, %s43
      %s46 = sphi 0, %s45
      %s60 = sphi 0, %s46
      %s64 = sphi 0, %s64
      %s66 = sphi 0, %s64
      %s67 = sphi 0, %s66
      %s81 = sphi 0, %s67
      %s87 = sphi 0, %s89
      %s90 = sphi 0, %s87
      %s91 = sphi 0, %s90
      %s107 = sphi 0, %s91
    $region4: #{spatial_self_attention.3} parent=1 // loop_header_branch
      %12 = sbr.rel (%p10) target = $region8
    $region5: #{spatial_self_attention.3} parent=1 // loop_body
      %s14 = ssub.s32 %s9, 1
      %s15 = ssub.s32 %s9, 2
      %s16 = sadd.s32 %s9, 1
      %s17 = ssub.s32 %s9, %s16
      %p18 = scmp.eq.s32.totalorder %s17, 0
      %s20 = sadd.s32 %s19, 1
      %s21 = scalar_select %p18, %s19, %s20
      %p24 = pneg %p18
      %p25 = scmp.eq.s32.totalorder %s9, 3
      %p26 = por %p24, %p25
      %p27 = scmp.ne.s32.totalorder %s19, %s22
      %p28 = scmp.eq.s32.totalorder %s9, 0
      %p29 = por %p27, %p28
      %p30 = scmp.ne.s32.totalorder %s19, %s22
      %p31 = scmp.eq.s32.totalorder %s14, 3
      %p32 = por %p30, %p31
      %p33 = scmp.ne.s32.totalorder %s22, %s23
      %p34 = scmp.eq.s32.totalorder %s14, 0
      %p35 = por %p33, %p34
      %p36 = scmp.ne.s32.totalorder %s22, %s23
      %p37 = scmp.eq.s32.totalorder %s15, 3
      %p38 = por %p36, %p37
      %p40 = scmp.ne.s32.totalorder %s23, %s39
      %p41 = scmp.eq.s32.totalorder %s15, 0
      %p42 = por %p40, %p41
      %s44 = sadd.s32 %s43, 1
      %p47 = scmp.eq.s32.totalorder %s9, 3
      %p48 = scmp.ne.s32.totalorder %s43, %s45
      %p49 = scmp.eq.s32.totalorder %s9, 0
      %p50 = por %p48, %p49
      %p51 = scmp.ne.s32.totalorder %s43, %s45
      %p52 = scmp.eq.s32.totalorder %s14, 3
      %p53 = por %p51, %p52
      %p54 = scmp.ne.s32.totalorder %s45, %s46
      %p55 = scmp.eq.s32.totalorder %s14, 0
      %p56 = por %p54, %p55
      %p57 = scmp.ne.s32.totalorder %s45, %s46
      %p58 = scmp.eq.s32.totalorder %s15, 3
      %p59 = por %p57, %p58
      %p61 = scmp.ne.s32.totalorder %s46, %s60
      %p62 = scmp.eq.s32.totalorder %s15, 0
      %p63 = por %p61, %p62
      %s65 = sadd.s32 %s64, 1
      %p68 = scmp.eq.s32.totalorder %s9, 3
      %p69 = scmp.ne.s32.totalorder %s64, %s66
      %p70 = scmp.eq.s32.totalorder %s9, 0
      %p71 = por %p69, %p70
      %p72 = scmp.ne.s32.totalorder %s64, %s66
      %p73 = scmp.eq.s32.totalorder %s14, 3
      %p74 = por %p72, %p73
      %p75 = scmp.ne.s32.totalorder %s66, %s67
      %p76 = scmp.eq.s32.totalorder %s14, 0
      %p77 = por %p75, %p76
      %p78 = scmp.ne.s32.totalorder %s66, %s67
      %p79 = scmp.eq.s32.totalorder %s15, 3
      %p80 = por %p78, %p79
      %p82 = scmp.ne.s32.totalorder %s67, %s81
      %p83 = scmp.eq.s32.totalorder %s15, 0
      %p84 = por %p82, %p83
      %s85 = ssub.s32 %s9, %s16
      %p86 = scmp.eq.s32.totalorder %s85, 0
      %s88 = sadd.s32 %s87, 1
      %s89 = scalar_select %p86, %s87, %s88
      %p92 = pneg %p86
      %p93 = scmp.eq.s32.totalorder %s9, 3
      %p94 = por %p92, %p93
      %p95 = scmp.ne.s32.totalorder %s87, %s90
      %p96 = scmp.eq.s32.totalorder %s9, 0
      %p97 = por %p95, %p96
      %p98 = scmp.ne.s32.totalorder %s87, %s90
      %p99 = scmp.eq.s32.totalorder %s14, 3
      %p100 = por %p98, %p99
      %p101 = scmp.ne.s32.totalorder %s90, %s91
      %p102 = scmp.eq.s32.totalorder %s14, 0
      %p103 = por %p101, %p102
      %p104 = scmp.ne.s32.totalorder %s90, %s91
      %p105 = scmp.eq.s32.totalorder %s15, 3
      %p106 = por %p104, %p105
      %p108 = scmp.ne.s32.totalorder %s91, %s107
      %p109 = scmp.eq.s32.totalorder %s15, 0
      %p110 = por %p108, %p109
      %p111 = scmp.le.s32.totalorder 1, %s9
      %p112 = scmp.lt.s32.totalorder %s9, 5
      %p113 = pnand %p111, %p112
      %p114 = pneg %p113
      // Predicated region
      $region9: #{spatial_self_attention.3} parent=5 // pred_check
        _
      $region10: #{spatial_self_attention.3} parent=5 // pred_check_branch
        %116 = sbr.rel (%p113) target = $region12
      $region11: #{spatial_self_attention.3} parent=5 // pred_region
        %s117 = ssub.s32 %s9, 1
        // Predicated region
        $region13: #{spatial_self_attention.3} parent=11 // pred_check
          %p118 = pneg %p56
        $region14: #{spatial_self_attention.3} parent=11 // pred_check_branch
          %120 = sbr.rel (%p118) target = $region16
        $region15: #{spatial_self_attention.3} parent=11 // pred_region
          _
        $region16: #{spatial_self_attention.3} parent=11 // pred_fallthru
          _
        // Predicated region
        $region17: #{spatial_self_attention.3} parent=11 // pred_check
          %p121 = pneg %p77
        $region18: #{spatial_self_attention.3} parent=11 // pred_check_branch
          %123 = sbr.rel (%p121) target = $region20
        $region19: #{spatial_self_attention.3} parent=11 // pred_region
          _
        $region20: #{spatial_self_attention.3} parent=11 // pred_fallthru
          _
      $region12: #{spatial_self_attention.3} parent=5 // pred_fallthru
        _
      %p124 = scmp.lt.s32.totalorder %s9, 4
      // Predicated region
      $region21: #{spatial_self_attention.3} parent=5 // pred_check
        %p125 = pneg %p124
      $region22: #{spatial_self_attention.3} parent=5 // pred_check_branch
        %127 = sbr.rel (%p125) target = $region24
      $region23: #{spatial_self_attention.3} parent=5 // pred_region
        // Predicated region
        $region25: #{spatial_self_attention.3} parent=23 // pred_check
          %p128 = pneg %p29
        $region26: #{spatial_self_attention.3} parent=23 // pred_check_branch
          %130 = sbr.rel (%p128) target = $region28
        $region27: #{spatial_self_attention.3} parent=23 // pred_region
          %s131 = sand.u32 %s19, 1
          %s132 = sand.u32 %s19, 1
          %s133 = smul.addr %s132, 64
          %s134 = scalar_lea.vmem [#allocation2], %s133
          %s135 = smul.u32 4, %s9
          %s136 = smul.addr %s135, 8
          %s137 = scalar_lea.vmem %s0, %s136
          // Predicated region
          $region29: #{spatial_self_attention.3} parent=27 // pred_check
            _
          $region30: #{spatial_self_attention.3} parent=27 // pred_check_branch
            %139 = sbr.rel (0) target = $region32
          $region31: #{spatial_self_attention.3} parent=27 // pred_region
            // Predicated region
            $region33: #{spatial_self_attention.3} parent=31 // pred_check
              _
            $region34: #{spatial_self_attention.3} parent=31 // pred_check_branch
              %141 = sbr.rel (0) target = $region36
            $region35: #{spatial_self_attention.3} parent=31 // pred_region
              loop: start=0, step=1, limit=1
              $region37: #{spatial_self_attention.3} parent=35 // loop_pre_header
                _
              $region38: #{spatial_self_attention.3} parent=35 // loop_header
                %s143 = sphi 0, %s147
                %p144 = scmp.ge.s32.totalorder %s143, 1
                %s148 = sphi %s137, %s137
                %s149 = sphi %s134, %s134
              $region39: #{spatial_self_attention.3} parent=35 // loop_header_branch
                %146 = sbr.rel (%p144) target = $region43
              $region40: #{spatial_self_attention.3} parent=35 // loop_body
                %v150 = vld [vmem:[%s148] sm:$0xff]
                %151 = vst [vmem:[%s149] sm:$0xff] %v150
                %v152 = vld [vmem:[%s148 + $0x8] sm:$0xff]
                %153 = vst [vmem:[%s149 + $0x8] sm:$0xff] %v152
                %v154 = vld [vmem:[%s148 + $0x10] sm:$0xff]
                %155 = vst [vmem:[%s149 + $0x10] sm:$0xff] %v154
                %v156 = vld [vmem:[%s148 + $0x18] sm:$0xff]
                %157 = vst [vmem:[%s149 + $0x18] sm:$0xff] %v156
                %v158 = vld [vmem:[%s148 + $0x80] sm:$0xff]
                %159 = vst [vmem:[%s149 + $0x20] sm:$0xff] %v158
                %v160 = vld [vmem:[%s148 + $0x88] sm:$0xff]
                %161 = vst [vmem:[%s149 + $0x28] sm:$0xff] %v160
                %v162 = vld [vmem:[%s148 + $0x90] sm:$0xff]
                %163 = vst [vmem:[%s149 + $0x30] sm:$0xff] %v162
                %v164 = vld [vmem:[%s148 + $0x98] sm:$0xff]
                %165 = vst [vmem:[%s149 + $0x38] sm:$0xff] %v164
              $region41: #{spatial_self_attention.3} parent=35 // loop_footer
                %s147 = sadd.s32 1, %s143
              $region42: #{spatial_self_attention.3} parent=35 // loop_footer_branch
                %142 = sbr.rel target = $region38
              $region43: #{spatial_self_attention.3} parent=35 // loop_exit
                _
            $region36: #{spatial_self_attention.3} parent=31 // pred_fallthru
              _
            // Predicated region
            $region44: #{spatial_self_attention.3} parent=31 // pred_check
              _
            $region45: #{spatial_self_attention.3} parent=31 // pred_check_branch
              %167 = sbr.rel target = $region47
            $region46: #{spatial_self_attention.3} parent=31 // pred_region
              _
            $region47: #{spatial_self_attention.3} parent=31 // pred_fallthru
              _
          $region32: #{spatial_self_attention.3} parent=27 // pred_fallthru
            _
          %168 = vnop
        $region28: #{spatial_self_attention.3} parent=23 // pred_fallthru
          _
      $region24: #{spatial_self_attention.3} parent=5 // pred_fallthru
        _
      %p169 = scmp.le.s32.totalorder 1, %s9
      %p170 = scmp.lt.s32.totalorder %s9, 5
      %p171 = pnand %p169, %p170
      %p172 = pneg %p171
      // Predicated region
      $region48: #{spatial_self_attention.3} parent=5 // pred_check
        _
      $region49: #{spatial_self_attention.3} parent=5 // pred_check_branch
        %174 = sbr.rel (%p171) target = $region51
      $region50: #{spatial_self_attention.3} parent=5 // pred_region
        %s175 = ssub.s32 %s9, 1
        %s176 = sand.u32 %s22, 1
        %s177 = sand.u32 %s22, 1
        %s178 = smul.addr %s177, 64
        %s179 = scalar_lea.vmem [#allocation2], %s178
        // Predicated region
        $region52: #{spatial_self_attention.3} parent=50 // pred_check
          %p180 = pneg %p35
        $region53: #{spatial_self_attention.3} parent=50 // pred_check_branch
          %182 = sbr.rel (%p180) target = $region55
        $region54: #{spatial_self_attention.3} parent=50 // pred_region
          _
        $region55: #{spatial_self_attention.3} parent=50 // pred_fallthru
          _
        %s183 = sand.u32 %s22, 1
        %s184 = sand.u32 %s22, 1
        %s185 = smul.addr %s184, 64
        %s186 = scalar_lea.vmem [#allocation2], %s185
        %p187 = pneg %p35
        %p188 = pneg %p32
        %p189 = pneg %p56
        %p190 = pneg %p53
        %p191 = pneg %p77
        %p192 = pneg %p74
        %p193 = pneg %p103
        %p194 = pneg %p100
        %s195 = sand.u32 %s90, 1
        %s196 = sand.u32 %s90, 1
        %s197 = smul.addr %s196, 192
        %s198 = scalar_lea.vmem [#allocation3], %s197
        %s199 = smul.u32 4, %s14
        %s200 = smul.u32 4, %s14
        %v202 = vld [vmem:[%s179] sm:$0xff]
        %v203 = vld [vmem:[%s179 + $0x8] sm:$0xff]
        %v204 = vld [vmem:[%s179 + $0x10] sm:$0xff]
        %v205 = vld [vmem:[%s179 + $0x18] sm:$0xff]
        %v206 = vld [vmem:[%s179 + $0x20] sm:$0xff]
        %v207 = vld [vmem:[%s179 + $0x28] sm:$0xff]
        %v208 = vld [vmem:[%s179 + $0x30] sm:$0xff]
        %v209 = vld [vmem:[%s179 + $0x38] sm:$0xff]
        %v210 = vpack.c.bf16 %v206, %v202
        %v211 = vpack.c.bf16 %v207, %v203
        %v212 = vpack.c.bf16 %v208, %v204
        %v213 = vpack.c.bf16 %v209, %v205
        %v214 = vld [vmem:[%s1] sm:$0xf]
        %v215 = vld [vmem:[%s1 + $0x4] sm:$0xf]
        %v216 = vld [vmem:[%s1 + $0x8] sm:$0xf]
        %v217 = vld [vmem:[%s1 + $0xc] sm:$0xf]
        %v218 = vld [vmem:[%s1 + $0x10] sm:$0xf]
        %v219 = vld [vmem:[%s1 + $0x14] sm:$0xf]
        %v220 = vld [vmem:[%s2] sm:$0xff]
        %v221 = vld [vmem:[%s2 + $0x8] sm:$0xff]
        %v222 = vld [vmem:[%s2 + $0x10] sm:$0xff]
        %v223 = vld [vmem:[%s2 + $0x18] sm:$0xff]
        %v224 = vld [vmem:[%s2 + $0x20] sm:$0xff]
        %v225 = vld [vmem:[%s2 + $0x28] sm:$0xff]
        %227 = vset.pattern.permute.xlu0 0
        %228 = vperm.xlu0 %227, %v220
        %v229 = vpop.permute.xlu0 %228
        %232 = vset.pattern.permute.xlu0 0
        %233 = vperm.xlu0 %232, %v221
        %v234 = vpop.permute.xlu0 %233
        %237 = vset.pattern.permute.xlu0 0
        %238 = vperm.xlu0 %237, %v222
        %v239 = vpop.permute.xlu0 %238
        %242 = vset.pattern.permute.xlu0 0
        %243 = vperm.xlu0 %242, %v223
        %v244 = vpop.permute.xlu0 %243
        %247 = vset.pattern.permute.xlu0 0
        %248 = vperm.xlu0 %247, %v224
        %v249 = vpop.permute.xlu0 %248
        %252 = vset.pattern.permute.xlu0 0
        %253 = vperm.xlu0 %252, %v225
        %v254 = vpop.permute.xlu0 %253
        %v262 = vunpack.c.l.b16 %v214
        %v263 = vunpack.c.l.b16 %v215
        %v264 = vunpack.c.l.b16 %v216
        %v265 = vunpack.c.l.b16 %v217
        %v266 = vunpack.c.l.b16 %v218
        %v267 = vunpack.c.l.b16 %v219
        %v268 = vpack.c.b16 %v263, %v262
        %v269 = vpack.c.b16 %v265, %v264
        %v270 = vpack.c.b16 %v267, %v266
        %vm271 = vcmask 130048
        %v273 = vsel %vm271, %v268, 0
        %v276 = vsel %vm271, %v269, 0
        %v279 = vsel %vm271, %v270, 0
        %281 = vmatprep.subr.bf16.mxu0 %v211
        %282 = vmatpush1.bf16.msra.mxu0 %v210
        %283 = vmatprep.subr.bf16.mxu0 0
        %284 = vmatpush1.bf16.msra.mxu0 0
        %285 = vmatprep.subr.bf16.mxu0 0
        %286 = vmatpush1.bf16.msra.mxu0 0
        %287 = vmatprep.subr.bf16.mxu0 0
        %288 = vmatpush1.bf16.msra.mxu0 0
        %289 = vmatprep.subr.bf16.mxu0 0
        %290 = vmatpush1.bf16.msra.mxu0 0
        %291 = vmatprep.subr.bf16.mxu0 0
        %292 = vmatpush1.bf16.msra.mxu0 0
        %293 = vmatprep.subr.bf16.mxu0 0
        %294 = vmatpush1.bf16.msra.mxu0 0
        %295 = vmatprep.subr.bf16.mxu0 0
        %296 = vmatpush1.bf16.msra.mxu0 0
        %297 = vmatprep.subr.bf16.mxu0 0
        %298 = vmatpush1.bf16.msra.mxu0 0
        %299 = vmatprep.subr.bf16.mxu0 0
        %300 = vmatpush1.bf16.msra.mxu0 0
        %301 = vmatprep.subr.bf16.mxu0 0
        %302 = vmatpush1.bf16.msra.mxu0 0
        %303 = vmatprep.subr.bf16.mxu0 0
        %304 = vmatpush1.bf16.msra.mxu0 0
        %305 = vmatprep.subr.bf16.mxu0 0
        %306 = vmatpush1.bf16.msra.mxu0 0
        %307 = vmatprep.subr.bf16.mxu0 0
        %308 = vmatpush1.bf16.msra.mxu0 0
        %309 = vmatprep.subr.bf16.mxu0 0
        %310 = vmatpush1.bf16.msra.mxu0 0
        %311 = vmatprep.subr.bf16.mxu0 0
        %312 = vmatpush1.bf16.msra.mxu0 0
        %313 = vmatprep.mubr.bf16.mxu0 0
        %314 = vmatmul.mubr.bf16.gmra.mrb[0].mxu0 %v273
        %v315 = vpop.f32.mrb[0].mxu0
        %v316 = vadd.f32 %v229, %v315
        %v317 = vpop.f32.mrb[0].mxu0
        %v318 = vadd.f32 %v229, %v317
        %v319 = vpop.f32.mrb[0].mxu0
        %v320 = vadd.f32 %v234, %v319
        %v321 = vpop.f32.mrb[0].mxu0
        %v322 = vadd.f32 %v234, %v321
        %323 = vmatprep.mubr.bf16.mxu0 0
        %324 = vmatmul.mubr.bf16.gmra.mrb[0].mxu0 %v276
        %v325 = vpop.f32.mrb[0].mxu0
        %v326 = vadd.f32 %v239, %v325
        %v327 = vpop.f32.mrb[0].mxu0
        %v328 = vadd.f32 %v239, %v327
        %v329 = vpop.f32.mrb[0].mxu0
        %v330 = vadd.f32 %v244, %v329
        %v331 = vpop.f32.mrb[0].mxu0
        %v332 = vadd.f32 %v244, %v331
        %333 = vmatprep.mubr.bf16.mxu0 0
        %334 = vmatmul.mubr.bf16.gmra.mrb[0].mxu0 %v279
        %v335 = vpop.f32.mrb[0].mxu0
        %v336 = vadd.f32 %v249, %v335
        %v337 = vpop.f32.mrb[0].mxu0
        %v338 = vadd.f32 %v249, %v337
        %v339 = vpop.f32.mrb[0].mxu0
        %v340 = vadd.f32 %v254, %v339
        %v341 = vpop.f32.mrb[0].mxu0
        %v342 = vadd.f32 %v254, %v341
        %343 = vdwg.mxu0
        %344 = vmatprep.subr.bf16.mxu0 %v213
        %345 = vmatpush1.bf16.msra.mxu0 %v212
        %346 = vmatprep.subr.bf16.mxu0 0
        %347 = vmatpush1.bf16.msra.mxu0 0
        %348 = vmatprep.subr.bf16.mxu0 0
        %349 = vmatpush1.bf16.msra.mxu0 0
        %350 = vmatprep.subr.bf16.mxu0 0
        %351 = vmatpush1.bf16.msra.mxu0 0
        %352 = vmatprep.subr.bf16.mxu0 0
        %353 = vmatpush1.bf16.msra.mxu0 0
        %354 = vmatprep.subr.bf16.mxu0 0
        %355 = vmatpush1.bf16.msra.mxu0 0
        %356 = vmatprep.subr.bf16.mxu0 0
        %357 = vmatpush1.bf16.msra.mxu0 0
        %358 = vmatprep.subr.bf16.mxu0 0
        %359 = vmatpush1.bf16.msra.mxu0 0
        %360 = vmatprep.subr.bf16.mxu0 0
        %361 = vmatpush1.bf16.msra.mxu0 0
        %362 = vmatprep.subr.bf16.mxu0 0
        %363 = vmatpush1.bf16.msra.mxu0 0
        %364 = vmatprep.subr.bf16.mxu0 0
        %365 = vmatpush1.bf16.msra.mxu0 0
        %366 = vmatprep.subr.bf16.mxu0 0
        %367 = vmatpush1.bf16.msra.mxu0 0
        %368 = vmatprep.subr.bf16.mxu0 0
        %369 = vmatpush1.bf16.msra.mxu0 0
        %370 = vmatprep.subr.bf16.mxu0 0
        %371 = vmatpush1.bf16.msra.mxu0 0
        %372 = vmatprep.subr.bf16.mxu0 0
        %373 = vmatpush1.bf16.msra.mxu0 0
        %374 = vmatprep.subr.bf16.mxu0 0
        %375 = vmatpush1.bf16.msra.mxu0 0
        %376 = vmatprep.mubr.bf16.mxu0 0
        %377 = vmatmul.mubr.bf16.gmra.mrb[0].mxu0 %v273
        %v378 = vpop.f32.mrb[0].mxu0
        %v379 = vadd.f32 %v229, %v378
        %v380 = vpop.f32.mrb[0].mxu0
        %v381 = vadd.f32 %v229, %v380
        %v382 = vpop.f32.mrb[0].mxu0
        %v383 = vadd.f32 %v234, %v382
        %v384 = vpop.f32.mrb[0].mxu0
        %v385 = vadd.f32 %v234, %v384
        %386 = vmatprep.mubr.bf16.mxu0 0
        %387 = vmatmul.mubr.bf16.gmra.mrb[0].mxu0 %v276
        %v388 = vpop.f32.mrb[0].mxu0
        %v389 = vadd.f32 %v239, %v388
        %v390 = vpop.f32.mrb[0].mxu0
        %v391 = vadd.f32 %v239, %v390
        %v392 = vpop.f32.mrb[0].mxu0
        %v393 = vadd.f32 %v244, %v392
        %v394 = vpop.f32.mrb[0].mxu0
        %v395 = vadd.f32 %v244, %v394
        %396 = vmatprep.mubr.bf16.mxu0 0
        %397 = vmatmul.mubr.bf16.gmra.mrb[0].mxu0 %v279
        %v398 = vpop.f32.mrb[0].mxu0
        %v399 = vadd.f32 %v249, %v398
        %v400 = vpop.f32.mrb[0].mxu0
        %v401 = vadd.f32 %v249, %v400
        %v402 = vpop.f32.mrb[0].mxu0
        %v403 = vadd.f32 %v254, %v402
        %v404 = vpop.f32.mrb[0].mxu0
        %v405 = vadd.f32 %v254, %v404
        %406 = vdwg.mxu0
        %407 = vst [vmem:[%s198] sm:$0xff] %v316
        %408 = vst [vmem:[%s198 + $0x8] sm:$0xff] %v318
        %409 = vst [vmem:[%s198 + $0x10] sm:$0xff] %v379
        %410 = vst [vmem:[%s198 + $0x18] sm:$0xff] %v381
        %411 = vst [vmem:[%s198 + $0x20] sm:$0xff] %v320
        %412 = vst [vmem:[%s198 + $0x28] sm:$0xff] %v322
        %413 = vst [vmem:[%s198 + $0x30] sm:$0xff] %v383
        %414 = vst [vmem:[%s198 + $0x38] sm:$0xff] %v385
        %415 = vst [vmem:[%s198 + $0x40] sm:$0xff] %v326
        %416 = vst [vmem:[%s198 + $0x48] sm:$0xff] %v328
        %417 = vst [vmem:[%s198 + $0x50] sm:$0xff] %v389
        %418 = vst [vmem:[%s198 + $0x58] sm:$0xff] %v391
        %419 = vst [vmem:[%s198 + $0x60] sm:$0xff] %v330
        %420 = vst [vmem:[%s198 + $0x68] sm:$0xff] %v332
        %421 = vst [vmem:[%s198 + $0x70] sm:$0xff] %v393
        %422 = vst [vmem:[%s198 + $0x78] sm:$0xff] %v395
        %423 = vst [vmem:[%s198 + $0x80] sm:$0xff] %v336
        %424 = vst [vmem:[%s198 + $0x88] sm:$0xff] %v338
        %425 = vst [vmem:[%s198 + $0x90] sm:$0xff] %v399
        %426 = vst [vmem:[%s198 + $0x98] sm:$0xff] %v401
        %427 = vst [vmem:[%s198 + $0xa0] sm:$0xff] %v340
        %428 = vst [vmem:[%s198 + $0xa8] sm:$0xff] %v342
        %429 = vst [vmem:[%s198 + $0xb0] sm:$0xff] %v403
        %430 = vst [vmem:[%s198 + $0xb8] sm:$0xff] %v405
        %s431 = sand.u32 %s90, 1
        %s432 = sand.u32 %s90, 1
        %s433 = smul.addr %s432, 192
        %s434 = scalar_lea.vmem [#allocation3], %s433
        // Predicated region
        $region56: #{spatial_self_attention.3} parent=50 // pred_check
          %p435 = pneg %p100
        $region57: #{spatial_self_attention.3} parent=50 // pred_check_branch
          %437 = sbr.rel (%p435) target = $region59
        $region58: #{spatial_self_attention.3} parent=50 // pred_region
          %s438 = smul.u32 4, %s14
          %s439 = smul.addr %s438, 8
          %s440 = scalar_lea.vmem %s3, %s439
          // Predicated region
          $region60: #{spatial_self_attention.3} parent=58 // pred_check
            _
          $region61: #{spatial_self_attention.3} parent=58 // pred_check_branch
            %442 = sbr.rel (0) target = $region63
          $region62: #{spatial_self_attention.3} parent=58 // pred_region
            // Predicated region
            $region64: #{spatial_self_attention.3} parent=62 // pred_check
              _
            $region65: #{spatial_self_attention.3} parent=62 // pred_check_branch
              %444 = sbr.rel (0) target = $region67
            $region66: #{spatial_self_attention.3} parent=62 // pred_region
              loop: start=0, step=1, limit=1
              $region68: #{spatial_self_attention.3} parent=66 // loop_pre_header
                _
              $region69: #{spatial_self_attention.3} parent=66 // loop_header
                %s446 = sphi 0, %s450
                %p447 = scmp.ge.s32.totalorder %s446, 1
                %s451 = sphi %s434, %s434
                %s452 = sphi %s440, %s440
              $region70: #{spatial_self_attention.3} parent=66 // loop_header_branch
                %449 = sbr.rel (%p447) target = $region74
              $region71: #{spatial_self_attention.3} parent=66 // loop_body
                %v453 = vld [vmem:[%s451] sm:$0xff]
                %454 = vst [vmem:[%s452] sm:$0xff] %v453
                %v455 = vld [vmem:[%s451 + $0x8] sm:$0xff]
                %456 = vst [vmem:[%s452 + $0x8] sm:$0xff] %v455
                %v457 = vld [vmem:[%s451 + $0x10] sm:$0xff]
                %458 = vst [vmem:[%s452 + $0x10] sm:$0xff] %v457
                %v459 = vld [vmem:[%s451 + $0x18] sm:$0xff]
                %460 = vst [vmem:[%s452 + $0x18] sm:$0xff] %v459
                %v461 = vld [vmem:[%s451 + $0x20] sm:$0xff]
                %462 = vst [vmem:[%s452 + $0x80] sm:$0xff] %v461
                %v463 = vld [vmem:[%s451 + $0x28] sm:$0xff]
                %464 = vst [vmem:[%s452 + $0x88] sm:$0xff] %v463
                %v465 = vld [vmem:[%s451 + $0x30] sm:$0xff]
                %466 = vst [vmem:[%s452 + $0x90] sm:$0xff] %v465
                %v467 = vld [vmem:[%s451 + $0x38] sm:$0xff]
                %468 = vst [vmem:[%s452 + $0x98] sm:$0xff] %v467
                %v469 = vld [vmem:[%s451 + $0x40] sm:$0xff]
                %470 = vst [vmem:[%s452 + $0x100] sm:$0xff] %v469
                %v471 = vld [vmem:[%s451 + $0x48] sm:$0xff]
                %472 = vst [vmem:[%s452 + $0x108] sm:$0xff] %v471
                %v473 = vld [vmem:[%s451 + $0x50] sm:$0xff]
                %474 = vst [vmem:[%s452 + $0x110] sm:$0xff] %v473
                %v475 = vld [vmem:[%s451 + $0x58] sm:$0xff]
                %476 = vst [vmem:[%s452 + $0x118] sm:$0xff] %v475
                %v477 = vld [vmem:[%s451 + $0x60] sm:$0xff]
                %478 = vst [vmem:[%s452 + $0x180] sm:$0xff] %v477
                %v479 = vld [vmem:[%s451 + $0x68] sm:$0xff]
                %480 = vst [vmem:[%s452 + $0x188] sm:$0xff] %v479
                %v481 = vld [vmem:[%s451 + $0x70] sm:$0xff]
                %482 = vst [vmem:[%s452 + $0x190] sm:$0xff] %v481
                %v483 = vld [vmem:[%s451 + $0x78] sm:$0xff]
                %484 = vst [vmem:[%s452 + $0x198] sm:$0xff] %v483
                %v485 = vld [vmem:[%s451 + $0x80] sm:$0xff]
                %486 = vst [vmem:[%s452 + $0x200] sm:$0xff] %v485
                %v487 = vld [vmem:[%s451 + $0x88] sm:$0xff]
                %488 = vst [vmem:[%s452 + $0x208] sm:$0xff] %v487
                %v489 = vld [vmem:[%s451 + $0x90] sm:$0xff]
                %490 = vst [vmem:[%s452 + $0x210] sm:$0xff] %v489
                %v491 = vld [vmem:[%s451 + $0x98] sm:$0xff]
                %492 = vst [vmem:[%s452 + $0x218] sm:$0xff] %v491
                %v493 = vld [vmem:[%s451 + $0xa0] sm:$0xff]
                %494 = vst [vmem:[%s452 + $0x280] sm:$0xff] %v493
                %v495 = vld [vmem:[%s451 + $0xa8] sm:$0xff]
                %496 = vst [vmem:[%s452 + $0x288] sm:$0xff] %v495
                %v497 = vld [vmem:[%s451 + $0xb0] sm:$0xff]
                %498 = vst [vmem:[%s452 + $0x290] sm:$0xff] %v497
                %v499 = vld [vmem:[%s451 + $0xb8] sm:$0xff]
                %500 = vst [vmem:[%s452 + $0x298] sm:$0xff] %v499
              $region72: #{spatial_self_attention.3} parent=66 // loop_footer
                %s450 = sadd.s32 1, %s446
              $region73: #{spatial_self_attention.3} parent=66 // loop_footer_branch
                %445 = sbr.rel target = $region69
              $region74: #{spatial_self_attention.3} parent=66 // loop_exit
                _
            $region67: #{spatial_self_attention.3} parent=62 // pred_fallthru
              _
            // Predicated region
            $region75: #{spatial_self_attention.3} parent=62 // pred_check
              _
            $region76: #{spatial_self_attention.3} parent=62 // pred_check_branch
              %502 = sbr.rel target = $region78
            $region77: #{spatial_self_attention.3} parent=62 // pred_region
              _
            $region78: #{spatial_self_attention.3} parent=62 // pred_fallthru
              _
          $region63: #{spatial_self_attention.3} parent=58 // pred_fallthru
            _
          %503 = vnop
        $region59: #{spatial_self_attention.3} parent=50 // pred_fallthru
          _
      $region51: #{spatial_self_attention.3} parent=5 // pred_fallthru
        _
      %p504 = scmp.le.s32.totalorder 2, %s9
      // Predicated region
      $region79: #{spatial_self_attention.3} parent=5 // pred_check
        %p505 = pneg %p504
      $region80: #{spatial_self_attention.3} parent=5 // pred_check_branch
        %507 = sbr.rel (%p505) target = $region82
      $region81: #{spatial_self_attention.3} parent=5 // pred_region
        %s508 = ssub.s32 %s9, 2
        // Predicated region
        $region83: #{spatial_self_attention.3} parent=81 // pred_check
          %p509 = pneg %p106
        $region84: #{spatial_self_attention.3} parent=81 // pred_check_branch
          %511 = sbr.rel (%p509) target = $region86
        $region85: #{spatial_self_attention.3} parent=81 // pred_region
          %s512 = sand.u32 %s91, 1
          %s513 = sand.u32 %s91, 1
          %s514 = smul.addr %s513, 192
          %s515 = scalar_lea.vmem [#allocation3], %s514
        $region86: #{spatial_self_attention.3} parent=81 // pred_fallthru
          _
      $region82: #{spatial_self_attention.3} parent=5 // pred_fallthru
        _
    $region6: #{spatial_self_attention.3} parent=1 // loop_footer
      %s13 = sadd.s32 1, %s9
    $region7: #{spatial_self_attention.3} parent=1 // loop_footer_branch
      %8 = sbr.rel target = $region3
    $region8: #{spatial_self_attention.3} parent=1 // loop_exit
      _

// kernel: spatial_self_attention.5
$region0: #{spatial_self_attention.5}
  #allocation0 [shape = 'u32[]', space=smem, size = 0x4, offset = 0x4, fixed_abs, tag = 'smem constant byte address 0x4 - core index']
  #allocation1 [shape = 'u32[144,128]{1,0:T(1,128)}', space=vmem, size = 0x12000, scoped, tag = 'internal scratch']
  %s0 = inlined_call_operand.vmem [shape: f32[16,2048], index: 0, kind: input, shape index: {}]
  %s1 = inlined_call_operand.vmem [shape: bf16[16,16], index: 1, kind: input, shape index: {}]
  %s2 = inlined_call_operand.vmem [shape: f32[16,1], index: 2, kind: input, shape index: {}]
  %s3 = inlined_call_operand.vmem [shape: f32[16,2048], index: 3, kind: input, shape index: {}]
  %s4 = inlined_call_operand.vmem [shape: f32[16,2048], index: 4, kind: output, shape index: {}]
  %s5 = sld [smem:[#allocation0]]
  $region114: #{spatial_self_attention.5} parent=0
    _
  %s7 = ssub.s32 1, %s5
  %s8 = scalar_select 0, %s7, %s5
  $region1: #{spatial_self_attention.5} parent=0
    #allocation2 [shape = 'u8[65536]{0}', space=vmem, size = 0x10000, scoped, tag = 'input window, operand 0']
    #allocation3 [shape = 'u8[65536]{0}', space=vmem, size = 0x10000, scoped, tag = 'input window, operand 3']
    #allocation4 [shape = 'u8[65536]{0}', space=vmem, size = 0x10000, scoped, tag = 'output window, operand 0']
    loop: start=0, step=1, limit=6
    $region2: #{spatial_self_attention.5} parent=1 // loop_pre_header
      _
    $region3: #{spatial_self_attention.5} parent=1 // loop_header
      %s10 = sphi 0, %s14
      %p11 = scmp.ge.s32.totalorder %s10, 6
      %s20 = sphi 0, %s22
      %s23 = sphi 0, %s20
      %s24 = sphi 0, %s23
      %s40 = sphi 0, %s24
      %s44 = sphi 0, %s44
      %s46 = sphi 0, %s44
      %s47 = sphi 0, %s46
      %s61 = sphi 0, %s47
      %s65 = sphi 0, %s65
      %s67 = sphi 0, %s65
      %s68 = sphi 0, %s67
      %s82 = sphi 0, %s68
      %s88 = sphi 0, %s90
      %s91 = sphi 0, %s88
      %s92 = sphi 0, %s91
      %s108 = sphi 0, %s92
      %s114 = sphi 0, %s116
      %s117 = sphi 0, %s114
      %s118 = sphi 0, %s117
      %s134 = sphi 0, %s118
    $region4: #{spatial_self_attention.5} parent=1 // loop_header_branch
      %13 = sbr.rel (%p11) target = $region8
    $region5: #{spatial_self_attention.5} parent=1 // loop_body
      %s15 = ssub.s32 %s10, 1
      %s16 = ssub.s32 %s10, 2
      %s17 = sadd.s32 %s10, 1
      %s18 = ssub.s32 %s10, %s17
      %p19 = scmp.eq.s32.totalorder %s18, 0
      %s21 = sadd.s32 %s20, 1
      %s22 = scalar_select %p19, %s20, %s21
      %p25 = pneg %p19
      %p26 = scmp.eq.s32.totalorder %s10, 3
      %p27 = por %p25, %p26
      %p28 = scmp.ne.s32.totalorder %s20, %s23
      %p29 = scmp.eq.s32.totalorder %s10, 0
      %p30 = por %p28, %p29
      %p31 = scmp.ne.s32.totalorder %s20, %s23
      %p32 = scmp.eq.s32.totalorder %s15, 3
      %p33 = por %p31, %p32
      %p34 = scmp.ne.s32.totalorder %s23, %s24
      %p35 = scmp.eq.s32.totalorder %s15, 0
      %p36 = por %p34, %p35
      %p37 = scmp.ne.s32.totalorder %s23, %s24
      %p38 = scmp.eq.s32.totalorder %s16, 3
      %p39 = por %p37, %p38
      %p41 = scmp.ne.s32.totalorder %s24, %s40
      %p42 = scmp.eq.s32.totalorder %s16, 0
      %p43 = por %p41, %p42
      %s45 = sadd.s32 %s44, 1
      %p48 = scmp.eq.s32.totalorder %s10, 3
      %p49 = scmp.ne.s32.totalorder %s44, %s46
      %p50 = scmp.eq.s32.totalorder %s10, 0
      %p51 = por %p49, %p50
      %p52 = scmp.ne.s32.totalorder %s44, %s46
      %p53 = scmp.eq.s32.totalorder %s15, 3
      %p54 = por %p52, %p53
      %p55 = scmp.ne.s32.totalorder %s46, %s47
      %p56 = scmp.eq.s32.totalorder %s15, 0
      %p57 = por %p55, %p56
      %p58 = scmp.ne.s32.totalorder %s46, %s47
      %p59 = scmp.eq.s32.totalorder %s16, 3
      %p60 = por %p58, %p59
      %p62 = scmp.ne.s32.totalorder %s47, %s61
      %p63 = scmp.eq.s32.totalorder %s16, 0
      %p64 = por %p62, %p63
      %s66 = sadd.s32 %s65, 1
      %p69 = scmp.eq.s32.totalorder %s10, 3
      %p70 = scmp.ne.s32.totalorder %s65, %s67
      %p71 = scmp.eq.s32.totalorder %s10, 0
      %p72 = por %p70, %p71
      %p73 = scmp.ne.s32.totalorder %s65, %s67
      %p74 = scmp.eq.s32.totalorder %s15, 3
      %p75 = por %p73, %p74
      %p76 = scmp.ne.s32.totalorder %s67, %s68
      %p77 = scmp.eq.s32.totalorder %s15, 0
      %p78 = por %p76, %p77
      %p79 = scmp.ne.s32.totalorder %s67, %s68
      %p80 = scmp.eq.s32.totalorder %s16, 3
      %p81 = por %p79, %p80
      %p83 = scmp.ne.s32.totalorder %s68, %s82
      %p84 = scmp.eq.s32.totalorder %s16, 0
      %p85 = por %p83, %p84
      %s86 = ssub.s32 %s10, %s17
      %p87 = scmp.eq.s32.totalorder %s86, 0
      %s89 = sadd.s32 %s88, 1
      %s90 = scalar_select %p87, %s88, %s89
      %p93 = pneg %p87
      %p94 = scmp.eq.s32.totalorder %s10, 3
      %p95 = por %p93, %p94
      %p96 = scmp.ne.s32.totalorder %s88, %s91
      %p97 = scmp.eq.s32.totalorder %s10, 0
      %p98 = por %p96, %p97
      %p99 = scmp.ne.s32.totalorder %s88, %s91
      %p100 = scmp.eq.s32.totalorder %s15, 3
      %p101 = por %p99, %p100
      %p102 = scmp.ne.s32.totalorder %s91, %s92
      %p103 = scmp.eq.s32.totalorder %s15, 0
      %p104 = por %p102, %p103
      %p105 = scmp.ne.s32.totalorder %s91, %s92
      %p106 = scmp.eq.s32.totalorder %s16, 3
      %p107 = por %p105, %p106
      %p109 = scmp.ne.s32.totalorder %s92, %s108
      %p110 = scmp.eq.s32.totalorder %s16, 0
      %p111 = por %p109, %p110
      %s112 = ssub.s32 %s10, %s17
      %p113 = scmp.eq.s32.totalorder %s112, 0
      %s115 = sadd.s32 %s114, 1
      %s116 = scalar_select %p113, %s114, %s115
      %p119 = pneg %p113
      %p120 = scmp.eq.s32.totalorder %s10, 3
      %p121 = por %p119, %p120
      %p122 = scmp.ne.s32.totalorder %s114, %s117
      %p123 = scmp.eq.s32.totalorder %s10, 0
      %p124 = por %p122, %p123
      %p125 = scmp.ne.s32.totalorder %s114, %s117
      %p126 = scmp.eq.s32.totalorder %s15, 3
      %p127 = por %p125, %p126
      %p128 = scmp.ne.s32.totalorder %s117, %s118
      %p129 = scmp.eq.s32.totalorder %s15, 0
      %p130 = por %p128, %p129
      %p131 = scmp.ne.s32.totalorder %s117, %s118
      %p132 = scmp.eq.s32.totalorder %s16, 3
      %p133 = por %p131, %p132
      %p135 = scmp.ne.s32.totalorder %s118, %s134
      %p136 = scmp.eq.s32.totalorder %s16, 0
      %p137 = por %p135, %p136
      %p138 = scmp.le.s32.totalorder 1, %s10
      %p139 = scmp.lt.s32.totalorder %s10, 5
      %p140 = pnand %p138, %p139
      %p141 = pneg %p140
      // Predicated region
      $region9: #{spatial_self_attention.5} parent=5 // pred_check
        _
      $region10: #{spatial_self_attention.5} parent=5 // pred_check_branch
        %143 = sbr.rel (%p140) target = $region12
      $region11: #{spatial_self_attention.5} parent=5 // pred_region
        %s144 = ssub.s32 %s10, 1
        // Predicated region
        $region13: #{spatial_self_attention.5} parent=11 // pred_check
          %p145 = pneg %p57
        $region14: #{spatial_self_attention.5} parent=11 // pred_check_branch
          %147 = sbr.rel (%p145) target = $region16
        $region15: #{spatial_self_attention.5} parent=11 // pred_region
          _
        $region16: #{spatial_self_attention.5} parent=11 // pred_fallthru
          _
        // Predicated region
        $region17: #{spatial_self_attention.5} parent=11 // pred_check
          %p148 = pneg %p78
        $region18: #{spatial_self_attention.5} parent=11 // pred_check_branch
          %150 = sbr.rel (%p148) target = $region20
        $region19: #{spatial_self_attention.5} parent=11 // pred_region
          _
        $region20: #{spatial_self_attention.5} parent=11 // pred_fallthru
          _
      $region12: #{spatial_self_attention.5} parent=5 // pred_fallthru
        _
      %p151 = scmp.lt.s32.totalorder %s10, 4
      // Predicated region
      $region21: #{spatial_self_attention.5} parent=5 // pred_check
        %p152 = pneg %p151
      $region22: #{spatial_self_attention.5} parent=5 // pred_check_branch
        %154 = sbr.rel (%p152) target = $region24
      $region23: #{spatial_self_attention.5} parent=5 // pred_region
        // Predicated region
        $region25: #{spatial_self_attention.5} parent=23 // pred_check
          %p155 = pneg %p30
        $region26: #{spatial_self_attention.5} parent=23 // pred_check_branch
          %157 = sbr.rel (%p155) target = $region28
        $region27: #{spatial_self_attention.5} parent=23 // pred_region
          %s158 = sand.u32 %s20, 1
          %s159 = sand.u32 %s20, 1
          %s160 = smul.addr %s159, 64
          %s161 = scalar_lea.vmem [#allocation2], %s160
          %s162 = smul.u32 4, %s10
          %s163 = smul.addr %s162, 8
          %s164 = scalar_lea.vmem %s0, %s163
          // Predicated region
          $region29: #{spatial_self_attention.5} parent=27 // pred_check
            _
          $region30: #{spatial_self_attention.5} parent=27 // pred_check_branch
            %166 = sbr.rel (0) target = $region32
          $region31: #{spatial_self_attention.5} parent=27 // pred_region
            // Predicated region
            $region33: #{spatial_self_attention.5} parent=31 // pred_check
              _
            $region34: #{spatial_self_attention.5} parent=31 // pred_check_branch
              %168 = sbr.rel (0) target = $region36
            $region35: #{spatial_self_attention.5} parent=31 // pred_region
              loop: start=0, step=1, limit=1
              $region37: #{spatial_self_attention.5} parent=35 // loop_pre_header
                _
              $region38: #{spatial_self_attention.5} parent=35 // loop_header
                %s170 = sphi 0, %s174
                %p171 = scmp.ge.s32.totalorder %s170, 1
                %s175 = sphi %s164, %s164
                %s176 = sphi %s161, %s161
              $region39: #{spatial_self_attention.5} parent=35 // loop_header_branch
                %173 = sbr.rel (%p171) target = $region43
              $region40: #{spatial_self_attention.5} parent=35 // loop_body
                %v177 = vld [vmem:[%s175] sm:$0xff]
                %178 = vst [vmem:[%s176] sm:$0xff] %v177
                %v179 = vld [vmem:[%s175 + $0x8] sm:$0xff]
                %180 = vst [vmem:[%s176 + $0x8] sm:$0xff] %v179
                %v181 = vld [vmem:[%s175 + $0x10] sm:$0xff]
                %182 = vst [vmem:[%s176 + $0x10] sm:$0xff] %v181
                %v183 = vld [vmem:[%s175 + $0x18] sm:$0xff]
                %184 = vst [vmem:[%s176 + $0x18] sm:$0xff] %v183
                %v185 = vld [vmem:[%s175 + $0x80] sm:$0xff]
                %186 = vst [vmem:[%s176 + $0x20] sm:$0xff] %v185
                %v187 = vld [vmem:[%s175 + $0x88] sm:$0xff]
                %188 = vst [vmem:[%s176 + $0x28] sm:$0xff] %v187
                %v189 = vld [vmem:[%s175 + $0x90] sm:$0xff]
                %190 = vst [vmem:[%s176 + $0x30] sm:$0xff] %v189
                %v191 = vld [vmem:[%s175 + $0x98] sm:$0xff]
                %192 = vst [vmem:[%s176 + $0x38] sm:$0xff] %v191
              $region41: #{spatial_self_attention.5} parent=35 // loop_footer
                %s174 = sadd.s32 1, %s170
              $region42: #{spatial_self_attention.5} parent=35 // loop_footer_branch
                %169 = sbr.rel target = $region38
              $region43: #{spatial_self_attention.5} parent=35 // loop_exit
                _
            $region36: #{spatial_self_attention.5} parent=31 // pred_fallthru
              _
            // Predicated region
            $region44: #{spatial_self_attention.5} parent=31 // pred_check
              _
            $region45: #{spatial_self_attention.5} parent=31 // pred_check_branch
              %194 = sbr.rel target = $region47
            $region46: #{spatial_self_attention.5} parent=31 // pred_region
              _
            $region47: #{spatial_self_attention.5} parent=31 // pred_fallthru
              _
          $region32: #{spatial_self_attention.5} parent=27 // pred_fallthru
            _
          %195 = vnop
        $region28: #{spatial_self_attention.5} parent=23 // pred_fallthru
          _
        // Predicated region
        $region48: #{spatial_self_attention.5} parent=23 // pred_check
          %p196 = pneg %p98
        $region49: #{spatial_self_attention.5} parent=23 // pred_check_branch
          %198 = sbr.rel (%p196) target = $region51
        $region50: #{spatial_self_attention.5} parent=23 // pred_region
          %s199 = sand.u32 %s88, 1
          %s200 = sand.u32 %s88, 1
          %s201 = smul.addr %s200, 64
          %s202 = scalar_lea.vmem [#allocation3], %s201
          %s203 = smul.u32 4, %s10
          %s204 = smul.addr %s203, 8
          %s205 = scalar_lea.vmem %s3, %s204
          // Predicated region
          $region52: #{spatial_self_attention.5} parent=50 // pred_check
            _
          $region53: #{spatial_self_attention.5} parent=50 // pred_check_branch
            %207 = sbr.rel (0) target = $region55
          $region54: #{spatial_self_attention.5} parent=50 // pred_region
            // Predicated region
            $region56: #{spatial_self_attention.5} parent=54 // pred_check
              _
            $region57: #{spatial_self_attention.5} parent=54 // pred_check_branch
              %209 = sbr.rel (0) target = $region59
            $region58: #{spatial_self_attention.5} parent=54 // pred_region
              loop: start=0, step=1, limit=1
              $region60: #{spatial_self_attention.5} parent=58 // loop_pre_header
                _
              $region61: #{spatial_self_attention.5} parent=58 // loop_header
                %s211 = sphi 0, %s215
                %p212 = scmp.ge.s32.totalorder %s211, 1
                %s216 = sphi %s205, %s205
                %s217 = sphi %s202, %s202
              $region62: #{spatial_self_attention.5} parent=58 // loop_header_branch
                %214 = sbr.rel (%p212) target = $region66
              $region63: #{spatial_self_attention.5} parent=58 // loop_body
                %v218 = vld [vmem:[%s216] sm:$0xff]
                %219 = vst [vmem:[%s217] sm:$0xff] %v218
                %v220 = vld [vmem:[%s216 + $0x8] sm:$0xff]
                %221 = vst [vmem:[%s217 + $0x8] sm:$0xff] %v220
                %v222 = vld [vmem:[%s216 + $0x10] sm:$0xff]
                %223 = vst [vmem:[%s217 + $0x10] sm:$0xff] %v222
                %v224 = vld [vmem:[%s216 + $0x18] sm:$0xff]
                %225 = vst [vmem:[%s217 + $0x18] sm:$0xff] %v224
                %v226 = vld [vmem:[%s216 + $0x80] sm:$0xff]
                %227 = vst [vmem:[%s217 + $0x20] sm:$0xff] %v226
                %v228 = vld [vmem:[%s216 + $0x88] sm:$0xff]
                %229 = vst [vmem:[%s217 + $0x28] sm:$0xff] %v228
                %v230 = vld [vmem:[%s216 + $0x90] sm:$0xff]
                %231 = vst [vmem:[%s217 + $0x30] sm:$0xff] %v230
                %v232 = vld [vmem:[%s216 + $0x98] sm:$0xff]
                %233 = vst [vmem:[%s217 + $0x38] sm:$0xff] %v232
              $region64: #{spatial_self_attention.5} parent=58 // loop_footer
                %s215 = sadd.s32 1, %s211
              $region65: #{spatial_self_attention.5} parent=58 // loop_footer_branch
                %210 = sbr.rel target = $region61
              $region66: #{spatial_self_attention.5} parent=58 // loop_exit
                _
            $region59: #{spatial_self_attention.5} parent=54 // pred_fallthru
              _
            // Predicated region
            $region67: #{spatial_self_attention.5} parent=54 // pred_check
              _
            $region68: #{spatial_self_attention.5} parent=54 // pred_check_branch
              %235 = sbr.rel target = $region70
            $region69: #{spatial_self_attention.5} parent=54 // pred_region
              _
            $region70: #{spatial_self_attention.5} parent=54 // pred_fallthru
              _
          $region55: #{spatial_self_attention.5} parent=50 // pred_fallthru
            _
          %236 = vnop
        $region51: #{spatial_self_attention.5} parent=23 // pred_fallthru
          _
      $region24: #{spatial_self_attention.5} parent=5 // pred_fallthru
        _
      %p237 = scmp.le.s32.totalorder 1, %s10
      %p238 = scmp.lt.s32.totalorder %s10, 5
      %p239 = pnand %p237, %p238
      %p240 = pneg %p239
      // Predicated region
      $region71: #{spatial_self_attention.5} parent=5 // pred_check
        _
      $region72: #{spatial_self_attention.5} parent=5 // pred_check_branch
        %242 = sbr.rel (%p239) target = $region74
      $region73: #{spatial_self_attention.5} parent=5 // pred_region
        %s243 = ssub.s32 %s10, 1
        %s244 = sand.u32 %s23, 1
        %s245 = sand.u32 %s23, 1
        %s246 = smul.addr %s245, 64
        %s247 = scalar_lea.vmem [#allocation2], %s246
        // Predicated region
        $region75: #{spatial_self_attention.5} parent=73 // pred_check
          %p248 = pneg %p36
        $region76: #{spatial_self_attention.5} parent=73 // pred_check_branch
          %250 = sbr.rel (%p248) target = $region78
        $region77: #{spatial_self_attention.5} parent=73 // pred_region
          _
        $region78: #{spatial_self_attention.5} parent=73 // pred_fallthru
          _
        %s251 = sand.u32 %s91, 1
        %s252 = sand.u32 %s91, 1
        %s253 = smul.addr %s252, 64
        %s254 = scalar_lea.vmem [#allocation3], %s253
        // Predicated region
        $region79: #{spatial_self_attention.5} parent=73 // pred_check
          %p255 = pneg %p104
        $region80: #{spatial_self_attention.5} parent=73 // pred_check_branch
          %257 = sbr.rel (%p255) target = $region82
        $region81: #{spatial_self_attention.5} parent=73 // pred_region
          _
        $region82: #{spatial_self_attention.5} parent=73 // pred_fallthru
          _
        %s258 = sand.u32 %s23, 1
        %s259 = sand.u32 %s23, 1
        %s260 = smul.addr %s259, 64
        %s261 = scalar_lea.vmem [#allocation2], %s260
        %p262 = pneg %p36
        %p263 = pneg %p33
        %p264 = pneg %p57
        %p265 = pneg %p54
        %p266 = pneg %p78
        %p267 = pneg %p75
        %s268 = sand.u32 %s91, 1
        %s269 = sand.u32 %s91, 1
        %s270 = smul.addr %s269, 64
        %s271 = scalar_lea.vmem [#allocation3], %s270
        %p272 = pneg %p104
        %p273 = pneg %p101
        %p274 = pneg %p130
        %p275 = pneg %p127
        %s276 = sand.u32 %s117, 1
        %s277 = sand.u32 %s117, 1
        %s278 = smul.addr %s277, 64
        %s279 = scalar_lea.vmem [#allocation4], %s278
        %s280 = smul.u32 4, %s15
        %s281 = smul.u32 4, %s15
        %s282 = smul.u32 4, %s15
        %v284 = vld [vmem:[%s247] sm:$0xff]
        %v285 = vld [vmem:[%s247 + $0x8] sm:$0xff]
        %v286 = vld [vmem:[%s247 + $0x10] sm:$0xff]
        %v287 = vld [vmem:[%s247 + $0x18] sm:$0xff]
        %v288 = vld [vmem:[%s247 + $0x20] sm:$0xff]
        %v289 = vld [vmem:[%s247 + $0x28] sm:$0xff]
        %v290 = vld [vmem:[%s247 + $0x30] sm:$0xff]
        %v291 = vld [vmem:[%s247 + $0x38] sm:$0xff]
        %v292 = vpack.c.bf16 %v288, %v284
        %v293 = vpack.c.bf16 %v289, %v285
        %v294 = vpack.c.bf16 %v290, %v286
        %v295 = vpack.c.bf16 %v291, %v287
        %v296 = vld [vmem:[%s1] sm:$0xf]
        %v297 = vld [vmem:[%s1 + $0x4] sm:$0xf]
        %v298 = vld [vmem:[%s2] sm:$0xff]
        %v299 = vld [vmem:[%s2 + $0x8] sm:$0xff]
        %301 = vset.pattern.permute.xlu0 0
        %302 = vperm.xlu0 %301, %v298
        %v303 = vpop.permute.xlu0 %302
        %306 = vset.pattern.permute.xlu0 0
        %307 = vperm.xlu0 %306, %v299
        %v308 = vpop.permute.xlu0 %307
        %v312 = vunpack.c.l.b16 %v296
        %v313 = vunpack.c.l.b16 %v297
        %v314 = vpack.c.b16 %v313, %v312
        %vm315 = vcmask 130048
        %v317 = vsel %vm315, %v314, 0
        %319 = vmatprep.subr.bf16.mxu0 %v293
        %320 = vmatpush1.bf16.msra.mxu0 %v292
        %321 = vmatprep.subr.bf16.mxu0 0
        %322 = vmatpush1.bf16.msra.mxu0 0
        %323 = vmatprep.subr.bf16.mxu0 0
        %324 = vmatpush1.bf16.msra.mxu0 0
        %325 = vmatprep.subr.bf16.mxu0 0
        %326 = vmatpush1.bf16.msra.mxu0 0
        %327 = vmatprep.subr.bf16.mxu0 0
        %328 = vmatpush1.bf16.msra.mxu0 0
        %329 = vmatprep.subr.bf16.mxu0 0
        %330 = vmatpush1.bf16.msra.mxu0 0
        %331 = vmatprep.subr.bf16.mxu0 0
        %332 = vmatpush1.bf16.msra.mxu0 0
        %333 = vmatprep.subr.bf16.mxu0 0
        %334 = vmatpush1.bf16.msra.mxu0 0
        %335 = vmatprep.subr.bf16.mxu0 0
        %336 = vmatpush1.bf16.msra.mxu0 0
        %337 = vmatprep.subr.bf16.mxu0 0
        %338 = vmatpush1.bf16.msra.mxu0 0
        %339 = vmatprep.subr.bf16.mxu0 0
        %340 = vmatpush1.bf16.msra.mxu0 0
        %341 = vmatprep.subr.bf16.mxu0 0
        %342 = vmatpush1.bf16.msra.mxu0 0
        %343 = vmatprep.subr.bf16.mxu0 0
        %344 = vmatpush1.bf16.msra.mxu0 0
        %345 = vmatprep.subr.bf16.mxu0 0
        %346 = vmatpush1.bf16.msra.mxu0 0
        %347 = vmatprep.subr.bf16.mxu0 0
        %348 = vmatpush1.bf16.msra.mxu0 0
        %349 = vmatprep.subr.bf16.mxu0 0
        %350 = vmatpush1.bf16.msra.mxu0 0
        %351 = vmatprep.mubr.bf16.mxu0 0
        %352 = vmatmul.mubr.bf16.gmra.mrb[0].mxu0 %v317
        %v353 = vpop.f32.mrb[0].mxu0
        %v354 = vadd.f32 %v303, %v353
        %v355 = vpop.f32.mrb[0].mxu0
        %v356 = vadd.f32 %v303, %v355
        %v357 = vpop.f32.mrb[0].mxu0
        %v358 = vadd.f32 %v308, %v357
        %v359 = vpop.f32.mrb[0].mxu0
        %v360 = vadd.f32 %v308, %v359
        %361 = vdwg.mxu0
        %362 = vmatprep.subr.bf16.mxu0 %v295
        %363 = vmatpush1.bf16.msra.mxu0 %v294
        %364 = vmatprep.subr.bf16.mxu0 0
        %365 = vmatpush1.bf16.msra.mxu0 0
        %366 = vmatprep.subr.bf16.mxu0 0
        %367 = vmatpush1.bf16.msra.mxu0 0
        %368 = vmatprep.subr.bf16.mxu0 0
        %369 = vmatpush1.bf16.msra.mxu0 0
        %370 = vmatprep.subr.bf16.mxu0 0
        %371 = vmatpush1.bf16.msra.mxu0 0
        %372 = vmatprep.subr.bf16.mxu0 0
        %373 = vmatpush1.bf16.msra.mxu0 0
        %374 = vmatprep.subr.bf16.mxu0 0
        %375 = vmatpush1.bf16.msra.mxu0 0
        %376 = vmatprep.subr.bf16.mxu0 0
        %377 = vmatpush1.bf16.msra.mxu0 0
        %378 = vmatprep.subr.bf16.mxu0 0
        %379 = vmatpush1.bf16.msra.mxu0 0
        %380 = vmatprep.subr.bf16.mxu0 0
        %381 = vmatpush1.bf16.msra.mxu0 0
        %382 = vmatprep.subr.bf16.mxu0 0
        %383 = vmatpush1.bf16.msra.mxu0 0
        %384 = vmatprep.subr.bf16.mxu0 0
        %385 = vmatpush1.bf16.msra.mxu0 0
        %386 = vmatprep.subr.bf16.mxu0 0
        %387 = vmatpush1.bf16.msra.mxu0 0
        %388 = vmatprep.subr.bf16.mxu0 0
        %389 = vmatpush1.bf16.msra.mxu0 0
        %390 = vmatprep.subr.bf16.mxu0 0
        %391 = vmatpush1.bf16.msra.mxu0 0
        %392 = vmatprep.subr.bf16.mxu0 0
        %393 = vmatpush1.bf16.msra.mxu0 0
        %394 = vmatprep.mubr.bf16.mxu0 0
        %395 = vmatmul.mubr.bf16.gmra.mrb[0].mxu0 %v317
        %v396 = vpop.f32.mrb[0].mxu0
        %v397 = vadd.f32 %v303, %v396
        %v398 = vpop.f32.mrb[0].mxu0
        %v399 = vadd.f32 %v303, %v398
        %v400 = vpop.f32.mrb[0].mxu0
        %v401 = vadd.f32 %v308, %v400
        %v402 = vpop.f32.mrb[0].mxu0
        %v403 = vadd.f32 %v308, %v402
        %404 = vdwg.mxu0
        %v405 = vld [vmem:[%s254] sm:$0xff]
        %v406 = vld [vmem:[%s254 + $0x8] sm:$0xff]
        %v407 = vld [vmem:[%s254 + $0x10] sm:$0xff]
        %v408 = vld [vmem:[%s254 + $0x18] sm:$0xff]
        %v409 = vld [vmem:[%s254 + $0x20] sm:$0xff]
        %v410 = vld [vmem:[%s254 + $0x28] sm:$0xff]
        %v411 = vld [vmem:[%s254 + $0x30] sm:$0xff]
        %v412 = vld [vmem:[%s254 + $0x38] sm:$0xff]
        %v413 = vadd.f32 %v354, %v405
        %v414 = vadd.f32 %v356, %v406
        %v415 = vadd.f32 %v397, %v407
        %v416 = vadd.f32 %v399, %v408
        %v417 = vadd.f32 %v358, %v409
        %v418 = vadd.f32 %v360, %v410
        %v419 = vadd.f32 %v401, %v411
        %v420 = vadd.f32 %v403, %v412
        %421 = vst [vmem:[%s279] sm:$0xff] %v413
        %422 = vst [vmem:[%s279 + $0x8] sm:$0xff] %v414
        %423 = vst [vmem:[%s279 + $0x10] sm:$0xff] %v415
        %424 = vst [vmem:[%s279 + $0x18] sm:$0xff] %v416
        %425 = vst [vmem:[%s279 + $0x20] sm:$0xff] %v417
        %426 = vst [vmem:[%s279 + $0x28] sm:$0xff] %v418
        %427 = vst [vmem:[%s279 + $0x30] sm:$0xff] %v419
        %428 = vst [vmem:[%s279 + $0x38] sm:$0xff] %v420
        %s429 = sand.u32 %s117, 1
        %s430 = sand.u32 %s117, 1
        %s431 = smul.addr %s430, 64
        %s432 = scalar_lea.vmem [#allocation4], %s431
        // Predicated region
        $region83: #{spatial_self_attention.5} parent=73 // pred_check
          %p433 = pneg %p127
        $region84: #{spatial_self_attention.5} parent=73 // pred_check_branch
          %435 = sbr.rel (%p433) target = $region86
        $region85: #{spatial_self_attention.5} parent=73 // pred_region
          %s436 = smul.u32 4, %s15
          %s437 = smul.addr %s436, 8
          %s438 = scalar_lea.vmem %s4, %s437
          // Predicated region
          $region87: #{spatial_self_attention.5} parent=85 // pred_check
            _
          $region88: #{spatial_self_attention.5} parent=85 // pred_check_branch
            %440 = sbr.rel (0) target = $region90
          $region89: #{spatial_self_attention.5} parent=85 // pred_region
            // Predicated region
            $region91: #{spatial_self_attention.5} parent=89 // pred_check
              _
            $region92: #{spatial_self_attention.5} parent=89 // pred_check_branch
              %442 = sbr.rel (0) target = $region94
            $region93: #{spatial_self_attention.5} parent=89 // pred_region
              loop: start=0, step=1, limit=1
              $region95: #{spatial_self_attention.5} parent=93 // loop_pre_header
                _
              $region96: #{spatial_self_attention.5} parent=93 // loop_header
                %s444 = sphi 0, %s448
                %p445 = scmp.ge.s32.totalorder %s444, 1
                %s449 = sphi %s432, %s432
                %s450 = sphi %s438, %s438
              $region97: #{spatial_self_attention.5} parent=93 // loop_header_branch
                %447 = sbr.rel (%p445) target = $region101
              $region98: #{spatial_self_attention.5} parent=93 // loop_body
                %v451 = vld [vmem:[%s449] sm:$0xff]
                %452 = vst [vmem:[%s450] sm:$0xff] %v451
                %v453 = vld [vmem:[%s449 + $0x8] sm:$0xff]
                %454 = vst [vmem:[%s450 + $0x8] sm:$0xff] %v453
                %v455 = vld [vmem:[%s449 + $0x10] sm:$0xff]
                %456 = vst [vmem:[%s450 + $0x10] sm:$0xff] %v455
                %v457 = vld [vmem:[%s449 + $0x18] sm:$0xff]
                %458 = vst [vmem:[%s450 + $0x18] sm:$0xff] %v457
                %v459 = vld [vmem:[%s449 + $0x20] sm:$0xff]
                %460 = vst [vmem:[%s450 + $0x80] sm:$0xff] %v459
                %v461 = vld [vmem:[%s449 + $0x28] sm:$0xff]
                %462 = vst [vmem:[%s450 + $0x88] sm:$0xff] %v461
                %v463 = vld [vmem:[%s449 + $0x30] sm:$0xff]
                %464 = vst [vmem:[%s450 + $0x90] sm:$0xff] %v463
                %v465 = vld [vmem:[%s449 + $0x38] sm:$0xff]
                %466 = vst [vmem:[%s450 + $0x98] sm:$0xff] %v465
              $region99: #{spatial_self_attention.5} parent=93 // loop_footer
                %s448 = sadd.s32 1, %s444
              $region100: #{spatial_self_attention.5} parent=93 // loop_footer_branch
                %443 = sbr.rel target = $region96
              $region101: #{spatial_self_attention.5} parent=93 // loop_exit
                _
            $region94: #{spatial_self_attention.5} parent=89 // pred_fallthru
              _
            // Predicated region
            $region102: #{spatial_self_attention.5} parent=89 // pred_check
              _
            $region103: #{spatial_self_attention.5} parent=89 // pred_check_branch
              %468 = sbr.rel target = $region105
            $region104: #{spatial_self_attention.5} parent=89 // pred_region
              _
            $region105: #{spatial_self_attention.5} parent=89 // pred_fallthru
              _
          $region90: #{spatial_self_attention.5} parent=85 // pred_fallthru
            _
          %469 = vnop
        $region86: #{spatial_self_attention.5} parent=73 // pred_fallthru
          _
      $region74: #{spatial_self_attention.5} parent=5 // pred_fallthru
        _
      %p470 = scmp.le.s32.totalorder 2, %s10
      // Predicated region
      $region106: #{spatial_self_attention.5} parent=5 // pred_check
        %p471 = pneg %p470
      $region107: #{spatial_self_attention.5} parent=5 // pred_check_branch
        %473 = sbr.rel (%p471) target = $region109
      $region108: #{spatial_self_attention.5} parent=5 // pred_region
        %s474 = ssub.s32 %s10, 2
        // Predicated region
        $region110: #{spatial_self_attention.5} parent=108 // pred_check
          %p475 = pneg %p133
        $region111: #{spatial_self_attention.5} parent=108 // pred_check_branch
          %477 = sbr.rel (%p475) target = $region113
        $region112: #{spatial_self_attention.5} parent=108 // pred_region
          %s478 = sand.u32 %s118, 1
          %s479 = sand.u32 %s118, 1
          %s480 = smul.addr %s479, 64
          %s481 = scalar_lea.vmem [#allocation4], %s480
        $region113: #{spatial_self_attention.5} parent=108 // pred_fallthru
          _
      $region109: #{spatial_self_attention.5} parent=5 // pred_fallthru
        _
    $region6: #{spatial_self_attention.5} parent=1 // loop_footer
      %s14 = sadd.s32 1, %s10
    $region7: #{spatial_self_attention.5} parent=1 // loop_footer_branch
      %9 = sbr.rel target = $region3
    $region8: #{spatial_self_attention.5} parent=1 // loop_exit
      _

// kernel: spatial_self_attention.4
$region0: #{spatial_self_attention.4}
  #allocation0 [shape = 'u32[]', space=smem, size = 0x4, offset = 0x4, fixed_abs, tag = 'smem constant byte address 0x4 - core index']
  #allocation1 [shape = 'u32[144,128]{1,0:T(1,128)}', space=vmem, size = 0x12000, scoped, tag = 'internal scratch']
  %s0 = inlined_call_operand.vmem [shape: f32[2,8,2048], index: 0, kind: input, shape index: {}]
  %s1 = inlined_call_operand.vmem [shape: f32[2,8,2048], index: 1, kind: input, shape index: {}]
  %s2 = inlined_call_operand.vmem [shape: f32[2,8,2048], index: 2, kind: input, shape index: {}]
  %s3 = inlined_call_operand.vmem [shape: f32[2,8,2048], index: 3, kind: output, shape index: {}]
  %s4 = sld [smem:[#allocation0]]
  $region133: #{spatial_self_attention.4} parent=0
    _
  %s6 = ssub.s32 1, %s4
  %s7 = scalar_select 0, %s6, %s4
  $region1: #{spatial_self_attention.4} parent=0
    #allocation2 [shape = 'u8[65536]{0}', space=vmem, size = 0x10000, scoped, tag = 'input window, operand 0']
    #allocation3 [shape = 'u8[65536]{0}', space=vmem, size = 0x10000, scoped, tag = 'input window, operand 1']
    #allocation4 [shape = 'u8[65536]{0}', space=vmem, size = 0x10000, scoped, tag = 'input window, operand 2']
    #allocation5 [shape = 'u8[65536]{0}', space=vmem, size = 0x10000, scoped, tag = 'output window, operand 0']
    loop: start=0, step=1, limit=6
    $region2: #{spatial_self_attention.4} parent=1 // loop_pre_header
      _
    $region3: #{spatial_self_attention.4} parent=1 // loop_header
      %s9 = sphi 0, %s13
      %p10 = scmp.ge.s32.totalorder %s9, 6
      %s19 = sphi 0, %s21
      %s22 = sphi 0, %s19
      %s23 = sphi 0, %s22
      %s39 = sphi 0, %s23
      %s45 = sphi 0, %s47
      %s48 = sphi 0, %s45
      %s49 = sphi 0, %s48
      %s65 = sphi 0, %s49
      %s71 = sphi 0, %s73
      %s74 = sphi 0, %s71
      %s75 = sphi 0, %s74
      %s91 = sphi 0, %s75
      %s97 = sphi 0, %s99
      %s100 = sphi 0, %s97
      %s101 = sphi 0, %s100
      %s117 = sphi 0, %s101
    $region4: #{spatial_self_attention.4} parent=1 // loop_header_branch
      %12 = sbr.rel (%p10) target = $region8
    $region5: #{spatial_self_attention.4} parent=1 // loop_body
      %s14 = ssub.s32 %s9, 1
      %s15 = ssub.s32 %s9, 2
      %s16 = sadd.s32 %s9, 1
      %s17 = ssub.s32 %s9, %s16
      %p18 = scmp.eq.s32.totalorder %s17, 0
      %s20 = sadd.s32 %s19, 1
      %s21 = scalar_select %p18, %s19, %s20
      %p24 = pneg %p18
      %p25 = scmp.eq.s32.totalorder %s9, 3
      %p26 = por %p24, %p25
      %p27 = scmp.ne.s32.totalorder %s19, %s22
      %p28 = scmp.eq.s32.totalorder %s9, 0
      %p29 = por %p27, %p28
      %p30 = scmp.ne.s32.totalorder %s19, %s22
      %p31 = scmp.eq.s32.totalorder %s14, 3
      %p32 = por %p30, %p31
      %p33 = scmp.ne.s32.totalorder %s22, %s23
      %p34 = scmp.eq.s32.totalorder %s14, 0
      %p35 = por %p33, %p34
      %p36 = scmp.ne.s32.totalorder %s22, %s23
      %p37 = scmp.eq.s32.totalorder %s15, 3
      %p38 = por %p36, %p37
      %p40 = scmp.ne.s32.totalorder %s23, %s39
      %p41 = scmp.eq.s32.totalorder %s15, 0
      %p42 = por %p40, %p41
      %s43 = ssub.s32 %s9, %s16
      %p44 = scmp.eq.s32.totalorder %s43, 0
      %s46 = sadd.s32 %s45, 1
      %s47 = scalar_select %p44, %s45, %s46
      %p50 = pneg %p44
      %p51 = scmp.eq.s32.totalorder %s9, 3
      %p52 = por %p50, %p51
      %p53 = scmp.ne.s32.totalorder %s45, %s48
      %p54 = scmp.eq.s32.totalorder %s9, 0
      %p55 = por %p53, %p54
      %p56 = scmp.ne.s32.totalorder %s45, %s48
      %p57 = scmp.eq.s32.totalorder %s14, 3
      %p58 = por %p56, %p57
      %p59 = scmp.ne.s32.totalorder %s48, %s49
      %p60 = scmp.eq.s32.totalorder %s14, 0
      %p61 = por %p59, %p60
      %p62 = scmp.ne.s32.totalorder %s48, %s49
      %p63 = scmp.eq.s32.totalorder %s15, 3
      %p64 = por %p62, %p63
      %p66 = scmp.ne.s32.totalorder %s49, %s65
      %p67 = scmp.eq.s32.totalorder %s15, 0
      %p68 = por %p66, %p67
      %s69 = ssub.s32 %s9, %s16
      %p70 = scmp.eq.s32.totalorder %s69, 0
      %s72 = sadd.s32 %s71, 1
      %s73 = scalar_select %p70, %s71, %s72
      %p76 = pneg %p70
      %p77 = scmp.eq.s32.totalorder %s9, 3
      %p78 = por %p76, %p77
      %p79 = scmp.ne.s32.totalorder %s71, %s74
      %p80 = scmp.eq.s32.totalorder %s9, 0
      %p81 = por %p79, %p80
      %p82 = scmp.ne.s32.totalorder %s71, %s74
      %p83 = scmp.eq.s32.totalorder %s14, 3
      %p84 = por %p82, %p83
      %p85 = scmp.ne.s32.totalorder %s74, %s75
      %p86 = scmp.eq.s32.totalorder %s14, 0
      %p87 = por %p85, %p86
      %p88 = scmp.ne.s32.totalorder %s74, %s75
      %p89 = scmp.eq.s32.totalorder %s15, 3
      %p90 = por %p88, %p89
      %p92 = scmp.ne.s32.totalorder %s75, %s91
      %p93 = scmp.eq.s32.totalorder %s15, 0
      %p94 = por %p92, %p93
      %s95 = ssub.s32 %s9, %s16
      %p96 = scmp.eq.s32.totalorder %s95, 0
      %s98 = sadd.s32 %s97, 1
      %s99 = scalar_select %p96, %s97, %s98
      %p102 = pneg %p96
      %p103 = scmp.eq.s32.totalorder %s9, 3
      %p104 = por %p102, %p103
      %p105 = scmp.ne.s32.totalorder %s97, %s100
      %p106 = scmp.eq.s32.totalorder %s9, 0
      %p107 = por %p105, %p106
      %p108 = scmp.ne.s32.totalorder %s97, %s100
      %p109 = scmp.eq.s32.totalorder %s14, 3
      %p110 = por %p108, %p109
      %p111 = scmp.ne.s32.totalorder %s100, %s101
      %p112 = scmp.eq.s32.totalorder %s14, 0
      %p113 = por %p111, %p112
      %p114 = scmp.ne.s32.totalorder %s100, %s101
      %p115 = scmp.eq.s32.totalorder %s15, 3
      %p116 = por %p114, %p115
      %p118 = scmp.ne.s32.totalorder %s101, %s117
      %p119 = scmp.eq.s32.totalorder %s15, 0
      %p120 = por %p118, %p119
      %p121 = scmp.le.s32.totalorder 1, %s9
      %p122 = scmp.lt.s32.totalorder %s9, 5
      %p123 = pnand %p121, %p122
      %p124 = pneg %p123
      // Predicated region
      $region9: #{spatial_self_attention.4} parent=5 // pred_check
        _
      $region10: #{spatial_self_attention.4} parent=5 // pred_check_branch
        %126 = sbr.rel (%p123) target = $region12
      $region11: #{spatial_self_attention.4} parent=5 // pred_region
        %s127 = ssub.s32 %s9, 1
      $region12: #{spatial_self_attention.4} parent=5 // pred_fallthru
        _
      %p128 = scmp.lt.s32.totalorder %s9, 4
      // Predicated region
      $region13: #{spatial_self_attention.4} parent=5 // pred_check
        %p129 = pneg %p128
      $region14: #{spatial_self_attention.4} parent=5 // pred_check_branch
        %131 = sbr.rel (%p129) target = $region16
      $region15: #{spatial_self_attention.4} parent=5 // pred_region
        // Predicated region
        $region17: #{spatial_self_attention.4} parent=15 // pred_check
          %p132 = pneg %p29
        $region18: #{spatial_self_attention.4} parent=15 // pred_check_branch
          %134 = sbr.rel (%p132) target = $region20
        $region19: #{spatial_self_attention.4} parent=15 // pred_region
          %s135 = sand.u32 %s19, 1
          %s136 = sand.u32 %s19, 1
          %s137 = smul.addr %s136, 64
          %s138 = scalar_lea.vmem [#allocation2], %s137
          %s139 = smul.u32 4, %s9
          %s140 = smul.addr %s139, 8
          %s141 = scalar_lea.vmem %s0, %s140
          // Predicated region
          $region21: #{spatial_self_attention.4} parent=19 // pred_check
            _
          $region22: #{spatial_self_attention.4} parent=19 // pred_check_branch
            %143 = sbr.rel (0) target = $region24
          $region23: #{spatial_self_attention.4} parent=19 // pred_region
            // Predicated region
            $region25: #{spatial_self_attention.4} parent=23 // pred_check
              _
            $region26: #{spatial_self_attention.4} parent=23 // pred_check_branch
              %145 = sbr.rel (0) target = $region28
            $region27: #{spatial_self_attention.4} parent=23 // pred_region
              loop: start=0, step=1, limit=1
              $region29: #{spatial_self_attention.4} parent=27 // loop_pre_header
                _
              $region30: #{spatial_self_attention.4} parent=27 // loop_header
                %s147 = sphi 0, %s151
                %p148 = scmp.ge.s32.totalorder %s147, 1
                %s152 = sphi %s141, %s141
                %s153 = sphi %s138, %s138
              $region31: #{spatial_self_attention.4} parent=27 // loop_header_branch
                %150 = sbr.rel (%p148) target = $region35
              $region32: #{spatial_self_attention.4} parent=27 // loop_body
                %v154 = vld [vmem:[%s152] sm:$0xff]
                %155 = vst [vmem:[%s153] sm:$0xff] %v154
                %v156 = vld [vmem:[%s152 + $0x8] sm:$0xff]
                %157 = vst [vmem:[%s153 + $0x8] sm:$0xff] %v156
                %v158 = vld [vmem:[%s152 + $0x10] sm:$0xff]
                %159 = vst [vmem:[%s153 + $0x10] sm:$0xff] %v158
                %v160 = vld [vmem:[%s152 + $0x18] sm:$0xff]
                %161 = vst [vmem:[%s153 + $0x18] sm:$0xff] %v160
                %v162 = vld [vmem:[%s152 + $0x80] sm:$0xff]
                %163 = vst [vmem:[%s153 + $0x20] sm:$0xff] %v162
                %v164 = vld [vmem:[%s152 + $0x88] sm:$0xff]
                %165 = vst [vmem:[%s153 + $0x28] sm:$0xff] %v164
                %v166 = vld [vmem:[%s152 + $0x90] sm:$0xff]
                %167 = vst [vmem:[%s153 + $0x30] sm:$0xff] %v166
                %v168 = vld [vmem:[%s152 + $0x98] sm:$0xff]
                %169 = vst [vmem:[%s153 + $0x38] sm:$0xff] %v168
              $region33: #{spatial_self_attention.4} parent=27 // loop_footer
                %s151 = sadd.s32 1, %s147
              $region34: #{spatial_self_attention.4} parent=27 // loop_footer_branch
                %146 = sbr.rel target = $region30
              $region35: #{spatial_self_attention.4} parent=27 // loop_exit
                _
            $region28: #{spatial_self_attention.4} parent=23 // pred_fallthru
              _
            // Predicated region
            $region36: #{spatial_self_attention.4} parent=23 // pred_check
              _
            $region37: #{spatial_self_attention.4} parent=23 // pred_check_branch
              %171 = sbr.rel target = $region39
            $region38: #{spatial_self_attention.4} parent=23 // pred_region
              _
            $region39: #{spatial_self_attention.4} parent=23 // pred_fallthru
              _
          $region24: #{spatial_self_attention.4} parent=19 // pred_fallthru
            _
          %172 = vnop
        $region20: #{spatial_self_attention.4} parent=15 // pred_fallthru
          _
        // Predicated region
        $region40: #{spatial_self_attention.4} parent=15 // pred_check
          %p173 = pneg %p55
        $region41: #{spatial_self_attention.4} parent=15 // pred_check_branch
          %175 = sbr.rel (%p173) target = $region43
        $region42: #{spatial_self_attention.4} parent=15 // pred_region
          %s176 = sand.u32 %s45, 1
          %s177 = sand.u32 %s45, 1
          %s178 = smul.addr %s177, 64
          %s179 = scalar_lea.vmem [#allocation3], %s178
          %s180 = smul.u32 4, %s9
          %s181 = smul.addr %s180, 8
          %s182 = scalar_lea.vmem %s1, %s181
          // Predicated region
          $region44: #{spatial_self_attention.4} parent=42 // pred_check
            _
          $region45: #{spatial_self_attention.4} parent=42 // pred_check_branch
            %184 = sbr.rel (0) target = $region47
          $region46: #{spatial_self_attention.4} parent=42 // pred_region
            // Predicated region
            $region48: #{spatial_self_attention.4} parent=46 // pred_check
              _
            $region49: #{spatial_self_attention.4} parent=46 // pred_check_branch
              %186 = sbr.rel (0) target = $region51
            $region50: #{spatial_self_attention.4} parent=46 // pred_region
              loop: start=0, step=1, limit=1
              $region52: #{spatial_self_attention.4} parent=50 // loop_pre_header
                _
              $region53: #{spatial_self_attention.4} parent=50 // loop_header
                %s188 = sphi 0, %s192
                %p189 = scmp.ge.s32.totalorder %s188, 1
                %s193 = sphi %s182, %s182
                %s194 = sphi %s179, %s179
              $region54: #{spatial_self_attention.4} parent=50 // loop_header_branch
                %191 = sbr.rel (%p189) target = $region58
              $region55: #{spatial_self_attention.4} parent=50 // loop_body
                %v195 = vld [vmem:[%s193] sm:$0xff]
                %196 = vst [vmem:[%s194] sm:$0xff] %v195
                %v197 = vld [vmem:[%s193 + $0x8] sm:$0xff]
                %198 = vst [vmem:[%s194 + $0x8] sm:$0xff] %v197
                %v199 = vld [vmem:[%s193 + $0x10] sm:$0xff]
                %200 = vst [vmem:[%s194 + $0x10] sm:$0xff] %v199
                %v201 = vld [vmem:[%s193 + $0x18] sm:$0xff]
                %202 = vst [vmem:[%s194 + $0x18] sm:$0xff] %v201
                %v203 = vld [vmem:[%s193 + $0x80] sm:$0xff]
                %204 = vst [vmem:[%s194 + $0x20] sm:$0xff] %v203
                %v205 = vld [vmem:[%s193 + $0x88] sm:$0xff]
                %206 = vst [vmem:[%s194 + $0x28] sm:$0xff] %v205
                %v207 = vld [vmem:[%s193 + $0x90] sm:$0xff]
                %208 = vst [vmem:[%s194 + $0x30] sm:$0xff] %v207
                %v209 = vld [vmem:[%s193 + $0x98] sm:$0xff]
                %210 = vst [vmem:[%s194 + $0x38] sm:$0xff] %v209
              $region56: #{spatial_self_attention.4} parent=50 // loop_footer
                %s192 = sadd.s32 1, %s188
              $region57: #{spatial_self_attention.4} parent=50 // loop_footer_branch
                %187 = sbr.rel target = $region53
              $region58: #{spatial_self_attention.4} parent=50 // loop_exit
                _
            $region51: #{spatial_self_attention.4} parent=46 // pred_fallthru
              _
            // Predicated region
            $region59: #{spatial_self_attention.4} parent=46 // pred_check
              _
            $region60: #{spatial_self_attention.4} parent=46 // pred_check_branch
              %212 = sbr.rel target = $region62
            $region61: #{spatial_self_attention.4} parent=46 // pred_region
              _
            $region62: #{spatial_self_attention.4} parent=46 // pred_fallthru
              _
          $region47: #{spatial_self_attention.4} parent=42 // pred_fallthru
            _
          %213 = vnop
        $region43: #{spatial_self_attention.4} parent=15 // pred_fallthru
          _
        // Predicated region
        $region63: #{spatial_self_attention.4} parent=15 // pred_check
          %p214 = pneg %p81
        $region64: #{spatial_self_attention.4} parent=15 // pred_check_branch
          %216 = sbr.rel (%p214) target = $region66
        $region65: #{spatial_self_attention.4} parent=15 // pred_region
          %s217 = sand.u32 %s71, 1
          %s218 = sand.u32 %s71, 1
          %s219 = smul.addr %s218, 64
          %s220 = scalar_lea.vmem [#allocation4], %s219
          %s221 = smul.u32 4, %s9
          %s222 = smul.addr %s221, 8
          %s223 = scalar_lea.vmem %s2, %s222
          // Predicated region
          $region67: #{spatial_self_attention.4} parent=65 // pred_check
            _
          $region68: #{spatial_self_attention.4} parent=65 // pred_check_branch
            %225 = sbr.rel (0) target = $region70
          $region69: #{spatial_self_attention.4} parent=65 // pred_region
            // Predicated region
            $region71: #{spatial_self_attention.4} parent=69 // pred_check
              _
            $region72: #{spatial_self_attention.4} parent=69 // pred_check_branch
              %227 = sbr.rel (0) target = $region74
            $region73: #{spatial_self_attention.4} parent=69 // pred_region
              loop: start=0, step=1, limit=1
              $region75: #{spatial_self_attention.4} parent=73 // loop_pre_header
                _
              $region76: #{spatial_self_attention.4} parent=73 // loop_header
                %s229 = sphi 0, %s233
                %p230 = scmp.ge.s32.totalorder %s229, 1
                %s234 = sphi %s223, %s223
                %s235 = sphi %s220, %s220
              $region77: #{spatial_self_attention.4} parent=73 // loop_header_branch
                %232 = sbr.rel (%p230) target = $region81
              $region78: #{spatial_self_attention.4} parent=73 // loop_body
                %v236 = vld [vmem:[%s234] sm:$0xff]
                %237 = vst [vmem:[%s235] sm:$0xff] %v236
                %v238 = vld [vmem:[%s234 + $0x8] sm:$0xff]
                %239 = vst [vmem:[%s235 + $0x8] sm:$0xff] %v238
                %v240 = vld [vmem:[%s234 + $0x10] sm:$0xff]
                %241 = vst [vmem:[%s235 + $0x10] sm:$0xff] %v240
                %v242 = vld [vmem:[%s234 + $0x18] sm:$0xff]
                %243 = vst [vmem:[%s235 + $0x18] sm:$0xff] %v242
                %v244 = vld [vmem:[%s234 + $0x80] sm:$0xff]
                %245 = vst [vmem:[%s235 + $0x20] sm:$0xff] %v244
                %v246 = vld [vmem:[%s234 + $0x88] sm:$0xff]
                %247 = vst [vmem:[%s235 + $0x28] sm:$0xff] %v246
                %v248 = vld [vmem:[%s234 + $0x90] sm:$0xff]
                %249 = vst [vmem:[%s235 + $0x30] sm:$0xff] %v248
                %v250 = vld [vmem:[%s234 + $0x98] sm:$0xff]
                %251 = vst [vmem:[%s235 + $0x38] sm:$0xff] %v250
              $region79: #{spatial_self_attention.4} parent=73 // loop_footer
                %s233 = sadd.s32 1, %s229
              $region80: #{spatial_self_attention.4} parent=73 // loop_footer_branch
                %228 = sbr.rel target = $region76
              $region81: #{spatial_self_attention.4} parent=73 // loop_exit
                _
            $region74: #{spatial_self_attention.4} parent=69 // pred_fallthru
              _
            // Predicated region
            $region82: #{spatial_self_attention.4} parent=69 // pred_check
              _
            $region83: #{spatial_self_attention.4} parent=69 // pred_check_branch
              %253 = sbr.rel target = $region85
            $region84: #{spatial_self_attention.4} parent=69 // pred_region
              _
            $region85: #{spatial_self_attention.4} parent=69 // pred_fallthru
              _
          $region70: #{spatial_self_attention.4} parent=65 // pred_fallthru
            _
          %254 = vnop
        $region66: #{spatial_self_attention.4} parent=15 // pred_fallthru
          _
      $region16: #{spatial_self_attention.4} parent=5 // pred_fallthru
        _
      %p255 = scmp.le.s32.totalorder 1, %s9
      %p256 = scmp.lt.s32.totalorder %s9, 5
      %p257 = pnand %p255, %p256
      %p258 = pneg %p257
      // Predicated region
      $region86: #{spatial_self_attention.4} parent=5 // pred_check
        _
      $region87: #{spatial_self_attention.4} parent=5 // pred_check_branch
        %260 = sbr.rel (%p257) target = $region89
      $region88: #{spatial_self_attention.4} parent=5 // pred_region
        %s261 = ssub.s32 %s9, 1
        %s262 = sand.u32 %s22, 1
        %s263 = sand.u32 %s22, 1
        %s264 = smul.addr %s263, 64
        %s265 = scalar_lea.vmem [#allocation2], %s264
        // Predicated region
        $region90: #{spatial_self_attention.4} parent=88 // pred_check
          %p266 = pneg %p35
        $region91: #{spatial_self_attention.4} parent=88 // pred_check_branch
          %268 = sbr.rel (%p266) target = $region93
        $region92: #{spatial_self_attention.4} parent=88 // pred_region
          _
        $region93: #{spatial_self_attention.4} parent=88 // pred_fallthru
          _
        %s269 = sand.u32 %s48, 1
        %s270 = sand.u32 %s48, 1
        %s271 = smul.addr %s270, 64
        %s272 = scalar_lea.vmem [#allocation3], %s271
        // Predicated region
        $region94: #{spatial_self_attention.4} parent=88 // pred_check
          %p273 = pneg %p61
        $region95: #{spatial_self_attention.4} parent=88 // pred_check_branch
          %275 = sbr.rel (%p273) target = $region97
        $region96: #{spatial_self_attention.4} parent=88 // pred_region
          _
        $region97: #{spatial_self_attention.4} parent=88 // pred_fallthru
          _
        %s276 = sand.u32 %s74, 1
        %s277 = sand.u32 %s74, 1
        %s278 = smul.addr %s277, 64
        %s279 = scalar_lea.vmem [#allocation4], %s278
        // Predicated region
        $region98: #{spatial_self_attention.4} parent=88 // pred_check
          %p280 = pneg %p87
        $region99: #{spatial_self_attention.4} parent=88 // pred_check_branch
          %282 = sbr.rel (%p280) target = $region101
        $region100: #{spatial_self_attention.4} parent=88 // pred_region
          _
        $region101: #{spatial_self_attention.4} parent=88 // pred_fallthru
          _
        %s283 = sand.u32 %s22, 1
        %s284 = sand.u32 %s22, 1
        %s285 = smul.addr %s284, 64
        %s286 = scalar_lea.vmem [#allocation2], %s285
        %p287 = pneg %p35
        %p288 = pneg %p32
        %s289 = sand.u32 %s48, 1
        %s290 = sand.u32 %s48, 1
        %s291 = smul.addr %s290, 64
        %s292 = scalar_lea.vmem [#allocation3], %s291
        %p293 = pneg %p61
        %p294 = pneg %p58
        %s295 = sand.u32 %s74, 1
        %s296 = sand.u32 %s74, 1
        %s297 = smul.addr %s296, 64
        %s298 = scalar_lea.vmem [#allocation4], %s297
        %p299 = pneg %p87
        %p300 = pneg %p84
        %p301 = pneg %p113
        %p302 = pneg %p110
        %s303 = sand.u32 %s100, 1
        %s304 = sand.u32 %s100, 1
        %s305 = smul.addr %s304, 64
        %s306 = scalar_lea.vmem [#allocation5], %s305
        %s307 = smul.u32 4, %s14
        %s308 = smul.u32 4, %s14
        %s309 = smul.u32 4, %s14
        %s310 = smul.u32 4, %s14
        %v311 = vld [vmem:[%s265] sm:$0xff]
        %v312 = vld [vmem:[%s265 + $0x8] sm:$0xff]
        %v313 = vld [vmem:[%s265 + $0x10] sm:$0xff]
        %v314 = vld [vmem:[%s265 + $0x18] sm:$0xff]
        %v315 = vld [vmem:[%s265 + $0x20] sm:$0xff]
        %v316 = vld [vmem:[%s265 + $0x28] sm:$0xff]
        %v317 = vld [vmem:[%s265 + $0x30] sm:$0xff]
        %v318 = vld [vmem:[%s265 + $0x38] sm:$0xff]
        %v319 = vld [vmem:[%s272] sm:$0xff]
        %v320 = vld [vmem:[%s272 + $0x8] sm:$0xff]
        %v321 = vld [vmem:[%s272 + $0x10] sm:$0xff]
        %v322 = vld [vmem:[%s272 + $0x18] sm:$0xff]
        %v323 = vld [vmem:[%s272 + $0x20] sm:$0xff]
        %v324 = vld [vmem:[%s272 + $0x28] sm:$0xff]
        %v325 = vld [vmem:[%s272 + $0x30] sm:$0xff]
        %v326 = vld [vmem:[%s272 + $0x38] sm:$0xff]
        %v327 = vld [vmem:[%s279] sm:$0xff]
        %v328 = vld [vmem:[%s279 + $0x8] sm:$0xff]
        %v329 = vld [vmem:[%s279 + $0x10] sm:$0xff]
        %v330 = vld [vmem:[%s279 + $0x18] sm:$0xff]
        %v331 = vld [vmem:[%s279 + $0x20] sm:$0xff]
        %v332 = vld [vmem:[%s279 + $0x28] sm:$0xff]
        %v333 = vld [vmem:[%s279 + $0x30] sm:$0xff]
        %v334 = vld [vmem:[%s279 + $0x38] sm:$0xff]
        %v339 = vcombine.low %v311, %v312
        %v340 = vcombine.high %v311, %v312
        %v341 = vcombine.low %v313, %v314
        %v342 = vcombine.high %v313, %v314
        %v344 = vunpack.c.l.s4 1966171168
        %v345 = vunpack.c.0.s8 %v344
        %v346 = vlaneseq
        %v347 = vshrl.u32 %v346, 7
        %v348 = vsub.s32 %v345, %v347
        %v349 = vrot.slane %v339, %v348
        %v351 = vunpack.c.l.s4 1966171168
        %v352 = vunpack.c.0.s8 %v351
        %v353 = vlaneseq
        %v354 = vshrl.u32 %v353, 7
        %v355 = vsub.s32 %v352, %v354
        %v356 = vrot.slane %v340, %v355
        %v358 = vunpack.c.l.s4 1966171168
        %v359 = vunpack.c.0.s8 %v358
        %v360 = vlaneseq
        %v361 = vshrl.u32 %v360, 7
        %v362 = vsub.s32 %v359, %v361
        %v363 = vrot.slane %v341, %v362
        %v365 = vunpack.c.l.s4 1966171168
        %v366 = vunpack.c.0.s8 %v365
        %v367 = vlaneseq
        %v368 = vshrl.u32 %v367, 7
        %v369 = vsub.s32 %v366, %v368
        %v370 = vrot.slane %v342, %v369
        %v371 = vcombine.low %v349, %v363
        %v372 = vcombine.high %v349, %v363
        %v373 = vcombine.low %v356, %v370
        %v374 = vcombine.high %v356, %v370
        %v376 = vunpack.c.l.s4 1966171168
        %v377 = vunpack.c.0.s8 %v376
        %v378 = vlaneseq
        %v379 = vshrl.u32 %v378, 7
        %v380 = vsub.s32 %v377, %v379
        %v381 = vrot.slane %v371, %v380
        %v383 = vunpack.c.l.s4 1966171168
        %v384 = vunpack.c.0.s8 %v383
        %v385 = vlaneseq
        %v386 = vshrl.u32 %v385, 7
        %v387 = vsub.s32 %v384, %v386
        %v388 = vrot.slane %v373, %v387
        %v390 = vunpack.c.l.s4 1966171168
        %v391 = vunpack.c.0.s8 %v390
        %v392 = vlaneseq
        %v393 = vshrl.u32 %v392, 7
        %v394 = vsub.s32 %v391, %v393
        %v395 = vrot.slane %v372, %v394
        %v397 = vunpack.c.l.s4 1966171168
        %v398 = vunpack.c.0.s8 %v397
        %v399 = vlaneseq
        %v400 = vshrl.u32 %v399, 7
        %v401 = vsub.s32 %v398, %v400
        %v402 = vrot.slane %v374, %v401
        %v403 = vcombine.high %v381, %v381
        %v404 = vcombine.high %v388, %v388
        %v405 = vcombine.high %v395, %v395
        %v406 = vcombine.high %v402, %v402
        %v407 = vlaneseq
        %v408 = vshrl.u32 %v407, 7
        %v409 = vsub.s32 0, %v408
        %v410 = vrot.slane %v381, %v409
        %v411 = vlaneseq
        %v412 = vshrl.u32 %v411, 7
        %v413 = vsub.s32 1, %v412
        %v414 = vrot.slane %v381, %v413
        %v415 = vlaneseq
        %v416 = vshrl.u32 %v415, 7
        %v417 = vsub.s32 2, %v416
        %v418 = vrot.slane %v381, %v417
        %v419 = vlaneseq
        %v420 = vshrl.u32 %v419, 7
        %v421 = vsub.s32 3, %v420
        %v422 = vrot.slane %v381, %v421
        %v423 = vlaneseq
        %v424 = vshrl.u32 %v423, 7
        %v425 = vsub.s32 0, %v424
        %v426 = vrot.slane %v395, %v425
        %v427 = vlaneseq
        %v428 = vshrl.u32 %v427, 7
        %v429 = vsub.s32 1, %v428
        %v430 = vrot.slane %v395, %v429
        %v431 = vlaneseq
        %v432 = vshrl.u32 %v431, 7
        %v433 = vsub.s32 2, %v432
        %v434 = vrot.slane %v395, %v433
        %v435 = vlaneseq
        %v436 = vshrl.u32 %v435, 7
        %v437 = vsub.s32 3, %v436
        %v438 = vrot.slane %v395, %v437
        %v439 = vlaneseq
        %v440 = vshrl.u32 %v439, 7
        %v441 = vsub.s32 0, %v440
        %v442 = vrot.slane %v403, %v441
        %v443 = vlaneseq
        %v444 = vshrl.u32 %v443, 7
        %v445 = vsub.s32 1, %v444
        %v446 = vrot.slane %v403, %v445
        %v447 = vlaneseq
        %v448 = vshrl.u32 %v447, 7
        %v449 = vsub.s32 2, %v448
        %v450 = vrot.slane %v403, %v449
        %v451 = vlaneseq
        %v452 = vshrl.u32 %v451, 7
        %v453 = vsub.s32 3, %v452
        %v454 = vrot.slane %v403, %v453
        %v455 = vlaneseq
        %v456 = vshrl.u32 %v455, 7
        %v457 = vsub.s32 0, %v456
        %v458 = vrot.slane %v405, %v457
        %v459 = vlaneseq
        %v460 = vshrl.u32 %v459, 7
        %v461 = vsub.s32 1, %v460
        %v462 = vrot.slane %v405, %v461
        %v463 = vlaneseq
        %v464 = vshrl.u32 %v463, 7
        %v465 = vsub.s32 2, %v464
        %v466 = vrot.slane %v405, %v465
        %v467 = vlaneseq
        %v468 = vshrl.u32 %v467, 7
        %v469 = vsub.s32 3, %v468
        %v470 = vrot.slane %v405, %v469
        %v471 = vlaneseq
        %v472 = vshrl.u32 %v471, 7
        %v473 = vsub.s32 0, %v472
        %v474 = vrot.slane %v388, %v473
        %v475 = vlaneseq
        %v476 = vshrl.u32 %v475, 7
        %v477 = vsub.s32 1, %v476
        %v478 = vrot.slane %v388, %v477
        %v479 = vlaneseq
        %v480 = vshrl.u32 %v479, 7
        %v481 = vsub.s32 2, %v480
        %v482 = vrot.slane %v388, %v481
        %v483 = vlaneseq
        %v484 = vshrl.u32 %v483, 7
        %v485 = vsub.s32 3, %v484
        %v486 = vrot.slane %v388, %v485
        %v487 = vlaneseq
        %v488 = vshrl.u32 %v487, 7
        %v489 = vsub.s32 0, %v488
        %v490 = vrot.slane %v402, %v489
        %v491 = vlaneseq
        %v492 = vshrl.u32 %v491, 7
        %v493 = vsub.s32 1, %v492
        %v494 = vrot.slane %v402, %v493
        %v495 = vlaneseq
        %v496 = vshrl.u32 %v495, 7
        %v497 = vsub.s32 2, %v496
        %v498 = vrot.slane %v402, %v497
        %v499 = vlaneseq
        %v500 = vshrl.u32 %v499, 7
        %v501 = vsub.s32 3, %v500
        %v502 = vrot.slane %v402, %v501
        %v503 = vlaneseq
        %v504 = vshrl.u32 %v503, 7
        %v505 = vsub.s32 0, %v504
        %v506 = vrot.slane %v404, %v505
        %v507 = vlaneseq
        %v508 = vshrl.u32 %v507, 7
        %v509 = vsub.s32 1, %v508
        %v510 = vrot.slane %v404, %v509
        %v511 = vlaneseq
        %v512 = vshrl.u32 %v511, 7
        %v513 = vsub.s32 2, %v512
        %v514 = vrot.slane %v404, %v513
        %v515 = vlaneseq
        %v516 = vshrl.u32 %v515, 7
        %v517 = vsub.s32 3, %v516
        %v518 = vrot.slane %v404, %v517
        %v519 = vlaneseq
        %v520 = vshrl.u32 %v519, 7
        %v521 = vsub.s32 0, %v520
        %v522 = vrot.slane %v406, %v521
        %v523 = vlaneseq
        %v524 = vshrl.u32 %v523, 7
        %v525 = vsub.s32 1, %v524
        %v526 = vrot.slane %v406, %v525
        %v527 = vlaneseq
        %v528 = vshrl.u32 %v527, 7
        %v529 = vsub.s32 2, %v528
        %v530 = vrot.slane %v406, %v529
        %v531 = vlaneseq
        %v532 = vshrl.u32 %v531, 7
        %v533 = vsub.s32 3, %v532
        %v534 = vrot.slane %v406, %v533
        %v567 = vmul.f32 %v410, %v319
        %v568 = vmul.f32 %v414, %v320
        %v569 = vmul.f32 %v418, %v321
        %v570 = vmul.f32 %v422, %v322
        %v571 = vmul.f32 %v426, %v319
        %v572 = vmul.f32 %v430, %v320
        %v573 = vmul.f32 %v434, %v321
        %v574 = vmul.f32 %v438, %v322
        %v575 = vmul.f32 %v442, %v319
        %v576 = vmul.f32 %v446, %v320
        %v577 = vmul.f32 %v450, %v321
        %v578 = vmul.f32 %v454, %v322
        %v579 = vmul.f32 %v458, %v319
        %v580 = vmul.f32 %v462, %v320
        %v581 = vmul.f32 %v466, %v321
        %v582 = vmul.f32 %v470, %v322
        %v583 = vmul.f32 %v474, %v319
        %v584 = vmul.f32 %v478, %v320
        %v585 = vmul.f32 %v482, %v321
        %v586 = vmul.f32 %v486, %v322
        %v587 = vmul.f32 %v490, %v319
        %v588 = vmul.f32 %v494, %v320
        %v589 = vmul.f32 %v498, %v321
        %v590 = vmul.f32 %v502, %v322
        %v591 = vmul.f32 %v506, %v319
        %v592 = vmul.f32 %v510, %v320
        %v593 = vmul.f32 %v514, %v321
        %v594 = vmul.f32 %v518, %v322
        %v595 = vmul.f32 %v522, %v319
        %v596 = vmul.f32 %v526, %v320
        %v597 = vmul.f32 %v530, %v321
        %v598 = vmul.f32 %v534, %v322
        %v603 = vcombine.low %v315, %v316
        %v604 = vcombine.high %v315, %v316
        %v605 = vcombine.low %v317, %v318
        %v606 = vcombine.high %v317, %v318
        %v608 = vunpack.c.l.s4 1966171168
        %v609 = vunpack.c.0.s8 %v608
        %v610 = vlaneseq
        %v611 = vshrl.u32 %v610, 7
        %v612 = vsub.s32 %v609, %v611
        %v613 = vrot.slane %v603, %v612
        %v615 = vunpack.c.l.s4 1966171168
        %v616 = vunpack.c.0.s8 %v615
        %v617 = vlaneseq
        %v618 = vshrl.u32 %v617, 7
        %v619 = vsub.s32 %v616, %v618
        %v620 = vrot.slane %v604, %v619
        %v622 = vunpack.c.l.s4 1966171168
        %v623 = vunpack.c.0.s8 %v622
        %v624 = vlaneseq
        %v625 = vshrl.u32 %v624, 7
        %v626 = vsub.s32 %v623, %v625
        %v627 = vrot.slane %v605, %v626
        %v629 = vunpack.c.l.s4 1966171168
        %v630 = vunpack.c.0.s8 %v629
        %v631 = vlaneseq
        %v632 = vshrl.u32 %v631, 7
        %v633 = vsub.s32 %v630, %v632
        %v634 = vrot.slane %v606, %v633
        %v635 = vcombine.low %v613, %v627
        %v636 = vcombine.high %v613, %v627
        %v637 = vcombine.low %v620, %v634
        %v638 = vcombine.high %v620, %v634
        %v640 = vunpack.c.l.s4 1966171168
        %v641 = vunpack.c.0.s8 %v640
        %v642 = vlaneseq
        %v643 = vshrl.u32 %v642, 7
        %v644 = vsub.s32 %v641, %v643
        %v645 = vrot.slane %v635, %v644
        %v647 = vunpack.c.l.s4 1966171168
        %v648 = vunpack.c.0.s8 %v647
        %v649 = vlaneseq
        %v650 = vshrl.u32 %v649, 7
        %v651 = vsub.s32 %v648, %v650
        %v652 = vrot.slane %v637, %v651
        %v654 = vunpack.c.l.s4 1966171168
        %v655 = vunpack.c.0.s8 %v654
        %v656 = vlaneseq
        %v657 = vshrl.u32 %v656, 7
        %v658 = vsub.s32 %v655, %v657
        %v659 = vrot.slane %v636, %v658
        %v661 = vunpack.c.l.s4 1966171168
        %v662 = vunpack.c.0.s8 %v661
        %v663 = vlaneseq
        %v664 = vshrl.u32 %v663, 7
        %v665 = vsub.s32 %v662, %v664
        %v666 = vrot.slane %v638, %v665
        %v667 = vcombine.high %v645, %v645
        %v668 = vcombine.high %v652, %v652
        %v669 = vcombine.high %v659, %v659
        %v670 = vcombine.high %v666, %v666
        %v671 = vlaneseq
        %v672 = vshrl.u32 %v671, 7
        %v673 = vsub.s32 0, %v672
        %v674 = vrot.slane %v645, %v673
        %v675 = vlaneseq
        %v676 = vshrl.u32 %v675, 7
        %v677 = vsub.s32 1, %v676
        %v678 = vrot.slane %v645, %v677
        %v679 = vlaneseq
        %v680 = vshrl.u32 %v679, 7
        %v681 = vsub.s32 2, %v680
        %v682 = vrot.slane %v645, %v681
        %v683 = vlaneseq
        %v684 = vshrl.u32 %v683, 7
        %v685 = vsub.s32 3, %v684
        %v686 = vrot.slane %v645, %v685
        %v687 = vlaneseq
        %v688 = vshrl.u32 %v687, 7
        %v689 = vsub.s32 0, %v688
        %v690 = vrot.slane %v659, %v689
        %v691 = vlaneseq
        %v692 = vshrl.u32 %v691, 7
        %v693 = vsub.s32 1, %v692
        %v694 = vrot.slane %v659, %v693
        %v695 = vlaneseq
        %v696 = vshrl.u32 %v695, 7
        %v697 = vsub.s32 2, %v696
        %v698 = vrot.slane %v659, %v697
        %v699 = vlaneseq
        %v700 = vshrl.u32 %v699, 7
        %v701 = vsub.s32 3, %v700
        %v702 = vrot.slane %v659, %v701
        %v703 = vlaneseq
        %v704 = vshrl.u32 %v703, 7
        %v705 = vsub.s32 0, %v704
        %v706 = vrot.slane %v667, %v705
        %v707 = vlaneseq
        %v708 = vshrl.u32 %v707, 7
        %v709 = vsub.s32 1, %v708
        %v710 = vrot.slane %v667, %v709
        %v711 = vlaneseq
        %v712 = vshrl.u32 %v711, 7
        %v713 = vsub.s32 2, %v712
        %v714 = vrot.slane %v667, %v713
        %v715 = vlaneseq
        %v716 = vshrl.u32 %v715, 7
        %v717 = vsub.s32 3, %v716
        %v718 = vrot.slane %v667, %v717
        %v719 = vlaneseq
        %v720 = vshrl.u32 %v719, 7
        %v721 = vsub.s32 0, %v720
        %v722 = vrot.slane %v669, %v721
        %v723 = vlaneseq
        %v724 = vshrl.u32 %v723, 7
        %v725 = vsub.s32 1, %v724
        %v726 = vrot.slane %v669, %v725
        %v727 = vlaneseq
        %v728 = vshrl.u32 %v727, 7
        %v729 = vsub.s32 2, %v728
        %v730 = vrot.slane %v669, %v729
        %v731 = vlaneseq
        %v732 = vshrl.u32 %v731, 7
        %v733 = vsub.s32 3, %v732
        %v734 = vrot.slane %v669, %v733
        %v735 = vlaneseq
        %v736 = vshrl.u32 %v735, 7
        %v737 = vsub.s32 0, %v736
        %v738 = vrot.slane %v652, %v737
        %v739 = vlaneseq
        %v740 = vshrl.u32 %v739, 7
        %v741 = vsub.s32 1, %v740
        %v742 = vrot.slane %v652, %v741
        %v743 = vlaneseq
        %v744 = vshrl.u32 %v743, 7
        %v745 = vsub.s32 2, %v744
        %v746 = vrot.slane %v652, %v745
        %v747 = vlaneseq
        %v748 = vshrl.u32 %v747, 7
        %v749 = vsub.s32 3, %v748
        %v750 = vrot.slane %v652, %v749
        %v751 = vlaneseq
        %v752 = vshrl.u32 %v751, 7
        %v753 = vsub.s32 0, %v752
        %v754 = vrot.slane %v666, %v753
        %v755 = vlaneseq
        %v756 = vshrl.u32 %v755, 7
        %v757 = vsub.s32 1, %v756
        %v758 = vrot.slane %v666, %v757
        %v759 = vlaneseq
        %v760 = vshrl.u32 %v759, 7
        %v761 = vsub.s32 2, %v760
        %v762 = vrot.slane %v666, %v761
        %v763 = vlaneseq
        %v764 = vshrl.u32 %v763, 7
        %v765 = vsub.s32 3, %v764
        %v766 = vrot.slane %v666, %v765
        %v767 = vlaneseq
        %v768 = vshrl.u32 %v767, 7
        %v769 = vsub.s32 0, %v768
        %v770 = vrot.slane %v668, %v769
        %v771 = vlaneseq
        %v772 = vshrl.u32 %v771, 7
        %v773 = vsub.s32 1, %v772
        %v774 = vrot.slane %v668, %v773
        %v775 = vlaneseq
        %v776 = vshrl.u32 %v775, 7
        %v777 = vsub.s32 2, %v776
        %v778 = vrot.slane %v668, %v777
        %v779 = vlaneseq
        %v780 = vshrl.u32 %v779, 7
        %v781 = vsub.s32 3, %v780
        %v782 = vrot.slane %v668, %v781
        %v783 = vlaneseq
        %v784 = vshrl.u32 %v783, 7
        %v785 = vsub.s32 0, %v784
        %v786 = vrot.slane %v670, %v785
        %v787 = vlaneseq
        %v788 = vshrl.u32 %v787, 7
        %v789 = vsub.s32 1, %v788
        %v790 = vrot.slane %v670, %v789
        %v791 = vlaneseq
        %v792 = vshrl.u32 %v791, 7
        %v793 = vsub.s32 2, %v792
        %v794 = vrot.slane %v670, %v793
        %v795 = vlaneseq
        %v796 = vshrl.u32 %v795, 7
        %v797 = vsub.s32 3, %v796
        %v798 = vrot.slane %v670, %v797
        %v831 = vmul.f32 %v674, %v323
        %v832 = vmul.f32 %v678, %v324
        %v833 = vmul.f32 %v682, %v325
        %v834 = vmul.f32 %v686, %v326
        %v835 = vmul.f32 %v690, %v323
        %v836 = vmul.f32 %v694, %v324
        %v837 = vmul.f32 %v698, %v325
        %v838 = vmul.f32 %v702, %v326
        %v839 = vmul.f32 %v706, %v323
        %v840 = vmul.f32 %v710, %v324
        %v841 = vmul.f32 %v714, %v325
        %v842 = vmul.f32 %v718, %v326
        %v843 = vmul.f32 %v722, %v323
        %v844 = vmul.f32 %v726, %v324
        %v845 = vmul.f32 %v730, %v325
        %v846 = vmul.f32 %v734, %v326
        %v847 = vmul.f32 %v738, %v323
        %v848 = vmul.f32 %v742, %v324
        %v849 = vmul.f32 %v746, %v325
        %v850 = vmul.f32 %v750, %v326
        %v851 = vmul.f32 %v754, %v323
        %v852 = vmul.f32 %v758, %v324
        %v853 = vmul.f32 %v762, %v325
        %v854 = vmul.f32 %v766, %v326
        %v855 = vmul.f32 %v770, %v323
        %v856 = vmul.f32 %v774, %v324
        %v857 = vmul.f32 %v778, %v325
        %v858 = vmul.f32 %v782, %v326
        %v859 = vmul.f32 %v786, %v323
        %v860 = vmul.f32 %v790, %v324
        %v861 = vmul.f32 %v794, %v325
        %v862 = vmul.f32 %v798, %v326
        %v863 = vadd.f32 %v567, %v831
        %v864 = vadd.f32 %v568, %v832
        %v865 = vadd.f32 %v569, %v833
        %v866 = vadd.f32 %v570, %v834
        %v867 = vadd.f32 %v571, %v835
        %v868 = vadd.f32 %v572, %v836
        %v869 = vadd.f32 %v573, %v837
        %v870 = vadd.f32 %v574, %v838
        %v871 = vadd.f32 %v575, %v839
        %v872 = vadd.f32 %v576, %v840
        %v873 = vadd.f32 %v577, %v841
        %v874 = vadd.f32 %v578, %v842
        %v875 = vadd.f32 %v579, %v843
        %v876 = vadd.f32 %v580, %v844
        %v877 = vadd.f32 %v581, %v845
        %v878 = vadd.f32 %v582, %v846
        %v879 = vadd.f32 %v583, %v847
        %v880 = vadd.f32 %v584, %v848
        %v881 = vadd.f32 %v585, %v849
        %v882 = vadd.f32 %v586, %v850
        %v883 = vadd.f32 %v587, %v851
        %v884 = vadd.f32 %v588, %v852
        %v885 = vadd.f32 %v589, %v853
        %v886 = vadd.f32 %v590, %v854
        %v887 = vadd.f32 %v591, %v855
        %v888 = vadd.f32 %v592, %v856
        %v889 = vadd.f32 %v593, %v857
        %v890 = vadd.f32 %v594, %v858
        %v891 = vadd.f32 %v595, %v859
        %v892 = vadd.f32 %v596, %v860
        %v893 = vadd.f32 %v597, %v861
        %v894 = vadd.f32 %v598, %v862
        %v895 = vrot.slane %v863, 4
        %v896 = vmax.f32 %v863, %v895
        %v897 = vrot.slane %v896, 2
        %v898 = vmax.f32 %v896, %v897
        %v899 = vrot.slane %v898, 1
        %v900 = vmax.f32 %v898, %v899
        %v901 = vrot.slane %v864, 4
        %v902 = vmax.f32 %v864, %v901
        %v903 = vrot.slane %v902, 2
        %v904 = vmax.f32 %v902, %v903
        %v905 = vrot.slane %v904, 1
        %v906 = vmax.f32 %v904, %v905
        %v907 = vrot.slane %v865, 4
        %v908 = vmax.f32 %v865, %v907
        %v909 = vrot.slane %v908, 2
        %v910 = vmax.f32 %v908, %v909
        %v911 = vrot.slane %v910, 1
        %v912 = vmax.f32 %v910, %v911
        %v913 = vrot.slane %v866, 4
        %v914 = vmax.f32 %v866, %v913
        %v915 = vrot.slane %v914, 2
        %v916 = vmax.f32 %v914, %v915
        %v917 = vrot.slane %v916, 1
        %v918 = vmax.f32 %v916, %v917
        %v919 = vrot.slane %v867, 4
        %v920 = vmax.f32 %v867, %v919
        %v921 = vrot.slane %v920, 2
        %v922 = vmax.f32 %v920, %v921
        %v923 = vrot.slane %v922, 1
        %v924 = vmax.f32 %v922, %v923
        %v925 = vrot.slane %v868, 4
        %v926 = vmax.f32 %v868, %v925
        %v927 = vrot.slane %v926, 2
        %v928 = vmax.f32 %v926, %v927
        %v929 = vrot.slane %v928, 1
        %v930 = vmax.f32 %v928, %v929
        %v931 = vrot.slane %v869, 4
        %v932 = vmax.f32 %v869, %v931
        %v933 = vrot.slane %v932, 2
        %v934 = vmax.f32 %v932, %v933
        %v935 = vrot.slane %v934, 1
        %v936 = vmax.f32 %v934, %v935
        %v937 = vrot.slane %v870, 4
        %v938 = vmax.f32 %v870, %v937
        %v939 = vrot.slane %v938, 2
        %v940 = vmax.f32 %v938, %v939
        %v941 = vrot.slane %v940, 1
        %v942 = vmax.f32 %v940, %v941
        %v943 = vrot.slane %v871, 4
        %v944 = vmax.f32 %v871, %v943
        %v945 = vrot.slane %v944, 2
        %v946 = vmax.f32 %v944, %v945
        %v947 = vrot.slane %v946, 1
        %v948 = vmax.f32 %v946, %v947
        %v949 = vrot.slane %v872, 4
        %v950 = vmax.f32 %v872, %v949
        %v951 = vrot.slane %v950, 2
        %v952 = vmax.f32 %v950, %v951
        %v953 = vrot.slane %v952, 1
        %v954 = vmax.f32 %v952, %v953
        %v955 = vrot.slane %v873, 4
        %v956 = vmax.f32 %v873, %v955
        %v957 = vrot.slane %v956, 2
        %v958 = vmax.f32 %v956, %v957
        %v959 = vrot.slane %v958, 1
        %v960 = vmax.f32 %v958, %v959
        %v961 = vrot.slane %v874, 4
        %v962 = vmax.f32 %v874, %v961
        %v963 = vrot.slane %v962, 2
        %v964 = vmax.f32 %v962, %v963
        %v965 = vrot.slane %v964, 1
        %v966 = vmax.f32 %v964, %v965
        %v967 = vrot.slane %v875, 4
        %v968 = vmax.f32 %v875, %v967
        %v969 = vrot.slane %v968, 2
        %v970 = vmax.f32 %v968, %v969
        %v971 = vrot.slane %v970, 1
        %v972 = vmax.f32 %v970, %v971
        %v973 = vrot.slane %v876, 4
        %v974 = vmax.f32 %v876, %v973
        %v975 = vrot.slane %v974, 2
        %v976 = vmax.f32 %v974, %v975
        %v977 = vrot.slane %v976, 1
        %v978 = vmax.f32 %v976, %v977
        %v979 = vrot.slane %v877, 4
        %v980 = vmax.f32 %v877, %v979
        %v981 = vrot.slane %v980, 2
        %v982 = vmax.f32 %v980, %v981
        %v983 = vrot.slane %v982, 1
        %v984 = vmax.f32 %v982, %v983
        %v985 = vrot.slane %v878, 4
        %v986 = vmax.f32 %v878, %v985
        %v987 = vrot.slane %v986, 2
        %v988 = vmax.f32 %v986, %v987
        %v989 = vrot.slane %v988, 1
        %v990 = vmax.f32 %v988, %v989
        %v991 = vrot.slane %v879, 4
        %v992 = vmax.f32 %v879, %v991
        %v993 = vrot.slane %v992, 2
        %v994 = vmax.f32 %v992, %v993
        %v995 = vrot.slane %v994, 1
        %v996 = vmax.f32 %v994, %v995
        %v997 = vrot.slane %v880, 4
        %v998 = vmax.f32 %v880, %v997
        %v999 = vrot.slane %v998, 2
        %v1000 = vmax.f32 %v998, %v999
        %v1001 = vrot.slane %v1000, 1
        %v1002 = vmax.f32 %v1000, %v1001
        %v1003 = vrot.slane %v881, 4
        %v1004 = vmax.f32 %v881, %v1003
        %v1005 = vrot.slane %v1004, 2
        %v1006 = vmax.f32 %v1004, %v1005
        %v1007 = vrot.slane %v1006, 1
        %v1008 = vmax.f32 %v1006, %v1007
        %v1009 = vrot.slane %v882, 4
        %v1010 = vmax.f32 %v882, %v1009
        %v1011 = vrot.slane %v1010, 2
        %v1012 = vmax.f32 %v1010, %v1011
        %v1013 = vrot.slane %v1012, 1
        %v1014 = vmax.f32 %v1012, %v1013
        %v1015 = vrot.slane %v883, 4
        %v1016 = vmax.f32 %v883, %v1015
        %v1017 = vrot.slane %v1016, 2
        %v1018 = vmax.f32 %v1016, %v1017
        %v1019 = vrot.slane %v1018, 1
        %v1020 = vmax.f32 %v1018, %v1019
        %v1021 = vrot.slane %v884, 4
        %v1022 = vmax.f32 %v884, %v1021
        %v1023 = vrot.slane %v1022, 2
        %v1024 = vmax.f32 %v1022, %v1023
        %v1025 = vrot.slane %v1024, 1
        %v1026 = vmax.f32 %v1024, %v1025
        %v1027 = vrot.slane %v885, 4
        %v1028 = vmax.f32 %v885, %v1027
        %v1029 = vrot.slane %v1028, 2
        %v1030 = vmax.f32 %v1028, %v1029
        %v1031 = vrot.slane %v1030, 1
        %v1032 = vmax.f32 %v1030, %v1031
        %v1033 = vrot.slane %v886, 4
        %v1034 = vmax.f32 %v886, %v1033
        %v1035 = vrot.slane %v1034, 2
        %v1036 = vmax.f32 %v1034, %v1035
        %v1037 = vrot.slane %v1036, 1
        %v1038 = vmax.f32 %v1036, %v1037
        %v1039 = vrot.slane %v887, 4
        %v1040 = vmax.f32 %v887, %v1039
        %v1041 = vrot.slane %v1040, 2
        %v1042 = vmax.f32 %v1040, %v1041
        %v1043 = vrot.slane %v1042, 1
        %v1044 = vmax.f32 %v1042, %v1043
        %v1045 = vrot.slane %v888, 4
        %v1046 = vmax.f32 %v888, %v1045
        %v1047 = vrot.slane %v1046, 2
        %v1048 = vmax.f32 %v1046, %v1047
        %v1049 = vrot.slane %v1048, 1
        %v1050 = vmax.f32 %v1048, %v1049
        %v1051 = vrot.slane %v889, 4
        %v1052 = vmax.f32 %v889, %v1051
        %v1053 = vrot.slane %v1052, 2
        %v1054 = vmax.f32 %v1052, %v1053
        %v1055 = vrot.slane %v1054, 1
        %v1056 = vmax.f32 %v1054, %v1055
        %v1057 = vrot.slane %v890, 4
        %v1058 = vmax.f32 %v890, %v1057
        %v1059 = vrot.slane %v1058, 2
        %v1060 = vmax.f32 %v1058, %v1059
        %v1061 = vrot.slane %v1060, 1
        %v1062 = vmax.f32 %v1060, %v1061
        %v1063 = vrot.slane %v891, 4
        %v1064 = vmax.f32 %v891, %v1063
        %v1065 = vrot.slane %v1064, 2
        %v1066 = vmax.f32 %v1064, %v1065
        %v1067 = vrot.slane %v1066, 1
        %v1068 = vmax.f32 %v1066, %v1067
        %v1069 = vrot.slane %v892, 4
        %v1070 = vmax.f32 %v892, %v1069
        %v1071 = vrot.slane %v1070, 2
        %v1072 = vmax.f32 %v1070, %v1071
        %v1073 = vrot.slane %v1072, 1
        %v1074 = vmax.f32 %v1072, %v1073
        %v1075 = vrot.slane %v893, 4
        %v1076 = vmax.f32 %v893, %v1075
        %v1077 = vrot.slane %v1076, 2
        %v1078 = vmax.f32 %v1076, %v1077
        %v1079 = vrot.slane %v1078, 1
        %v1080 = vmax.f32 %v1078, %v1079
        %v1081 = vrot.slane %v894, 4
        %v1082 = vmax.f32 %v894, %v1081
        %v1083 = vrot.slane %v1082, 2
        %v1084 = vmax.f32 %v1082, %v1083
        %v1085 = vrot.slane %v1084, 1
        %v1086 = vmax.f32 %v1084, %v1085
        %v1087 = vsub.f32 %v863, %v900
        %v1088 = vsub.f32 %v864, %v906
        %v1089 = vsub.f32 %v865, %v912
        %v1090 = vsub.f32 %v866, %v918
        %v1091 = vsub.f32 %v867, %v924
        %v1092 = vsub.f32 %v868, %v930
        %v1093 = vsub.f32 %v869, %v936
        %v1094 = vsub.f32 %v870, %v942
        %v1095 = vsub.f32 %v871, %v948
        %v1096 = vsub.f32 %v872, %v954
        %v1097 = vsub.f32 %v873, %v960
        %v1098 = vsub.f32 %v874, %v966
        %v1099 = vsub.f32 %v875, %v972
        %v1100 = vsub.f32 %v876, %v978
        %v1101 = vsub.f32 %v877, %v984
        %v1102 = vsub.f32 %v878, %v990
        %v1103 = vsub.f32 %v879, %v996
        %v1104 = vsub.f32 %v880, %v1002
        %v1105 = vsub.f32 %v881, %v1008
        %v1106 = vsub.f32 %v882, %v1014
        %v1107 = vsub.f32 %v883, %v1020
        %v1108 = vsub.f32 %v884, %v1026
        %v1109 = vsub.f32 %v885, %v1032
        %v1110 = vsub.f32 %v886, %v1038
        %v1111 = vsub.f32 %v887, %v1044
        %v1112 = vsub.f32 %v888, %v1050
        %v1113 = vsub.f32 %v889, %v1056
        %v1114 = vsub.f32 %v890, %v1062
        %v1115 = vsub.f32 %v891, %v1068
        %v1116 = vsub.f32 %v892, %v1074
        %v1117 = vsub.f32 %v893, %v1080
        %v1118 = vsub.f32 %v894, %v1086
        %v1119 = vmul.f32 %v1087, 1.442695
        %v1120 = vpow.pop %v1119
        %v1121 = vmul.f32 %v1088, 1.442695
        %v1122 = vpow.pop %v1121
        %v1123 = vmul.f32 %v1089, 1.442695
        %v1124 = vpow.pop %v1123
        %v1125 = vmul.f32 %v1090, 1.442695
        %v1126 = vpow.pop %v1125
        %v1127 = vmul.f32 %v1091, 1.442695
        %v1128 = vpow.pop %v1127
        %v1129 = vmul.f32 %v1092, 1.442695
        %v1130 = vpow.pop %v1129
        %v1131 = vmul.f32 %v1093, 1.442695
        %v1132 = vpow.pop %v1131
        %v1133 = vmul.f32 %v1094, 1.442695
        %v1134 = vpow.pop %v1133
        %v1135 = vmul.f32 %v1095, 1.442695
        %v1136 = vpow.pop %v1135
        %v1137 = vmul.f32 %v1096, 1.442695
        %v1138 = vpow.pop %v1137
        %v1139 = vmul.f32 %v1097, 1.442695
        %v1140 = vpow.pop %v1139
        %v1141 = vmul.f32 %v1098, 1.442695
        %v1142 = vpow.pop %v1141
        %v1143 = vmul.f32 %v1099, 1.442695
        %v1144 = vpow.pop %v1143
        %v1145 = vmul.f32 %v1100, 1.442695
        %v1146 = vpow.pop %v1145
        %v1147 = vmul.f32 %v1101, 1.442695
        %v1148 = vpow.pop %v1147
        %v1149 = vmul.f32 %v1102, 1.442695
        %v1150 = vpow.pop %v1149
        %v1151 = vmul.f32 %v1103, 1.442695
        %v1152 = vpow.pop %v1151
        %v1153 = vmul.f32 %v1104, 1.442695
        %v1154 = vpow.pop %v1153
        %v1155 = vmul.f32 %v1105, 1.442695
        %v1156 = vpow.pop %v1155
        %v1157 = vmul.f32 %v1106, 1.442695
        %v1158 = vpow.pop %v1157
        %v1159 = vmul.f32 %v1107, 1.442695
        %v1160 = vpow.pop %v1159
        %v1161 = vmul.f32 %v1108, 1.442695
        %v1162 = vpow.pop %v1161
        %v1163 = vmul.f32 %v1109, 1.442695
        %v1164 = vpow.pop %v1163
        %v1165 = vmul.f32 %v1110, 1.442695
        %v1166 = vpow.pop %v1165
        %v1167 = vmul.f32 %v1111, 1.442695
        %v1168 = vpow.pop %v1167
        %v1169 = vmul.f32 %v1112, 1.442695
        %v1170 = vpow.pop %v1169
        %v1171 = vmul.f32 %v1113, 1.442695
        %v1172 = vpow.pop %v1171
        %v1173 = vmul.f32 %v1114, 1.442695
        %v1174 = vpow.pop %v1173
        %v1175 = vmul.f32 %v1115, 1.442695
        %v1176 = vpow.pop %v1175
        %v1177 = vmul.f32 %v1116, 1.442695
        %v1178 = vpow.pop %v1177
        %v1179 = vmul.f32 %v1117, 1.442695
        %v1180 = vpow.pop %v1179
        %v1181 = vmul.f32 %v1118, 1.442695
        %v1182 = vpow.pop %v1181
        %v1183 = vrot.slane %v1120, 4
        %v1184 = vadd.f32 %v1120, %v1183
        %v1185 = vrot.slane %v1184, 2
        %v1186 = vadd.f32 %v1184, %v1185
        %v1187 = vrot.slane %v1186, 1
        %v1188 = vadd.f32 %v1186, %v1187
        %v1189 = vrot.slane %v1122, 4
        %v1190 = vadd.f32 %v1122, %v1189
        %v1191 = vrot.slane %v1190, 2
        %v1192 = vadd.f32 %v1190, %v1191
        %v1193 = vrot.slane %v1192, 1
        %v1194 = vadd.f32 %v1192, %v1193
        %v1195 = vrot.slane %v1124, 4
        %v1196 = vadd.f32 %v1124, %v1195
        %v1197 = vrot.slane %v1196, 2
        %v1198 = vadd.f32 %v1196, %v1197
        %v1199 = vrot.slane %v1198, 1
        %v1200 = vadd.f32 %v1198, %v1199
        %v1201 = vrot.slane %v1126, 4
        %v1202 = vadd.f32 %v1126, %v1201
        %v1203 = vrot.slane %v1202, 2
        %v1204 = vadd.f32 %v1202, %v1203
        %v1205 = vrot.slane %v1204, 1
        %v1206 = vadd.f32 %v1204, %v1205
        %v1207 = vrot.slane %v1128, 4
        %v1208 = vadd.f32 %v1128, %v1207
        %v1209 = vrot.slane %v1208, 2
        %v1210 = vadd.f32 %v1208, %v1209
        %v1211 = vrot.slane %v1210, 1
        %v1212 = vadd.f32 %v1210, %v1211
        %v1213 = vrot.slane %v1130, 4
        %v1214 = vadd.f32 %v1130, %v1213
        %v1215 = vrot.slane %v1214, 2
        %v1216 = vadd.f32 %v1214, %v1215
        %v1217 = vrot.slane %v1216, 1
        %v1218 = vadd.f32 %v1216, %v1217
        %v1219 = vrot.slane %v1132, 4
        %v1220 = vadd.f32 %v1132, %v1219
        %v1221 = vrot.slane %v1220, 2
        %v1222 = vadd.f32 %v1220, %v1221
        %v1223 = vrot.slane %v1222, 1
        %v1224 = vadd.f32 %v1222, %v1223
        %v1225 = vrot.slane %v1134, 4
        %v1226 = vadd.f32 %v1134, %v1225
        %v1227 = vrot.slane %v1226, 2
        %v1228 = vadd.f32 %v1226, %v1227
        %v1229 = vrot.slane %v1228, 1
        %v1230 = vadd.f32 %v1228, %v1229
        %v1231 = vrot.slane %v1136, 4
        %v1232 = vadd.f32 %v1136, %v1231
        %v1233 = vrot.slane %v1232, 2
        %v1234 = vadd.f32 %v1232, %v1233
        %v1235 = vrot.slane %v1234, 1
        %v1236 = vadd.f32 %v1234, %v1235
        %v1237 = vrot.slane %v1138, 4
        %v1238 = vadd.f32 %v1138, %v1237
        %v1239 = vrot.slane %v1238, 2
        %v1240 = vadd.f32 %v1238, %v1239
        %v1241 = vrot.slane %v1240, 1
        %v1242 = vadd.f32 %v1240, %v1241
        %v1243 = vrot.slane %v1140, 4
        %v1244 = vadd.f32 %v1140, %v1243
        %v1245 = vrot.slane %v1244, 2
        %v1246 = vadd.f32 %v1244, %v1245
        %v1247 = vrot.slane %v1246, 1
        %v1248 = vadd.f32 %v1246, %v1247
        %v1249 = vrot.slane %v1142, 4
        %v1250 = vadd.f32 %v1142, %v1249
        %v1251 = vrot.slane %v1250, 2
        %v1252 = vadd.f32 %v1250, %v1251
        %v1253 = vrot.slane %v1252, 1
        %v1254 = vadd.f32 %v1252, %v1253
        %v1255 = vrot.slane %v1144, 4
        %v1256 = vadd.f32 %v1144, %v1255
        %v1257 = vrot.slane %v1256, 2
        %v1258 = vadd.f32 %v1256, %v1257
        %v1259 = vrot.slane %v1258, 1
        %v1260 = vadd.f32 %v1258, %v1259
        %v1261 = vrot.slane %v1146, 4
        %v1262 = vadd.f32 %v1146, %v1261
        %v1263 = vrot.slane %v1262, 2
        %v1264 = vadd.f32 %v1262, %v1263
        %v1265 = vrot.slane %v1264, 1
        %v1266 = vadd.f32 %v1264, %v1265
        %v1267 = vrot.slane %v1148, 4
        %v1268 = vadd.f32 %v1148, %v1267
        %v1269 = vrot.slane %v1268, 2
        %v1270 = vadd.f32 %v1268, %v1269
        %v1271 = vrot.slane %v1270, 1
        %v1272 = vadd.f32 %v1270, %v1271
        %v1273 = vrot.slane %v1150, 4
        %v1274 = vadd.f32 %v1150, %v1273
        %v1275 = vrot.slane %v1274, 2
        %v1276 = vadd.f32 %v1274, %v1275
        %v1277 = vrot.slane %v1276, 1
        %v1278 = vadd.f32 %v1276, %v1277
        %v1279 = vrot.slane %v1152, 4
        %v1280 = vadd.f32 %v1152, %v1279
        %v1281 = vrot.slane %v1280, 2
        %v1282 = vadd.f32 %v1280, %v1281
        %v1283 = vrot.slane %v1282, 1
        %v1284 = vadd.f32 %v1282, %v1283
        %v1285 = vrot.slane %v1154, 4
        %v1286 = vadd.f32 %v1154, %v1285
        %v1287 = vrot.slane %v1286, 2
        %v1288 = vadd.f32 %v1286, %v1287
        %v1289 = vrot.slane %v1288, 1
        %v1290 = vadd.f32 %v1288, %v1289
        %v1291 = vrot.slane %v1156, 4
        %v1292 = vadd.f32 %v1156, %v1291
        %v1293 = vrot.slane %v1292, 2
        %v1294 = vadd.f32 %v1292, %v1293
        %v1295 = vrot.slane %v1294, 1
        %v1296 = vadd.f32 %v1294, %v1295
        %v1297 = vrot.slane %v1158, 4
        %v1298 = vadd.f32 %v1158, %v1297
        %v1299 = vrot.slane %v1298, 2
        %v1300 = vadd.f32 %v1298, %v1299
        %v1301 = vrot.slane %v1300, 1
        %v1302 = vadd.f32 %v1300, %v1301
        %v1303 = vrot.slane %v1160, 4
        %v1304 = vadd.f32 %v1160, %v1303
        %v1305 = vrot.slane %v1304, 2
        %v1306 = vadd.f32 %v1304, %v1305
        %v1307 = vrot.slane %v1306, 1
        %v1308 = vadd.f32 %v1306, %v1307
        %v1309 = vrot.slane %v1162, 4
        %v1310 = vadd.f32 %v1162, %v1309
        %v1311 = vrot.slane %v1310, 2
        %v1312 = vadd.f32 %v1310, %v1311
        %v1313 = vrot.slane %v1312, 1
        %v1314 = vadd.f32 %v1312, %v1313
        %v1315 = vrot.slane %v1164, 4
        %v1316 = vadd.f32 %v1164, %v1315
        %v1317 = vrot.slane %v1316, 2
        %v1318 = vadd.f32 %v1316, %v1317
        %v1319 = vrot.slane %v1318, 1
        %v1320 = vadd.f32 %v1318, %v1319
        %v1321 = vrot.slane %v1166, 4
        %v1322 = vadd.f32 %v1166, %v1321
        %v1323 = vrot.slane %v1322, 2
        %v1324 = vadd.f32 %v1322, %v1323
        %v1325 = vrot.slane %v1324, 1
        %v1326 = vadd.f32 %v1324, %v1325
        %v1327 = vrot.slane %v1168, 4
        %v1328 = vadd.f32 %v1168, %v1327
        %v1329 = vrot.slane %v1328, 2
        %v1330 = vadd.f32 %v1328, %v1329
        %v1331 = vrot.slane %v1330, 1
        %v1332 = vadd.f32 %v1330, %v1331
        %v1333 = vrot.slane %v1170, 4
        %v1334 = vadd.f32 %v1170, %v1333
        %v1335 = vrot.slane %v1334, 2
        %v1336 = vadd.f32 %v1334, %v1335
        %v1337 = vrot.slane %v1336, 1
        %v1338 = vadd.f32 %v1336, %v1337
        %v1339 = vrot.slane %v1172, 4
        %v1340 = vadd.f32 %v1172, %v1339
        %v1341 = vrot.slane %v1340, 2
        %v1342 = vadd.f32 %v1340, %v1341
        %v1343 = vrot.slane %v1342, 1
        %v1344 = vadd.f32 %v1342, %v1343
        %v1345 = vrot.slane %v1174, 4
        %v1346 = vadd.f32 %v1174, %v1345
        %v1347 = vrot.slane %v1346, 2
        %v1348 = vadd.f32 %v1346, %v1347
        %v1349 = vrot.slane %v1348, 1
        %v1350 = vadd.f32 %v1348, %v1349
        %v1351 = vrot.slane %v1176, 4
        %v1352 = vadd.f32 %v1176, %v1351
        %v1353 = vrot.slane %v1352, 2
        %v1354 = vadd.f32 %v1352, %v1353
        %v1355 = vrot.slane %v1354, 1
        %v1356 = vadd.f32 %v1354, %v1355
        %v1357 = vrot.slane %v1178, 4
        %v1358 = vadd.f32 %v1178, %v1357
        %v1359 = vrot.slane %v1358, 2
        %v1360 = vadd.f32 %v1358, %v1359
        %v1361 = vrot.slane %v1360, 1
        %v1362 = vadd.f32 %v1360, %v1361
        %v1363 = vrot.slane %v1180, 4
        %v1364 = vadd.f32 %v1180, %v1363
        %v1365 = vrot.slane %v1364, 2
        %v1366 = vadd.f32 %v1364, %v1365
        %v1367 = vrot.slane %v1366, 1
        %v1368 = vadd.f32 %v1366, %v1367
        %v1369 = vrot.slane %v1182, 4
        %v1370 = vadd.f32 %v1182, %v1369
        %v1371 = vrot.slane %v1370, 2
        %v1372 = vadd.f32 %v1370, %v1371
        %v1373 = vrot.slane %v1372, 1
        %v1374 = vadd.f32 %v1372, %v1373
        %v1375 = vrcp.pop %v1188
        %v1376 = vrcp.pop %v1194
        %v1377 = vrcp.pop %v1200
        %v1378 = vrcp.pop %v1206
        %v1379 = vrcp.pop %v1212
        %v1380 = vrcp.pop %v1218
        %v1381 = vrcp.pop %v1224
        %v1382 = vrcp.pop %v1230
        %v1383 = vrcp.pop %v1236
        %v1384 = vrcp.pop %v1242
        %v1385 = vrcp.pop %v1248
        %v1386 = vrcp.pop %v1254
        %v1387 = vrcp.pop %v1260
        %v1388 = vrcp.pop %v1266
        %v1389 = vrcp.pop %v1272
        %v1390 = vrcp.pop %v1278
        %v1391 = vrcp.pop %v1284
        %v1392 = vrcp.pop %v1290
        %v1393 = vrcp.pop %v1296
        %v1394 = vrcp.pop %v1302
        %v1395 = vrcp.pop %v1308
        %v1396 = vrcp.pop %v1314
        %v1397 = vrcp.pop %v1320
        %v1398 = vrcp.pop %v1326
        %v1399 = vrcp.pop %v1332
        %v1400 = vrcp.pop %v1338
        %v1401 = vrcp.pop %v1344
        %v1402 = vrcp.pop %v1350
        %v1403 = vrcp.pop %v1356
        %v1404 = vrcp.pop %v1362
        %v1405 = vrcp.pop %v1368
        %v1406 = vrcp.pop %v1374
        %v1407 = vmul.f32 %v1120, %v327
        %v1408 = vmul.f32 %v1122, %v328
        %v1409 = vmul.f32 %v1124, %v329
        %v1410 = vmul.f32 %v1126, %v330
        %v1411 = vmul.f32 %v1128, %v327
        %v1412 = vmul.f32 %v1130, %v328
        %v1413 = vmul.f32 %v1132, %v329
        %v1414 = vmul.f32 %v1134, %v330
        %v1415 = vmul.f32 %v1136, %v327
        %v1416 = vmul.f32 %v1138, %v328
        %v1417 = vmul.f32 %v1140, %v329
        %v1418 = vmul.f32 %v1142, %v330
        %v1419 = vmul.f32 %v1144, %v327
        %v1420 = vmul.f32 %v1146, %v328
        %v1421 = vmul.f32 %v1148, %v329
        %v1422 = vmul.f32 %v1150, %v330
        %v1423 = vmul.f32 %v1152, %v327
        %v1424 = vmul.f32 %v1154, %v328
        %v1425 = vmul.f32 %v1156, %v329
        %v1426 = vmul.f32 %v1158, %v330
        %v1427 = vmul.f32 %v1160, %v327
        %v1428 = vmul.f32 %v1162, %v328
        %v1429 = vmul.f32 %v1164, %v329
        %v1430 = vmul.f32 %v1166, %v330
        %v1431 = vmul.f32 %v1168, %v327
        %v1432 = vmul.f32 %v1170, %v328
        %v1433 = vmul.f32 %v1172, %v329
        %v1434 = vmul.f32 %v1174, %v330
        %v1435 = vmul.f32 %v1176, %v327
        %v1436 = vmul.f32 %v1178, %v328
        %v1437 = vmul.f32 %v1180, %v329
        %v1438 = vmul.f32 %v1182, %v330
        %v1439 = vrot.slane %v1407, 4
        %v1440 = vadd.f32 %v1407, %v1439
        %v1441 = vrot.slane %v1440, 2
        %v1442 = vadd.f32 %v1440, %v1441
        %v1443 = vrot.slane %v1442, 1
        %v1444 = vadd.f32 %v1442, %v1443
        %v1445 = vrot.slane %v1408, 4
        %v1446 = vadd.f32 %v1408, %v1445
        %v1447 = vrot.slane %v1446, 2
        %v1448 = vadd.f32 %v1446, %v1447
        %v1449 = vrot.slane %v1448, 1
        %v1450 = vadd.f32 %v1448, %v1449
        %v1451 = vrot.slane %v1409, 4
        %v1452 = vadd.f32 %v1409, %v1451
        %v1453 = vrot.slane %v1452, 2
        %v1454 = vadd.f32 %v1452, %v1453
        %v1455 = vrot.slane %v1454, 1
        %v1456 = vadd.f32 %v1454, %v1455
        %v1457 = vrot.slane %v1410, 4
        %v1458 = vadd.f32 %v1410, %v1457
        %v1459 = vrot.slane %v1458, 2
        %v1460 = vadd.f32 %v1458, %v1459
        %v1461 = vrot.slane %v1460, 1
        %v1462 = vadd.f32 %v1460, %v1461
        %v1463 = vrot.slane %v1411, 4
        %v1464 = vadd.f32 %v1411, %v1463
        %v1465 = vrot.slane %v1464, 2
        %v1466 = vadd.f32 %v1464, %v1465
        %v1467 = vrot.slane %v1466, 1
        %v1468 = vadd.f32 %v1466, %v1467
        %v1469 = vrot.slane %v1412, 4
        %v1470 = vadd.f32 %v1412, %v1469
        %v1471 = vrot.slane %v1470, 2
        %v1472 = vadd.f32 %v1470, %v1471
        %v1473 = vrot.slane %v1472, 1
        %v1474 = vadd.f32 %v1472, %v1473
        %v1475 = vrot.slane %v1413, 4
        %v1476 = vadd.f32 %v1413, %v1475
        %v1477 = vrot.slane %v1476, 2
        %v1478 = vadd.f32 %v1476, %v1477
        %v1479 = vrot.slane %v1478, 1
        %v1480 = vadd.f32 %v1478, %v1479
        %v1481 = vrot.slane %v1414, 4
        %v1482 = vadd.f32 %v1414, %v1481
        %v1483 = vrot.slane %v1482, 2
        %v1484 = vadd.f32 %v1482, %v1483
        %v1485 = vrot.slane %v1484, 1
        %v1486 = vadd.f32 %v1484, %v1485
        %v1487 = vrot.slane %v1415, 4
        %v1488 = vadd.f32 %v1415, %v1487
        %v1489 = vrot.slane %v1488, 2
        %v1490 = vadd.f32 %v1488, %v1489
        %v1491 = vrot.slane %v1490, 1
        %v1492 = vadd.f32 %v1490, %v1491
        %v1493 = vrot.slane %v1416, 4
        %v1494 = vadd.f32 %v1416, %v1493
        %v1495 = vrot.slane %v1494, 2
        %v1496 = vadd.f32 %v1494, %v1495
        %v1497 = vrot.slane %v1496, 1
        %v1498 = vadd.f32 %v1496, %v1497
        %v1499 = vrot.slane %v1417, 4
        %v1500 = vadd.f32 %v1417, %v1499
        %v1501 = vrot.slane %v1500, 2
        %v1502 = vadd.f32 %v1500, %v1501
        %v1503 = vrot.slane %v1502, 1
        %v1504 = vadd.f32 %v1502, %v1503
        %v1505 = vrot.slane %v1418, 4
        %v1506 = vadd.f32 %v1418, %v1505
        %v1507 = vrot.slane %v1506, 2
        %v1508 = vadd.f32 %v1506, %v1507
        %v1509 = vrot.slane %v1508, 1
        %v1510 = vadd.f32 %v1508, %v1509
        %v1511 = vrot.slane %v1419, 4
        %v1512 = vadd.f32 %v1419, %v1511
        %v1513 = vrot.slane %v1512, 2
        %v1514 = vadd.f32 %v1512, %v1513
        %v1515 = vrot.slane %v1514, 1
        %v1516 = vadd.f32 %v1514, %v1515
        %v1517 = vrot.slane %v1420, 4
        %v1518 = vadd.f32 %v1420, %v1517
        %v1519 = vrot.slane %v1518, 2
        %v1520 = vadd.f32 %v1518, %v1519
        %v1521 = vrot.slane %v1520, 1
        %v1522 = vadd.f32 %v1520, %v1521
        %v1523 = vrot.slane %v1421, 4
        %v1524 = vadd.f32 %v1421, %v1523
        %v1525 = vrot.slane %v1524, 2
        %v1526 = vadd.f32 %v1524, %v1525
        %v1527 = vrot.slane %v1526, 1
        %v1528 = vadd.f32 %v1526, %v1527
        %v1529 = vrot.slane %v1422, 4
        %v1530 = vadd.f32 %v1422, %v1529
        %v1531 = vrot.slane %v1530, 2
        %v1532 = vadd.f32 %v1530, %v1531
        %v1533 = vrot.slane %v1532, 1
        %v1534 = vadd.f32 %v1532, %v1533
        %v1535 = vrot.slane %v1423, 4
        %v1536 = vadd.f32 %v1423, %v1535
        %v1537 = vrot.slane %v1536, 2
        %v1538 = vadd.f32 %v1536, %v1537
        %v1539 = vrot.slane %v1538, 1
        %v1540 = vadd.f32 %v1538, %v1539
        %v1541 = vrot.slane %v1424, 4
        %v1542 = vadd.f32 %v1424, %v1541
        %v1543 = vrot.slane %v1542, 2
        %v1544 = vadd.f32 %v1542, %v1543
        %v1545 = vrot.slane %v1544, 1
        %v1546 = vadd.f32 %v1544, %v1545
        %v1547 = vrot.slane %v1425, 4
        %v1548 = vadd.f32 %v1425, %v1547
        %v1549 = vrot.slane %v1548, 2
        %v1550 = vadd.f32 %v1548, %v1549
        %v1551 = vrot.slane %v1550, 1
        %v1552 = vadd.f32 %v1550, %v1551
        %v1553 = vrot.slane %v1426, 4
        %v1554 = vadd.f32 %v1426, %v1553
        %v1555 = vrot.slane %v1554, 2
        %v1556 = vadd.f32 %v1554, %v1555
        %v1557 = vrot.slane %v1556, 1
        %v1558 = vadd.f32 %v1556, %v1557
        %v1559 = vrot.slane %v1427, 4
        %v1560 = vadd.f32 %v1427, %v1559
        %v1561 = vrot.slane %v1560, 2
        %v1562 = vadd.f32 %v1560, %v1561
        %v1563 = vrot.slane %v1562, 1
        %v1564 = vadd.f32 %v1562, %v1563
        %v1565 = vrot.slane %v1428, 4
        %v1566 = vadd.f32 %v1428, %v1565
        %v1567 = vrot.slane %v1566, 2
        %v1568 = vadd.f32 %v1566, %v1567
        %v1569 = vrot.slane %v1568, 1
        %v1570 = vadd.f32 %v1568, %v1569
        %v1571 = vrot.slane %v1429, 4
        %v1572 = vadd.f32 %v1429, %v1571
        %v1573 = vrot.slane %v1572, 2
        %v1574 = vadd.f32 %v1572, %v1573
        %v1575 = vrot.slane %v1574, 1
        %v1576 = vadd.f32 %v1574, %v1575
        %v1577 = vrot.slane %v1430, 4
        %v1578 = vadd.f32 %v1430, %v1577
        %v1579 = vrot.slane %v1578, 2
        %v1580 = vadd.f32 %v1578, %v1579
        %v1581 = vrot.slane %v1580, 1
        %v1582 = vadd.f32 %v1580, %v1581
        %v1583 = vrot.slane %v1431, 4
        %v1584 = vadd.f32 %v1431, %v1583
        %v1585 = vrot.slane %v1584, 2
        %v1586 = vadd.f32 %v1584, %v1585
        %v1587 = vrot.slane %v1586, 1
        %v1588 = vadd.f32 %v1586, %v1587
        %v1589 = vrot.slane %v1432, 4
        %v1590 = vadd.f32 %v1432, %v1589
        %v1591 = vrot.slane %v1590, 2
        %v1592 = vadd.f32 %v1590, %v1591
        %v1593 = vrot.slane %v1592, 1
        %v1594 = vadd.f32 %v1592, %v1593
        %v1595 = vrot.slane %v1433, 4
        %v1596 = vadd.f32 %v1433, %v1595
        %v1597 = vrot.slane %v1596, 2
        %v1598 = vadd.f32 %v1596, %v1597
        %v1599 = vrot.slane %v1598, 1
        %v1600 = vadd.f32 %v1598, %v1599
        %v1601 = vrot.slane %v1434, 4
        %v1602 = vadd.f32 %v1434, %v1601
        %v1603 = vrot.slane %v1602, 2
        %v1604 = vadd.f32 %v1602, %v1603
        %v1605 = vrot.slane %v1604, 1
        %v1606 = vadd.f32 %v1604, %v1605
        %v1607 = vrot.slane %v1435, 4
        %v1608 = vadd.f32 %v1435, %v1607
        %v1609 = vrot.slane %v1608, 2
        %v1610 = vadd.f32 %v1608, %v1609
        %v1611 = vrot.slane %v1610, 1
        %v1612 = vadd.f32 %v1610, %v1611
        %v1613 = vrot.slane %v1436, 4
        %v1614 = vadd.f32 %v1436, %v1613
        %v1615 = vrot.slane %v1614, 2
        %v1616 = vadd.f32 %v1614, %v1615
        %v1617 = vrot.slane %v1616, 1
        %v1618 = vadd.f32 %v1616, %v1617
        %v1619 = vrot.slane %v1437, 4
        %v1620 = vadd.f32 %v1437, %v1619
        %v1621 = vrot.slane %v1620, 2
        %v1622 = vadd.f32 %v1620, %v1621
        %v1623 = vrot.slane %v1622, 1
        %v1624 = vadd.f32 %v1622, %v1623
        %v1625 = vrot.slane %v1438, 4
        %v1626 = vadd.f32 %v1438, %v1625
        %v1627 = vrot.slane %v1626, 2
        %v1628 = vadd.f32 %v1626, %v1627
        %v1629 = vrot.slane %v1628, 1
        %v1630 = vadd.f32 %v1628, %v1629
        %v1631 = vmul.f32 %v1444, %v1375
        %v1632 = vmul.f32 %v1450, %v1376
        %v1633 = vmul.f32 %v1456, %v1377
        %v1634 = vmul.f32 %v1462, %v1378
        %v1635 = vmul.f32 %v1468, %v1379
        %v1636 = vmul.f32 %v1474, %v1380
        %v1637 = vmul.f32 %v1480, %v1381
        %v1638 = vmul.f32 %v1486, %v1382
        %v1639 = vmul.f32 %v1492, %v1383
        %v1640 = vmul.f32 %v1498, %v1384
        %v1641 = vmul.f32 %v1504, %v1385
        %v1642 = vmul.f32 %v1510, %v1386
        %v1643 = vmul.f32 %v1516, %v1387
        %v1644 = vmul.f32 %v1522, %v1388
        %v1645 = vmul.f32 %v1528, %v1389
        %v1646 = vmul.f32 %v1534, %v1390
        %v1647 = vmul.f32 %v1540, %v1391
        %v1648 = vmul.f32 %v1546, %v1392
        %v1649 = vmul.f32 %v1552, %v1393
        %v1650 = vmul.f32 %v1558, %v1394
        %v1651 = vmul.f32 %v1564, %v1395
        %v1652 = vmul.f32 %v1570, %v1396
        %v1653 = vmul.f32 %v1576, %v1397
        %v1654 = vmul.f32 %v1582, %v1398
        %v1655 = vmul.f32 %v1588, %v1399
        %v1656 = vmul.f32 %v1594, %v1400
        %v1657 = vmul.f32 %v1600, %v1401
        %v1658 = vmul.f32 %v1606, %v1402
        %v1659 = vmul.f32 %v1612, %v1403
        %v1660 = vmul.f32 %v1618, %v1404
        %v1661 = vmul.f32 %v1624, %v1405
        %v1662 = vmul.f32 %v1630, %v1406
        %vm1695 = vcmask 1041409
        %v1696 = vsel %vm1695, %v1635, %v1631
        %vm1697 = vcmask 1042434
        %v1698 = vsel %vm1697, %v1639, %v1696
        %vm1699 = vcmask 1043459
        %v1700 = vsel %vm1699, %v1643, %v1698
        %vm1701 = vcmask 1044484
        %v1702 = vsel %vm1701, %v1647, %v1700
        %vm1703 = vcmask 1045509
        %v1704 = vsel %vm1703, %v1651, %v1702
        %vm1705 = vcmask 1046534
        %v1706 = vsel %vm1705, %v1655, %v1704
        %vm1707 = vcmask 1047559
        %v1708 = vsel %vm1707, %v1659, %v1706
        %v1709 = vsel %vm1695, %v1636, %v1632
        %v1710 = vsel %vm1697, %v1640, %v1709
        %v1711 = vsel %vm1699, %v1644, %v1710
        %v1712 = vsel %vm1701, %v1648, %v1711
        %v1713 = vsel %vm1703, %v1652, %v1712
        %v1714 = vsel %vm1705, %v1656, %v1713
        %v1715 = vsel %vm1707, %v1660, %v1714
        %v1716 = vsel %vm1695, %v1637, %v1633
        %v1717 = vsel %vm1697, %v1641, %v1716
        %v1718 = vsel %vm1699, %v1645, %v1717
        %v1719 = vsel %vm1701, %v1649, %v1718
        %v1720 = vsel %vm1703, %v1653, %v1719
        %v1721 = vsel %vm1705, %v1657, %v1720
        %v1722 = vsel %vm1707, %v1661, %v1721
        %v1723 = vsel %vm1695, %v1638, %v1634
        %v1724 = vsel %vm1697, %v1642, %v1723
        %v1725 = vsel %vm1699, %v1646, %v1724
        %v1726 = vsel %vm1701, %v1650, %v1725
        %v1727 = vsel %vm1703, %v1654, %v1726
        %v1728 = vsel %vm1705, %v1658, %v1727
        %v1729 = vsel %vm1707, %v1662, %v1728
        %1734 = vst [vmem:[%s306] sm:$0xff] %v1708
        %1735 = vst [vmem:[%s306 + $0x8] sm:$0xff] %v1715
        %1736 = vst [vmem:[%s306 + $0x10] sm:$0xff] %v1722
        %1737 = vst [vmem:[%s306 + $0x18] sm:$0xff] %v1729
        %v1738 = vmul.f32 %v1120, %v331
        %v1739 = vmul.f32 %v1122, %v332
        %v1740 = vmul.f32 %v1124, %v333
        %v1741 = vmul.f32 %v1126, %v334
        %v1742 = vmul.f32 %v1128, %v331
        %v1743 = vmul.f32 %v1130, %v332
        %v1744 = vmul.f32 %v1132, %v333
        %v1745 = vmul.f32 %v1134, %v334
        %v1746 = vmul.f32 %v1136, %v331
        %v1747 = vmul.f32 %v1138, %v332
        %v1748 = vmul.f32 %v1140, %v333
        %v1749 = vmul.f32 %v1142, %v334
        %v1750 = vmul.f32 %v1144, %v331
        %v1751 = vmul.f32 %v1146, %v332
        %v1752 = vmul.f32 %v1148, %v333
        %v1753 = vmul.f32 %v1150, %v334
        %v1754 = vmul.f32 %v1152, %v331
        %v1755 = vmul.f32 %v1154, %v332
        %v1756 = vmul.f32 %v1156, %v333
        %v1757 = vmul.f32 %v1158, %v334
        %v1758 = vmul.f32 %v1160, %v331
        %v1759 = vmul.f32 %v1162, %v332
        %v1760 = vmul.f32 %v1164, %v333
        %v1761 = vmul.f32 %v1166, %v334
        %v1762 = vmul.f32 %v1168, %v331
        %v1763 = vmul.f32 %v1170, %v332
        %v1764 = vmul.f32 %v1172, %v333
        %v1765 = vmul.f32 %v1174, %v334
        %v1766 = vmul.f32 %v1176, %v331
        %v1767 = vmul.f32 %v1178, %v332
        %v1768 = vmul.f32 %v1180, %v333
        %v1769 = vmul.f32 %v1182, %v334
        %v1770 = vrot.slane %v1738, 4
        %v1771 = vadd.f32 %v1738, %v1770
        %v1772 = vrot.slane %v1771, 2
        %v1773 = vadd.f32 %v1771, %v1772
        %v1774 = vrot.slane %v1773, 1
        %v1775 = vadd.f32 %v1773, %v1774
        %v1776 = vrot.slane %v1739, 4
        %v1777 = vadd.f32 %v1739, %v1776
        %v1778 = vrot.slane %v1777, 2
        %v1779 = vadd.f32 %v1777, %v1778
        %v1780 = vrot.slane %v1779, 1
        %v1781 = vadd.f32 %v1779, %v1780
        %v1782 = vrot.slane %v1740, 4
        %v1783 = vadd.f32 %v1740, %v1782
        %v1784 = vrot.slane %v1783, 2
        %v1785 = vadd.f32 %v1783, %v1784
        %v1786 = vrot.slane %v1785, 1
        %v1787 = vadd.f32 %v1785, %v1786
        %v1788 = vrot.slane %v1741, 4
        %v1789 = vadd.f32 %v1741, %v1788
        %v1790 = vrot.slane %v1789, 2
        %v1791 = vadd.f32 %v1789, %v1790
        %v1792 = vrot.slane %v1791, 1
        %v1793 = vadd.f32 %v1791, %v1792
        %v1794 = vrot.slane %v1742, 4
        %v1795 = vadd.f32 %v1742, %v1794
        %v1796 = vrot.slane %v1795, 2
        %v1797 = vadd.f32 %v1795, %v1796
        %v1798 = vrot.slane %v1797, 1
        %v1799 = vadd.f32 %v1797, %v1798
        %v1800 = vrot.slane %v1743, 4
        %v1801 = vadd.f32 %v1743, %v1800
        %v1802 = vrot.slane %v1801, 2
        %v1803 = vadd.f32 %v1801, %v1802
        %v1804 = vrot.slane %v1803, 1
        %v1805 = vadd.f32 %v1803, %v1804
        %v1806 = vrot.slane %v1744, 4
        %v1807 = vadd.f32 %v1744, %v1806
        %v1808 = vrot.slane %v1807, 2
        %v1809 = vadd.f32 %v1807, %v1808
        %v1810 = vrot.slane %v1809, 1
        %v1811 = vadd.f32 %v1809, %v1810
        %v1812 = vrot.slane %v1745, 4
        %v1813 = vadd.f32 %v1745, %v1812
        %v1814 = vrot.slane %v1813, 2
        %v1815 = vadd.f32 %v1813, %v1814
        %v1816 = vrot.slane %v1815, 1
        %v1817 = vadd.f32 %v1815, %v1816
        %v1818 = vrot.slane %v1746, 4
        %v1819 = vadd.f32 %v1746, %v1818
        %v1820 = vrot.slane %v1819, 2
        %v1821 = vadd.f32 %v1819, %v1820
        %v1822 = vrot.slane %v1821, 1
        %v1823 = vadd.f32 %v1821, %v1822
        %v1824 = vrot.slane %v1747, 4
        %v1825 = vadd.f32 %v1747, %v1824
        %v1826 = vrot.slane %v1825, 2
        %v1827 = vadd.f32 %v1825, %v1826
        %v1828 = vrot.slane %v1827, 1
        %v1829 = vadd.f32 %v1827, %v1828
        %v1830 = vrot.slane %v1748, 4
        %v1831 = vadd.f32 %v1748, %v1830
        %v1832 = vrot.slane %v1831, 2
        %v1833 = vadd.f32 %v1831, %v1832
        %v1834 = vrot.slane %v1833, 1
        %v1835 = vadd.f32 %v1833, %v1834
        %v1836 = vrot.slane %v1749, 4
        %v1837 = vadd.f32 %v1749, %v1836
        %v1838 = vrot.slane %v1837, 2
        %v1839 = vadd.f32 %v1837, %v1838
        %v1840 = vrot.slane %v1839, 1
        %v1841 = vadd.f32 %v1839, %v1840
        %v1842 = vrot.slane %v1750, 4
        %v1843 = vadd.f32 %v1750, %v1842
        %v1844 = vrot.slane %v1843, 2
        %v1845 = vadd.f32 %v1843, %v1844
        %v1846 = vrot.slane %v1845, 1
        %v1847 = vadd.f32 %v1845, %v1846
        %v1848 = vrot.slane %v1751, 4
        %v1849 = vadd.f32 %v1751, %v1848
        %v1850 = vrot.slane %v1849, 2
        %v1851 = vadd.f32 %v1849, %v1850
        %v1852 = vrot.slane %v1851, 1
        %v1853 = vadd.f32 %v1851, %v1852
        %v1854 = vrot.slane %v1752, 4
        %v1855 = vadd.f32 %v1752, %v1854
        %v1856 = vrot.slane %v1855, 2
        %v1857 = vadd.f32 %v1855, %v1856
        %v1858 = vrot.slane %v1857, 1
        %v1859 = vadd.f32 %v1857, %v1858
        %v1860 = vrot.slane %v1753, 4
        %v1861 = vadd.f32 %v1753, %v1860
        %v1862 = vrot.slane %v1861, 2
        %v1863 = vadd.f32 %v1861, %v1862
        %v1864 = vrot.slane %v1863, 1
        %v1865 = vadd.f32 %v1863, %v1864
        %v1866 = vrot.slane %v1754, 4
        %v1867 = vadd.f32 %v1754, %v1866
        %v1868 = vrot.slane %v1867, 2
        %v1869 = vadd.f32 %v1867, %v1868
        %v1870 = vrot.slane %v1869, 1
        %v1871 = vadd.f32 %v1869, %v1870
        %v1872 = vrot.slane %v1755, 4
        %v1873 = vadd.f32 %v1755, %v1872
        %v1874 = vrot.slane %v1873, 2
        %v1875 = vadd.f32 %v1873, %v1874
        %v1876 = vrot.slane %v1875, 1
        %v1877 = vadd.f32 %v1875, %v1876
        %v1878 = vrot.slane %v1756, 4
        %v1879 = vadd.f32 %v1756, %v1878
        %v1880 = vrot.slane %v1879, 2
        %v1881 = vadd.f32 %v1879, %v1880
        %v1882 = vrot.slane %v1881, 1
        %v1883 = vadd.f32 %v1881, %v1882
        %v1884 = vrot.slane %v1757, 4
        %v1885 = vadd.f32 %v1757, %v1884
        %v1886 = vrot.slane %v1885, 2
        %v1887 = vadd.f32 %v1885, %v1886
        %v1888 = vrot.slane %v1887, 1
        %v1889 = vadd.f32 %v1887, %v1888
        %v1890 = vrot.slane %v1758, 4
        %v1891 = vadd.f32 %v1758, %v1890
        %v1892 = vrot.slane %v1891, 2
        %v1893 = vadd.f32 %v1891, %v1892
        %v1894 = vrot.slane %v1893, 1
        %v1895 = vadd.f32 %v1893, %v1894
        %v1896 = vrot.slane %v1759, 4
        %v1897 = vadd.f32 %v1759, %v1896
        %v1898 = vrot.slane %v1897, 2
        %v1899 = vadd.f32 %v1897, %v1898
        %v1900 = vrot.slane %v1899, 1
        %v1901 = vadd.f32 %v1899, %v1900
        %v1902 = vrot.slane %v1760, 4
        %v1903 = vadd.f32 %v1760, %v1902
        %v1904 = vrot.slane %v1903, 2
        %v1905 = vadd.f32 %v1903, %v1904
        %v1906 = vrot.slane %v1905, 1
        %v1907 = vadd.f32 %v1905, %v1906
        %v1908 = vrot.slane %v1761, 4
        %v1909 = vadd.f32 %v1761, %v1908
        %v1910 = vrot.slane %v1909, 2
        %v1911 = vadd.f32 %v1909, %v1910
        %v1912 = vrot.slane %v1911, 1
        %v1913 = vadd.f32 %v1911, %v1912
        %v1914 = vrot.slane %v1762, 4
        %v1915 = vadd.f32 %v1762, %v1914
        %v1916 = vrot.slane %v1915, 2
        %v1917 = vadd.f32 %v1915, %v1916
        %v1918 = vrot.slane %v1917, 1
        %v1919 = vadd.f32 %v1917, %v1918
        %v1920 = vrot.slane %v1763, 4
        %v1921 = vadd.f32 %v1763, %v1920
        %v1922 = vrot.slane %v1921, 2
        %v1923 = vadd.f32 %v1921, %v1922
        %v1924 = vrot.slane %v1923, 1
        %v1925 = vadd.f32 %v1923, %v1924
        %v1926 = vrot.slane %v1764, 4
        %v1927 = vadd.f32 %v1764, %v1926
        %v1928 = vrot.slane %v1927, 2
        %v1929 = vadd.f32 %v1927, %v1928
        %v1930 = vrot.slane %v1929, 1
        %v1931 = vadd.f32 %v1929, %v1930
        %v1932 = vrot.slane %v1765, 4
        %v1933 = vadd.f32 %v1765, %v1932
        %v1934 = vrot.slane %v1933, 2
        %v1935 = vadd.f32 %v1933, %v1934
        %v1936 = vrot.slane %v1935, 1
        %v1937 = vadd.f32 %v1935, %v1936
        %v1938 = vrot.slane %v1766, 4
        %v1939 = vadd.f32 %v1766, %v1938
        %v1940 = vrot.slane %v1939, 2
        %v1941 = vadd.f32 %v1939, %v1940
        %v1942 = vrot.slane %v1941, 1
        %v1943 = vadd.f32 %v1941, %v1942
        %v1944 = vrot.slane %v1767, 4
        %v1945 = vadd.f32 %v1767, %v1944
        %v1946 = vrot.slane %v1945, 2
        %v1947 = vadd.f32 %v1945, %v1946
        %v1948 = vrot.slane %v1947, 1
        %v1949 = vadd.f32 %v1947, %v1948
        %v1950 = vrot.slane %v1768, 4
        %v1951 = vadd.f32 %v1768, %v1950
        %v1952 = vrot.slane %v1951, 2
        %v1953 = vadd.f32 %v1951, %v1952
        %v1954 = vrot.slane %v1953, 1
        %v1955 = vadd.f32 %v1953, %v1954
        %v1956 = vrot.slane %v1769, 4
        %v1957 = vadd.f32 %v1769, %v1956
        %v1958 = vrot.slane %v1957, 2
        %v1959 = vadd.f32 %v1957, %v1958
        %v1960 = vrot.slane %v1959, 1
        %v1961 = vadd.f32 %v1959, %v1960
        %v1962 = vmul.f32 %v1775, %v1375
        %v1963 = vmul.f32 %v1781, %v1376
        %v1964 = vmul.f32 %v1787, %v1377
        %v1965 = vmul.f32 %v1793, %v1378
        %v1966 = vmul.f32 %v1799, %v1379
        %v1967 = vmul.f32 %v1805, %v1380
        %v1968 = vmul.f32 %v1811, %v1381
        %v1969 = vmul.f32 %v1817, %v1382
        %v1970 = vmul.f32 %v1823, %v1383
        %v1971 = vmul.f32 %v1829, %v1384
        %v1972 = vmul.f32 %v1835, %v1385
        %v1973 = vmul.f32 %v1841, %v1386
        %v1974 = vmul.f32 %v1847, %v1387
        %v1975 = vmul.f32 %v1853, %v1388
        %v1976 = vmul.f32 %v1859, %v1389
        %v1977 = vmul.f32 %v1865, %v1390
        %v1978 = vmul.f32 %v1871, %v1391
        %v1979 = vmul.f32 %v1877, %v1392
        %v1980 = vmul.f32 %v1883, %v1393
        %v1981 = vmul.f32 %v1889, %v1394
        %v1982 = vmul.f32 %v1895, %v1395
        %v1983 = vmul.f32 %v1901, %v1396
        %v1984 = vmul.f32 %v1907, %v1397
        %v1985 = vmul.f32 %v1913, %v1398
        %v1986 = vmul.f32 %v1919, %v1399
        %v1987 = vmul.f32 %v1925, %v1400
        %v1988 = vmul.f32 %v1931, %v1401
        %v1989 = vmul.f32 %v1937, %v1402
        %v1990 = vmul.f32 %v1943, %v1403
        %v1991 = vmul.f32 %v1949, %v1404
        %v1992 = vmul.f32 %v1955, %v1405
        %v1993 = vmul.f32 %v1961, %v1406
        %v2026 = vsel %vm1695, %v1966, %v1962
        %v2027 = vsel %vm1697, %v1970, %v2026
        %v2028 = vsel %vm1699, %v1974, %v2027
        %v2029 = vsel %vm1701, %v1978, %v2028
        %v2030 = vsel %vm1703, %v1982, %v2029
        %v2031 = vsel %vm1705, %v1986, %v2030
        %v2032 = vsel %vm1707, %v1990, %v2031
        %v2033 = vsel %vm1695, %v1967, %v1963
        %v2034 = vsel %vm1697, %v1971, %v2033
        %v2035 = vsel %vm1699, %v1975, %v2034
        %v2036 = vsel %vm1701, %v1979, %v2035
        %v2037 = vsel %vm1703, %v1983, %v2036
        %v2038 = vsel %vm1705, %v1987, %v2037
        %v2039 = vsel %vm1707, %v1991, %v2038
        %v2040 = vsel %vm1695, %v1968, %v1964
        %v2041 = vsel %vm1697, %v1972, %v2040
        %v2042 = vsel %vm1699, %v1976, %v2041
        %v2043 = vsel %vm1701, %v1980, %v2042
        %v2044 = vsel %vm1703, %v1984, %v2043
        %v2045 = vsel %vm1705, %v1988, %v2044
        %v2046 = vsel %vm1707, %v1992, %v2045
        %v2047 = vsel %vm1695, %v1969, %v1965
        %v2048 = vsel %vm1697, %v1973, %v2047
        %v2049 = vsel %vm1699, %v1977, %v2048
        %v2050 = vsel %vm1701, %v1981, %v2049
        %v2051 = vsel %vm1703, %v1985, %v2050
        %v2052 = vsel %vm1705, %v1989, %v2051
        %v2053 = vsel %vm1707, %v1993, %v2052
        %s2058 = scalar_lea.vmem %s306, 32 [#allocation5]
        %2059 = vst [vmem:[%s2058] sm:$0xff] %v2032
        %2060 = vst [vmem:[%s2058 + $0x8] sm:$0xff] %v2039
        %2061 = vst [vmem:[%s2058 + $0x10] sm:$0xff] %v2046
        %2062 = vst [vmem:[%s2058 + $0x18] sm:$0xff] %v2053
        %s2063 = sand.u32 %s100, 1
        %s2064 = sand.u32 %s100, 1
        %s2065 = smul.addr %s2064, 64
        %s2066 = scalar_lea.vmem [#allocation5], %s2065
        // Predicated region
        $region102: #{spatial_self_attention.4} parent=88 // pred_check
          %p2067 = pneg %p110
        $region103: #{spatial_self_attention.4} parent=88 // pred_check_branch
          %2069 = sbr.rel (%p2067) target = $region105
        $region104: #{spatial_self_attention.4} parent=88 // pred_region
          %s2070 = smul.u32 4, %s14
          %s2071 = smul.addr %s2070, 8
          %s2072 = scalar_lea.vmem %s3, %s2071
          // Predicated region
          $region106: #{spatial_self_attention.4} parent=104 // pred_check
            _
          $region107: #{spatial_self_attention.4} parent=104 // pred_check_branch
            %2074 = sbr.rel (0) target = $region109
          $region108: #{spatial_self_attention.4} parent=104 // pred_region
            // Predicated region
            $region110: #{spatial_self_attention.4} parent=108 // pred_check
              _
            $region111: #{spatial_self_attention.4} parent=108 // pred_check_branch
              %2076 = sbr.rel (0) target = $region113
            $region112: #{spatial_self_attention.4} parent=108 // pred_region
              loop: start=0, step=1, limit=1
              $region114: #{spatial_self_attention.4} parent=112 // loop_pre_header
                _
              $region115: #{spatial_self_attention.4} parent=112 // loop_header
                %s2078 = sphi 0, %s2082
                %p2079 = scmp.ge.s32.totalorder %s2078, 1
                %s2083 = sphi %s2066, %s2066
                %s2084 = sphi %s2072, %s2072
              $region116: #{spatial_self_attention.4} parent=112 // loop_header_branch
                %2081 = sbr.rel (%p2079) target = $region120
              $region117: #{spatial_self_attention.4} parent=112 // loop_body
                %v2085 = vld [vmem:[%s2083] sm:$0xff]
                %2086 = vst [vmem:[%s2084] sm:$0xff] %v2085
                %v2087 = vld [vmem:[%s2083 + $0x8] sm:$0xff]
                %2088 = vst [vmem:[%s2084 + $0x8] sm:$0xff] %v2087
                %v2089 = vld [vmem:[%s2083 + $0x10] sm:$0xff]
                %2090 = vst [vmem:[%s2084 + $0x10] sm:$0xff] %v2089
                %v2091 = vld [vmem:[%s2083 + $0x18] sm:$0xff]
                %2092 = vst [vmem:[%s2084 + $0x18] sm:$0xff] %v2091
                %v2093 = vld [vmem:[%s2083 + $0x20] sm:$0xff]
                %2094 = vst [vmem:[%s2084 + $0x80] sm:$0xff] %v2093
                %v2095 = vld [vmem:[%s2083 + $0x28] sm:$0xff]
                %2096 = vst [vmem:[%s2084 + $0x88] sm:$0xff] %v2095
                %v2097 = vld [vmem:[%s2083 + $0x30] sm:$0xff]
                %2098 = vst [vmem:[%s2084 + $0x90] sm:$0xff] %v2097
                %v2099 = vld [vmem:[%s2083 + $0x38] sm:$0xff]
                %2100 = vst [vmem:[%s2084 + $0x98] sm:$0xff] %v2099
              $region118: #{spatial_self_attention.4} parent=112 // loop_footer
                %s2082 = sadd.s32 1, %s2078
              $region119: #{spatial_self_attention.4} parent=112 // loop_footer_branch
                %2077 = sbr.rel target = $region115
              $region120: #{spatial_self_attention.4} parent=112 // loop_exit
                _
            $region113: #{spatial_self_attention.4} parent=108 // pred_fallthru
              _
            // Predicated region
            $region121: #{spatial_self_attention.4} parent=108 // pred_check
              _
            $region122: #{spatial_self_attention.4} parent=108 // pred_check_branch
              %2102 = sbr.rel target = $region124
            $region123: #{spatial_self_attention.4} parent=108 // pred_region
              _
            $region124: #{spatial_self_attention.4} parent=108 // pred_fallthru
              _
          $region109: #{spatial_self_attention.4} parent=104 // pred_fallthru
            _
          %2103 = vnop
        $region105: #{spatial_self_attention.4} parent=88 // pred_fallthru
          _
      $region89: #{spatial_self_attention.4} parent=5 // pred_fallthru
        _
      %p2104 = scmp.le.s32.totalorder 2, %s9
      // Predicated region
      $region125: #{spatial_self_attention.4} parent=5 // pred_check
        %p2105 = pneg %p2104
      $region126: #{spatial_self_attention.4} parent=5 // pred_check_branch
        %2107 = sbr.rel (%p2105) target = $region128
      $region127: #{spatial_self_attention.4} parent=5 // pred_region
        %s2108 = ssub.s32 %s9, 2
        // Predicated region
        $region129: #{spatial_self_attention.4} parent=127 // pred_check
          %p2109 = pneg %p116
        $region130: #{spatial_self_attention.4} parent=127 // pred_check_branch
          %2111 = sbr.rel (%p2109) target = $region132
        $region131: #{spatial_self_attention.4} parent=127 // pred_region
          %s2112 = sand.u32 %s101, 1
          %s2113 = sand.u32 %s101, 1
          %s2114 = smul.addr %s2113, 64
          %s2115 = scalar_lea.vmem [#allocation5], %s2114
        $region132: #{spatial_self_attention.4} parent=127 // pred_fallthru
          _
      $region128: #{spatial_self_attention.4} parent=5 // pred_fallthru
        _
    $region6: #{spatial_self_attention.4} parent=1 // loop_footer
      %s13 = sadd.s32 1, %s9
    $region7: #{spatial_self_attention.4} parent=1 // loop_footer_branch
      %8 = sbr.rel target = $region3
    $region8: #{spatial_self_attention.4} parent=1 // loop_exit
      _

</llo_original>
